<compile_context>
chip_gen: v6e
topology: v6e:2x2x1
jax: 0.10.0
libtpu: 0.0.40
codegen_flags: <defaults>
</compile_context>

<pallas_src>
import math
import functools

import jax
import jax.numpy as jnp
from jax.experimental import pallas as pl
from jax.experimental.pallas import tpu as pltpu


def _vmem_limit_bytes():
    # Leave headroom for Mosaic internal scratch / semaphores: 75% of physical,
    # capped at 100 MiB (v5e/v6e: 128 MiB -> 96 MiB, v7x: 64 MiB -> 48 MiB).
    try:
        cap = pltpu.get_tpu_info().vmem_capacity_bytes
    except Exception:
        cap = 64 * 1024 * 1024
    return min(int(cap * 3 // 4), 100 * 1024 * 1024)


_VMEM_LIMIT = _vmem_limit_bytes()


def _cparams(*semantics):
    return pltpu.CompilerParams(dimension_semantics=semantics,
                                vmem_limit_bytes=_VMEM_LIMIT)


def _const_spec(shape):
    """BlockSpec for a block identical at every grid step (weights/biases).

    Single-buffered (pl.Buffered(1)) so resident blocks don't get a useless
    second VMEM buffer; falls back to a plain spec if the installed jax does
    not accept pipeline_mode.
    """
    index_map = lambda *_: (0,) * len(shape)
    try:
        return pl.BlockSpec(shape, index_map, pipeline_mode=pl.Buffered(1))
    except Exception:
        return pl.BlockSpec(shape, index_map)


def _pick_row_tile(m, target):
    """Largest multiple-of-8 divisor of m that is <= target (else m itself)."""
    if m <= target:
        return m
    for t in range(target, 7, -8):
        if m % t == 0:
            return t
    return m


def _layernorm_f32(x, g, b, eps):
    # Matches the spec exactly: torch.std is unbiased (ddof=1) and the forward
    # is (x - mean) / sqrt(std**2 + eps) == (x - mean) * rsqrt(var_unb + eps).
    d = x.shape[-1]
    mean = jnp.mean(x, axis=-1, keepdims=True)
    xc = x - mean
    var = jnp.sum(xc * xc, axis=-1, keepdims=True) * (1.0 / (d - 1))
    xn = xc * jax.lax.rsqrt(var + eps)            # rsqrt -> EUP slot
    return g * xn + b


# ---------------------------------------------------------------------------
# Kernel 1: LayerNorm1 + QKV projection + MHA + Wo projection + residual
#           (all heads of one batch per grid step; fully fused, no HBM
#            round-trip for the QKV activation)
# ---------------------------------------------------------------------------

def _ln_attn_kernel(x_ref, m_ref, g_ref, b_ref, wqkv_ref, bqkv_ref,
                    wo_ref, bo_ref, o_ref, qkv_sc,
                    *, n_heads, d_model, scale, eps):
    S = x_ref.shape[1]
    dk = d_model // n_heads

    x = x_ref[0].astype(jnp.float32)                       # (S, D) residual in
    xn = _layernorm_f32(x, g_ref[...], b_ref[...], eps)
    qkv = jnp.dot(xn.astype(jnp.bfloat16), wqkv_ref[...],
                  preferred_element_type=jnp.float32) + bqkv_ref[...]
    qkv_sc[...] = qkv.astype(jnp.bfloat16)                 # lane-dense (S, 3D)

    # masked_fill(mask == 0, -1e9) as a single additive bias, computed once per
    # batch and hoisted out of the head loop; (1, S) broadcasts over (S, S).
    neg = jnp.where(m_ref[0] == 0.0, -1e9, 0.0).astype(jnp.float32)

    acc = jnp.zeros((S, d_model), jnp.float32)             # heads fold into Wo
    for h in range(n_heads):                               # static unroll
        q = qkv_sc[:, h * dk:(h + 1) * dk]
        k = qkv_sc[:, d_model + h * dk:d_model + (h + 1) * dk]
        v = qkv_sc[:, 2 * d_model + h * dk:2 * d_model + (h + 1) * dk]
        # q @ k^T without materialising a transpose: contract the last dims.
        s = jax.lax.dot_general(q, k, (((1,), (1,)), ((), ())),
                                preferred_element_type=jnp.float32)
        s = s * scale + neg
        s = s - jnp.max(s, axis=-1, keepdims=True)
        p = jnp.exp(s)
        p = p / jnp.sum(p, axis=-1, keepdims=True)          # exact normalisation
        ctx = jnp.dot(p.astype(jnp.bfloat16), v,
                      preferred_element_type=jnp.float32)
        # Fold this head's context straight into the output projection (row
        # slice of Wo); avoids dk-wide masked stores of a concat buffer.
        acc = acc + jnp.dot(ctx.astype(jnp.bfloat16),
                            wo_ref[h * dk:(h + 1) * dk, :],
                            preferred_element_type=jnp.float32)
    o_ref[0] = (x + acc + bo_ref[...]).astype(o_ref.dtype)


def ln_attn(x, mask, g, b, wqkv, bqkv, wo, bo, *, n_heads, eps=1e-6):
    B, S, D = x.shape
    scale = 1.0 / math.sqrt(D // n_heads)
    # TODO(synk): for long sequences (S >~ 1024) add query/key blocking with an
    # online softmax so the per-head (S, S) scores stay in VMEM; for v7x with
    # tiny B, additionally grid over heads so both TensorCores get work.
    return pl.pallas_call(
        functools.partial(_ln_attn_kernel, n_heads=n_heads, d_model=D,
                          scale=scale, eps=eps),
        out_shape=jax.ShapeDtypeStruct((B, S, D), x.dtype),
        grid=(B,),
        in_specs=[pl.BlockSpec((1, S, D), lambda bb: (bb, 0, 0)),
                  pl.BlockSpec((1, 1, S), lambda bb: (bb, 0, 0)),
                  _const_spec((1, D)),            # ln1 gamma
                  _const_spec((1, D)),            # ln1 beta
                  _const_spec((D, 3 * D)),        # wqkv, resident, 1-buffered
                  _const_spec((1, 3 * D)),        # bqkv
                  _const_spec((D, D)),            # wo, resident, 1-buffered
                  _const_spec((1, D))],           # bo
        out_specs=pl.BlockSpec((1, S, D), lambda bb: (bb, 0, 0)),
        scratch_shapes=[pltpu.VMEM((S, 3 * D), jnp.bfloat16)],
        compiler_params=_cparams("parallel"),
    )(x, mask, g.reshape(1, D), b.reshape(1, D), wqkv,
      bqkv.reshape(1, 3 * D), wo, bo.reshape(1, D))


# ---------------------------------------------------------------------------
# Kernel 2: LayerNorm2 + FFN (w1 + ReLU + w2) + residual, tiled over rows
# ---------------------------------------------------------------------------

def _ln_ffn_kernel(x_ref, g_ref, b_ref, w1_ref, b1_ref, w2_ref, b2_ref,
                   o_ref, *, eps):
    x = x_ref[...].astype(jnp.float32)                        # (tm, D)
    xn = _layernorm_f32(x, g_ref[...], b_ref[...], eps)
    # TODO(synk): on v7x with very large d_ff, chunk the hidden dim and
    # accumulate y in an f32 scratch to bound the (tm, Dff) live intermediate.
    h = jnp.dot(xn.astype(jnp.bfloat16), w1_ref[...],
                preferred_element_type=jnp.float32)
    h = jnp.maximum(h + b1_ref[...], 0.0)
    y = jnp.dot(h.astype(jnp.bfloat16), w2_ref[...],
                preferred_element_type=jnp.float32) + b2_ref[...]
    o_ref[...] = (x + y).astype(o_ref.dtype)


def ln_ffn(x2d, g, b, w1, b1, w2, b2, *, eps=1e-6, tm_target=512):
    M, D = x2d.shape
    Dff = w1.shape[1]
    tm = _pick_row_tile(M, tm_target)
    return pl.pallas_call(
        functools.partial(_ln_ffn_kernel, eps=eps),
        out_shape=jax.ShapeDtypeStruct((M, D), x2d.dtype),
        grid=(M // tm,),
        in_specs=[pl.BlockSpec((tm, D), lambda i: (i, 0)),
                  _const_spec((1, D)),
                  _const_spec((1, D)),
                  _const_spec((D, Dff)),          # resident, 1-buffered
                  _const_spec((1, Dff)),
                  _const_spec((Dff, D)),          # resident, 1-buffered
                  _const_spec((1, D))],
        out_specs=pl.BlockSpec((tm, D), lambda i: (i, 0)),
        compiler_params=_cparams("parallel"),
    )(x2d, g.reshape(1, D), b.reshape(1, D), w1, b1.reshape(1, Dff),
      w2, b2.reshape(1, D))


# ---------------------------------------------------------------------------
# Final LayerNorm (row-tiled, mem-bound -> big tiles)
# ---------------------------------------------------------------------------

def _layernorm_kernel(x_ref, g_ref, b_ref, o_ref, *, eps):
    x = x_ref[...].astype(jnp.float32)
    o_ref[...] = _layernorm_f32(x, g_ref[...], b_ref[...], eps).astype(o_ref.dtype)


def layernorm(x2d, gamma, beta, *, eps=1e-6, tm_target=1024):
    M, D = x2d.shape
    tm = _pick_row_tile(M, tm_target)
    return pl.pallas_call(
        functools.partial(_layernorm_kernel, eps=eps),
        out_shape=jax.ShapeDtypeStruct((M, D), x2d.dtype),
        grid=(M // tm,),
        in_specs=[pl.BlockSpec((tm, D), lambda i: (i, 0)),
                  _const_spec((1, D)),
                  _const_spec((1, D))],
        out_specs=pl.BlockSpec((tm, D), lambda i: (i, 0)),
        compiler_params=_cparams("parallel"),
    )(x2d, gamma.reshape(1, D), beta.reshape(1, D))


# ---------------------------------------------------------------------------
# Encoder assembly
# ---------------------------------------------------------------------------

def encoder_layer(lp, x, mask, n_heads):
    # TODO(synk): dropout inside SublayerConnection / attention is identity
    # (eval mode), so it is intentionally omitted.
    B, S, D = x.shape
    # Sublayer 1: x + Wo @ MHA(norm(x), norm(x), norm(x), mask)   (fully fused)
    x = ln_attn(x, mask, lp["ln1_g"], lp["ln1_b"], lp["wqkv"], lp["bqkv"],
                lp["wo"], lp["bo"], n_heads=n_heads)
    # Sublayer 2: x + FFN(norm(x))
    x2 = ln_ffn(x.reshape(B * S, D), lp["ln2_g"], lp["ln2_b"],
                lp["w1"], lp["b1"], lp["w2"], lp["b2"])
    return x2.reshape(B, S, D)


def encoder(params, x, mask, n_heads):
    for lp in params["layers"]:
        x = encoder_layer(lp, x, mask, n_heads)
    B, S, D = x.shape
    return layernorm(x.reshape(B * S, D),
                     params["norm_g"], params["norm_b"]).reshape(B, S, D)


def init_params(key, n_layers, d_model, d_ff):
    layers = []
    for l in range(n_layers):
        k = jax.random.fold_in(key, l)
        ks = jax.random.split(k, 6)

        def w(kk, din, dout):
            return (0.02 * jax.random.normal(kk, (din, dout),
                                             jnp.float32)).astype(jnp.bfloat16)

        wq = w(ks[0], d_model, d_model)
        wk = w(ks[1], d_model, d_model)
        wv = w(ks[2], d_model, d_model)
        layers.append(dict(
            wqkv=jnp.concatenate([wq, wk, wv], axis=1),          # (D, 3D) bf16
            bqkv=jnp.zeros((3 * d_model,), jnp.float32),
            wo=w(ks[3], d_model, d_model), bo=jnp.zeros((d_model,), jnp.float32),
            w1=w(ks[4], d_model, d_ff),    b1=jnp.zeros((d_ff,), jnp.float32),
            w2=w(ks[5], d_ff, d_model),    b2=jnp.zeros((d_model,), jnp.float32),
            ln1_g=jnp.ones((d_model,), jnp.float32),
            ln1_b=jnp.zeros((d_model,), jnp.float32),
            ln2_g=jnp.ones((d_model,), jnp.float32),
            ln2_b=jnp.zeros((d_model,), jnp.float32),
        ))
    return dict(layers=layers,
                norm_g=jnp.ones((d_model,), jnp.float32),
                norm_b=jnp.zeros((d_model,), jnp.float32))


if __name__ == "__main__":
    B, S, D, H, DFF, NLAYERS = 2, 8, 32, 4, 64, 2
    key = jax.random.PRNGKey(0)
    kx, kp = jax.random.split(key)

    x = jax.random.normal(kx, (B, S, D), jnp.float32)
    # source mask (B, 1, S): 1 = attend, 0 = padding (second batch has 2 pads)
    lens = jnp.array([S, S - 2])
    mask = (jnp.arange(S)[None, :] < lens[:, None]).astype(jnp.float32)[:, None, :]

    params = init_params(kp, NLAYERS, D, DFF)

    enc = jax.jit(lambda p, xx, mm: encoder(p, xx, mm, H))
    out = jax.block_until_ready(enc(params, x, mask))

    assert out.shape == (B, S, D) and out.dtype == jnp.float32
    assert bool(jnp.all(jnp.isfinite(out)))
    print("KERNEL_OK")
</pallas_src>

<mosaic_0001>
module attributes {stable_mosaic.version = 11 : i64} {
  func.func @_ln_ffn_kernel(%arg0: i32, %arg1: memref<16x32xf32, #tpu.memory_space<vmem>>, %arg2: memref<1x32xf32, #tpu.memory_space<vmem>>, %arg3: memref<1x32xf32, #tpu.memory_space<vmem>>, %arg4: memref<32x64xbf16, #tpu.memory_space<vmem>>, %arg5: memref<1x64xf32, #tpu.memory_space<vmem>>, %arg6: memref<64x32xbf16, #tpu.memory_space<vmem>>, %arg7: memref<1x32xf32, #tpu.memory_space<vmem>>, %arg8: memref<16x32xf32, #tpu.memory_space<vmem>>) attributes {dimension_semantics = [#tpu.dimension_semantics<parallel>], iteration_bounds = array<i64: 1>, scalar_prefetch = 0 : i64, scratch_operands = 0 : i64, tpu.core_type = #tpu.core_type<tc>, window_params = [{transform_indices = @transform_0, window_bounds = array<i64: 16, 32>}, {pipeline_mode = #tpu.pipeline_mode<synchronous>, transform_indices = @transform_1, window_bounds = array<i64: 1, 32>}, {pipeline_mode = #tpu.pipeline_mode<synchronous>, transform_indices = @transform_2, window_bounds = array<i64: 1, 32>}, {pipeline_mode = #tpu.pipeline_mode<synchronous>, transform_indices = @transform_3, window_bounds = array<i64: 32, 64>}, {pipeline_mode = #tpu.pipeline_mode<synchronous>, transform_indices = @transform_4, window_bounds = array<i64: 1, 64>}, {pipeline_mode = #tpu.pipeline_mode<synchronous>, transform_indices = @transform_5, window_bounds = array<i64: 64, 32>}, {pipeline_mode = #tpu.pipeline_mode<synchronous>, transform_indices = @transform_6, window_bounds = array<i64: 1, 32>}, {transform_indices = @transform_7, window_bounds = array<i64: 16, 32>}]} {
    %c0 = arith.constant 0 : index
    %c0_0 = arith.constant 0 : index
    %0 = vector.load %arg1[%c0, %c0_0] : memref<16x32xf32, #tpu.memory_space<vmem>>, vector<16x32xf32>
    %c0_1 = arith.constant 0 : index
    %c0_2 = arith.constant 0 : index
    %1 = vector.load %arg2[%c0_1, %c0_2] : memref<1x32xf32, #tpu.memory_space<vmem>>, vector<1x32xf32>
    %c0_3 = arith.constant 0 : index
    %c0_4 = arith.constant 0 : index
    %2 = vector.load %arg3[%c0_3, %c0_4] : memref<1x32xf32, #tpu.memory_space<vmem>>, vector<1x32xf32>
    %cst = arith.constant dense<0.000000e+00> : vector<16xf32>
    %3 = vector.multi_reduction <add>, %0, %cst [1] : vector<16x32xf32> to vector<16xf32>
    %4 = vector.shape_cast %3 : vector<16xf32> to vector<16x1xf32>
    %cst_5 = arith.constant 3.200000e+01 : f32
    %5 = vector.broadcast %cst_5 : f32 to vector<16x1xf32>
    %6 = arith.divf %4, %5 : vector<16x1xf32>
    %7 = vector.broadcast %6 : vector<16x1xf32> to vector<16x32xf32>
    %8 = arith.subf %0, %7 : vector<16x32xf32>
    %9 = arith.mulf %8, %8 : vector<16x32xf32>
    %cst_6 = arith.constant dense<0.000000e+00> : vector<16xf32>
    %10 = vector.multi_reduction <add>, %9, %cst_6 [1] : vector<16x32xf32> to vector<16xf32>
    %11 = vector.shape_cast %10 : vector<16xf32> to vector<16x1xf32>
    %cst_7 = arith.constant 0.0322580636 : f32
    %12 = vector.broadcast %cst_7 : f32 to vector<16x1xf32>
    %13 = arith.mulf %11, %12 : vector<16x1xf32>
    %cst_8 = arith.constant 9.99999997E-7 : f32
    %14 = vector.broadcast %cst_8 : f32 to vector<16x1xf32>
    %15 = arith.addf %13, %14 : vector<16x1xf32>
    %16 = math.rsqrt %15 : vector<16x1xf32>
    %17 = vector.broadcast %16 : vector<16x1xf32> to vector<16x32xf32>
    %18 = arith.mulf %8, %17 : vector<16x32xf32>
    %19 = vector.broadcast %1 : vector<1x32xf32> to vector<16x32xf32>
    %20 = arith.mulf %19, %18 : vector<16x32xf32>
    %21 = vector.broadcast %2 : vector<1x32xf32> to vector<16x32xf32>
    %22 = arith.addf %20, %21 : vector<16x32xf32>
    %23 = arith.truncf %22 : vector<16x32xf32> to vector<16x32xbf16>
    %c0_9 = arith.constant 0 : index
    %c0_10 = arith.constant 0 : index
    %24 = vector.load %arg4[%c0_9, %c0_10] : memref<32x64xbf16, #tpu.memory_space<vmem>>, vector<32x64xbf16>
    %cst_11 = arith.constant dense<0.000000e+00> : vector<16x64xf32>
    %25 = tpu.matmul %23, %24, %cst_11 {dimension_numbers = #tpu.dot_dimension_numbers<[1], [0], [0], [1], [0, 0, 1, 1], [], []>} : vector<16x32xbf16>, vector<32x64xbf16>, vector<16x64xf32> -> vector<16x64xf32>
    %c0_12 = arith.constant 0 : index
    %c0_13 = arith.constant 0 : index
    %26 = vector.load %arg5[%c0_12, %c0_13] : memref<1x64xf32, #tpu.memory_space<vmem>>, vector<1x64xf32>
    %27 = vector.broadcast %26 : vector<1x64xf32> to vector<16x64xf32>
    %28 = arith.addf %25, %27 : vector<16x64xf32>
    %cst_14 = arith.constant 0.000000e+00 : f32
    %29 = vector.broadcast %cst_14 : f32 to vector<16x64xf32>
    %30 = arith.maximumf %28, %29 : vector<16x64xf32>
    %31 = arith.truncf %30 : vector<16x64xf32> to vector<16x64xbf16>
    %c0_15 = arith.constant 0 : index
    %c0_16 = arith.constant 0 : index
    %32 = vector.load %arg6[%c0_15, %c0_16] : memref<64x32xbf16, #tpu.memory_space<vmem>>, vector<64x32xbf16>
    %cst_17 = arith.constant dense<0.000000e+00> : vector<16x32xf32>
    %33 = tpu.matmul %31, %32, %cst_17 {dimension_numbers = #tpu.dot_dimension_numbers<[1], [0], [0], [1], [0, 0, 1, 1], [], []>} : vector<16x64xbf16>, vector<64x32xbf16>, vector<16x32xf32> -> vector<16x32xf32>
    %c0_18 = arith.constant 0 : index
    %c0_19 = arith.constant 0 : index
    %34 = vector.load %arg7[%c0_18, %c0_19] : memref<1x32xf32, #tpu.memory_space<vmem>>, vector<1x32xf32>
    %35 = vector.broadcast %34 : vector<1x32xf32> to vector<16x32xf32>
    %36 = arith.addf %33, %35 : vector<16x32xf32>
    %37 = arith.addf %0, %36 : vector<16x32xf32>
    %c0_20 = arith.constant 0 : index
    %c0_21 = arith.constant 0 : index
    %38 = vector.load %arg8[%c0_20, %c0_21] : memref<16x32xf32, #tpu.memory_space<vmem>>, vector<16x32xf32>
    tpu.vector_store %arg8[%c0_20, %c0_21], %37 {strides = array<i32>} : memref<16x32xf32, #tpu.memory_space<vmem>>, vector<16x32xf32>,
    return
  }
  func.func @transform_0(%arg0: i32) -> (i32, i32) {
    %c0_i32 = arith.constant 0 : i32
    %c0_i32_0 = arith.constant 0 : i32
    return %arg0, %c0_i32 : i32, i32
  }
  func.func @transform_1(%arg0: i32) -> (i32, i32) {
    %c0_i32 = arith.constant 0 : i32
    %c0_i32_0 = arith.constant 0 : i32
    %c0_i32_1 = arith.constant 0 : i32
    return %c0_i32, %c0_i32_0 : i32, i32
  }
  func.func @transform_2(%arg0: i32) -> (i32, i32) {
    %c0_i32 = arith.constant 0 : i32
    %c0_i32_0 = arith.constant 0 : i32
    %c0_i32_1 = arith.constant 0 : i32
    return %c0_i32, %c0_i32_0 : i32, i32
  }
  func.func @transform_3(%arg0: i32) -> (i32, i32) {
    %c0_i32 = arith.constant 0 : i32
    %c0_i32_0 = arith.constant 0 : i32
    %c0_i32_1 = arith.constant 0 : i32
    return %c0_i32, %c0_i32_0 : i32, i32
  }
  func.func @transform_4(%arg0: i32) -> (i32, i32) {
    %c0_i32 = arith.constant 0 : i32
    %c0_i32_0 = arith.constant 0 : i32
    %c0_i32_1 = arith.constant 0 : i32
    return %c0_i32, %c0_i32_0 : i32, i32
  }
  func.func @transform_5(%arg0: i32) -> (i32, i32) {
    %c0_i32 = arith.constant 0 : i32
    %c0_i32_0 = arith.constant 0 : i32
    %c0_i32_1 = arith.constant 0 : i32
    return %c0_i32, %c0_i32_0 : i32, i32
  }
  func.func @transform_6(%arg0: i32) -> (i32, i32) {
    %c0_i32 = arith.constant 0 : i32
    %c0_i32_0 = arith.constant 0 : i32
    %c0_i32_1 = arith.constant 0 : i32
    return %c0_i32, %c0_i32_0 : i32, i32
  }
  func.func @transform_7(%arg0: i32) -> (i32, i32) {
    %c0_i32 = arith.constant 0 : i32
    %c0_i32_0 = arith.constant 0 : i32
    return %arg0, %c0_i32 : i32, i32
  }
}

module attributes {stable_mosaic.version = 11 : i64} {
  func.func @_ln_attn_kernel(%arg0: i32, %arg1: memref<1x8x32xf32, #tpu.memory_space<vmem>>, %arg2: memref<1x1x8xf32, #tpu.memory_space<vmem>>, %arg3: memref<1x32xf32, #tpu.memory_space<vmem>>, %arg4: memref<1x32xf32, #tpu.memory_space<vmem>>, %arg5: memref<32x96xbf16, #tpu.memory_space<vmem>>, %arg6: memref<1x96xf32, #tpu.memory_space<vmem>>, %arg7: memref<32x32xbf16, #tpu.memory_space<vmem>>, %arg8: memref<1x32xf32, #tpu.memory_space<vmem>>, %arg9: memref<1x8x32xf32, #tpu.memory_space<vmem>>, %arg10: memref<8x96xbf16, #tpu.memory_space<vmem>>) attributes {dimension_semantics = [#tpu.dimension_semantics<parallel>], iteration_bounds = array<i64: 2>, scalar_prefetch = 0 : i64, scratch_operands = 1 : i64, tpu.core_type = #tpu.core_type<tc>, window_params = [{transform_indices = @transform_0, window_bounds = array<i64: 1, 8, 32>}, {transform_indices = @transform_1, window_bounds = array<i64: 1, 1, 8>}, {pipeline_mode = #tpu.pipeline_mode<synchronous>, transform_indices = @transform_2, window_bounds = array<i64: 1, 32>}, {pipeline_mode = #tpu.pipeline_mode<synchronous>, transform_indices = @transform_3, window_bounds = array<i64: 1, 32>}, {pipeline_mode = #tpu.pipeline_mode<synchronous>, transform_indices = @transform_4, window_bounds = array<i64: 32, 96>}, {pipeline_mode = #tpu.pipeline_mode<synchronous>, transform_indices = @transform_5, window_bounds = array<i64: 1, 96>}, {pipeline_mode = #tpu.pipeline_mode<synchronous>, transform_indices = @transform_6, window_bounds = array<i64: 32, 32>}, {pipeline_mode = #tpu.pipeline_mode<synchronous>, transform_indices = @transform_7, window_bounds = array<i64: 1, 32>}, {transform_indices = @transform_8, window_bounds = array<i64: 1, 8, 32>}]} {
    %c0 = arith.constant 0 : index
    %c0_0 = arith.constant 0 : index
    %c0_1 = arith.constant 0 : index
    %0 = vector.load %arg1[%c0, %c0_0, %c0_1] : memref<1x8x32xf32, #tpu.memory_space<vmem>>, vector<1x8x32xf32>
    %1 = vector.shape_cast %0 : vector<1x8x32xf32> to vector<8x32xf32>
    %c0_2 = arith.constant 0 : index
    %c0_3 = arith.constant 0 : index
    %2 = vector.load %arg3[%c0_2, %c0_3] : memref<1x32xf32, #tpu.memory_space<vmem>>, vector<1x32xf32>
    %c0_4 = arith.constant 0 : index
    %c0_5 = arith.constant 0 : index
    %3 = vector.load %arg4[%c0_4, %c0_5] : memref<1x32xf32, #tpu.memory_space<vmem>>, vector<1x32xf32>
    %cst = arith.constant dense<0.000000e+00> : vector<8xf32>
    %4 = vector.multi_reduction <add>, %1, %cst [1] : vector<8x32xf32> to vector<8xf32>
    %5 = vector.shape_cast %4 : vector<8xf32> to vector<8x1xf32>
    %cst_6 = arith.constant 3.200000e+01 : f32
    %6 = vector.broadcast %cst_6 : f32 to vector<8x1xf32>
    %7 = arith.divf %5, %6 : vector<8x1xf32>
    %8 = vector.broadcast %7 : vector<8x1xf32> to vector<8x32xf32>
    %9 = arith.subf %1, %8 : vector<8x32xf32>
    %10 = arith.mulf %9, %9 : vector<8x32xf32>
    %cst_7 = arith.constant dense<0.000000e+00> : vector<8xf32>
    %11 = vector.multi_reduction <add>, %10, %cst_7 [1] : vector<8x32xf32> to vector<8xf32>
    %12 = vector.shape_cast %11 : vector<8xf32> to vector<8x1xf32>
    %cst_8 = arith.constant 0.0322580636 : f32
    %13 = vector.broadcast %cst_8 : f32 to vector<8x1xf32>
    %14 = arith.mulf %12, %13 : vector<8x1xf32>
    %cst_9 = arith.constant 9.99999997E-7 : f32
    %15 = vector.broadcast %cst_9 : f32 to vector<8x1xf32>
    %16 = arith.addf %14, %15 : vector<8x1xf32>
    %17 = math.rsqrt %16 : vector<8x1xf32>
    %18 = vector.broadcast %17 : vector<8x1xf32> to vector<8x32xf32>
    %19 = arith.mulf %9, %18 : vector<8x32xf32>
    %20 = vector.broadcast %2 : vector<1x32xf32> to vector<8x32xf32>
    %21 = arith.mulf %20, %19 : vector<8x32xf32>
    %22 = vector.broadcast %3 : vector<1x32xf32> to vector<8x32xf32>
    %23 = arith.addf %21, %22 : vector<8x32xf32>
    %24 = arith.truncf %23 : vector<8x32xf32> to vector<8x32xbf16>
    %c0_10 = arith.constant 0 : index
    %c0_11 = arith.constant 0 : index
    %25 = vector.load %arg5[%c0_10, %c0_11] : memref<32x96xbf16, #tpu.memory_space<vmem>>, vector<32x96xbf16>
    %cst_12 = arith.constant dense<0.000000e+00> : vector<8x96xf32>
    %26 = tpu.matmul %24, %25, %cst_12 {dimension_numbers = #tpu.dot_dimension_numbers<[1], [0], [0], [1], [0, 0, 1, 1], [], []>} : vector<8x32xbf16>, vector<32x96xbf16>, vector<8x96xf32> -> vector<8x96xf32>
    %c0_13 = arith.constant 0 : index
    %c0_14 = arith.constant 0 : index
    %27 = vector.load %arg6[%c0_13, %c0_14] : memref<1x96xf32, #tpu.memory_space<vmem>>, vector<1x96xf32>
    %28 = vector.broadcast %27 : vector<1x96xf32> to vector<8x96xf32>
    %29 = arith.addf %26, %28 : vector<8x96xf32>
    %30 = arith.truncf %29 : vector<8x96xf32> to vector<8x96xbf16>
    %c0_15 = arith.constant 0 : index
    %c0_16 = arith.constant 0 : index
    %31 = vector.load %arg10[%c0_15, %c0_16] : memref<8x96xbf16, #tpu.memory_space<vmem>>, vector<8x96xbf16>
    tpu.vector_store %arg10[%c0_15, %c0_16], %30 {strides = array<i32>} : memref<8x96xbf16, #tpu.memory_space<vmem>>, vector<8x96xbf16>,
    %c0_17 = arith.constant 0 : index
    %c0_18 = arith.constant 0 : index
    %c0_19 = arith.constant 0 : index
    %32 = vector.load %arg2[%c0_17, %c0_18, %c0_19] : memref<1x1x8xf32, #tpu.memory_space<vmem>>, vector<1x1x8xf32>
    %33 = vector.shape_cast %32 : vector<1x1x8xf32> to vector<1x8xf32>
    %cst_20 = arith.constant 0.000000e+00 : f32
    %34 = vector.broadcast %cst_20 : f32 to vector<1x8xf32>
    %35 = arith.cmpf oeq, %33, %34 : vector<1x8xf32>
    %cst_21 = arith.constant -1.000000e+09 : f32
    %cst_22 = arith.constant 0.000000e+00 : f32
    %36 = vector.broadcast %cst_21 : f32 to vector<1x8xf32>
    %37 = vector.broadcast %cst_22 : f32 to vector<1x8xf32>
    %38 = arith.select %35, %36, %37 : vector<1x8xi1>, vector<1x8xf32>
    %cst_23 = arith.constant 0.000000e+00 : f32
    %39 = vector.broadcast %cst_23 : f32 to vector<8x32xf32>
    %c0_24 = arith.constant 0 : index
    %c0_25 = arith.constant 0 : index
    %40 = vector.load %arg10[%c0_24, %c0_25] : memref<8x96xbf16, #tpu.memory_space<vmem>>, vector<8x8xbf16>
    %c0_26 = arith.constant 0 : index
    %c32 = arith.constant 32 : index
    %41 = vector.load %arg10[%c0_26, %c32] : memref<8x96xbf16, #tpu.memory_space<vmem>>, vector<8x8xbf16>
    %c0_27 = arith.constant 0 : index
    %c64 = arith.constant 64 : index
    %42 = vector.load %arg10[%c0_27, %c64] : memref<8x96xbf16, #tpu.memory_space<vmem>>, vector<8x8xbf16>
    %cst_28 = arith.constant dense<0.000000e+00> : vector<8x8xf32>
    %43 = tpu.matmul %40, %41, %cst_28 {dimension_numbers = #tpu.dot_dimension_numbers<[1], [1], [0], [0], [0, 0, 1, 0], [], []>} : vector<8x8xbf16>, vector<8x8xbf16>, vector<8x8xf32> -> vector<8x8xf32>
    %cst_29 = arith.constant 0.353553385 : f32
    %44 = vector.broadcast %cst_29 : f32 to vector<8x8xf32>
    %45 = arith.mulf %43, %44 : vector<8x8xf32>
    %46 = vector.broadcast %38 : vector<1x8xf32> to vector<8x8xf32>
    %47 = arith.addf %45, %46 : vector<8x8xf32>
    %cst_30 = arith.constant dense<0xFF800000> : vector<8xf32>
    %48 = vector.multi_reduction <maximumf>, %47, %cst_30 [1] : vector<8x8xf32> to vector<8xf32>
    %49 = vector.shape_cast %48 : vector<8xf32> to vector<8x1xf32>
    %50 = vector.broadcast %49 : vector<8x1xf32> to vector<8x8xf32>
    %51 = arith.subf %47, %50 : vector<8x8xf32>
    %52 = math.exp %51 : vector<8x8xf32>
    %cst_31 = arith.constant dense<0.000000e+00> : vector<8xf32>
    %53 = vector.multi_reduction <add>, %52, %cst_31 [1] : vector<8x8xf32> to vector<8xf32>
    %54 = vector.shape_cast %53 : vector<8xf32> to vector<8x1xf32>
    %55 = vector.broadcast %54 : vector<8x1xf32> to vector<8x8xf32>
    %56 = arith.divf %52, %55 : vector<8x8xf32>
    %57 = arith.truncf %56 : vector<8x8xf32> to vector<8x8xbf16>
    %cst_32 = arith.constant dense<0.000000e+00> : vector<8x8xf32>
    %58 = tpu.matmul %57, %42, %cst_32 {dimension_numbers = #tpu.dot_dimension_numbers<[1], [0], [0], [1], [0, 0, 1, 1], [], []>} : vector<8x8xbf16>, vector<8x8xbf16>, vector<8x8xf32> -> vector<8x8xf32>
    %59 = arith.truncf %58 : vector<8x8xf32> to vector<8x8xbf16>
    %c0_33 = arith.constant 0 : index
    %c0_34 = arith.constant 0 : index
    %60 = vector.load %arg7[%c0_33, %c0_34] : memref<32x32xbf16, #tpu.memory_space<vmem>>, vector<8x32xbf16>
    %cst_35 = arith.constant dense<0.000000e+00> : vector<8x32xf32>
    %61 = tpu.matmul %59, %60, %cst_35 {dimension_numbers = #tpu.dot_dimension_numbers<[1], [0], [0], [1], [0, 0, 1, 1], [], []>} : vector<8x8xbf16>, vector<8x32xbf16>, vector<8x32xf32> -> vector<8x32xf32>
    %62 = arith.addf %39, %61 : vector<8x32xf32>
    %c0_36 = arith.constant 0 : index
    %c8 = arith.constant 8 : index
    %63 = vector.load %arg10[%c0_36, %c8] : memref<8x96xbf16, #tpu.memory_space<vmem>>, vector<8x8xbf16>
    %c0_37 = arith.constant 0 : index
    %c40 = arith.constant 40 : index
    %64 = vector.load %arg10[%c0_37, %c40] : memref<8x96xbf16, #tpu.memory_space<vmem>>, vector<8x8xbf16>
    %c0_38 = arith.constant 0 : index
    %c72 = arith.constant 72 : index
    %65 = vector.load %arg10[%c0_38, %c72] : memref<8x96xbf16, #tpu.memory_space<vmem>>, vector<8x8xbf16>
    %cst_39 = arith.constant dense<0.000000e+00> : vector<8x8xf32>
    %66 = tpu.matmul %63, %64, %cst_39 {dimension_numbers = #tpu.dot_dimension_numbers<[1], [1], [0], [0], [0, 0, 1, 0], [], []>} : vector<8x8xbf16>, vector<8x8xbf16>, vector<8x8xf32> -> vector<8x8xf32>
    %cst_40 = arith.constant 0.353553385 : f32
    %67 = vector.broadcast %cst_40 : f32 to vector<8x8xf32>
    %68 = arith.mulf %66, %67 : vector<8x8xf32>
    %69 = vector.broadcast %38 : vector<1x8xf32> to vector<8x8xf32>
    %70 = arith.addf %68, %69 : vector<8x8xf32>
    %cst_41 = arith.constant dense<0xFF800000> : vector<8xf32>
    %71 = vector.multi_reduction <maximumf>, %70, %cst_41 [1] : vector<8x8xf32> to vector<8xf32>
    %72 = vector.shape_cast %71 : vector<8xf32> to vector<8x1xf32>
    %73 = vector.broadcast %72 : vector<8x1xf32> to vector<8x8xf32>
    %74 = arith.subf %70, %73 : vector<8x8xf32>
    %75 = math.exp %74 : vector<8x8xf32>
    %cst_42 = arith.constant dense<0.000000e+00> : vector<8xf32>
    %76 = vector.multi_reduction <add>, %75, %cst_42 [1] : vector<8x8xf32> to vector<8xf32>
    %77 = vector.shape_cast %76 : vector<8xf32> to vector<8x1xf32>
    %78 = vector.broadcast %77 : vector<8x1xf32> to vector<8x8xf32>
    %79 = arith.divf %75, %78 : vector<8x8xf32>
    %80 = arith.truncf %79 : vector<8x8xf32> to vector<8x8xbf16>
    %cst_43 = arith.constant dense<0.000000e+00> : vector<8x8xf32>
    %81 = tpu.matmul %80, %65, %cst_43 {dimension_numbers = #tpu.dot_dimension_numbers<[1], [0], [0], [1], [0, 0, 1, 1], [], []>} : vector<8x8xbf16>, vector<8x8xbf16>, vector<8x8xf32> -> vector<8x8xf32>
    %82 = arith.truncf %81 : vector<8x8xf32> to vector<8x8xbf16>
    %c8_44 = arith.constant 8 : index
    %c0_45 = arith.constant 0 : index
    %83 = vector.load %arg7[%c8_44, %c0_45] : memref<32x32xbf16, #tpu.memory_space<vmem>>, vector<8x32xbf16>
    %cst_46 = arith.constant dense<0.000000e+00> : vector<8x32xf32>
    %84 = tpu.matmul %82, %83, %cst_46 {dimension_numbers = #tpu.dot_dimension_numbers<[1], [0], [0], [1], [0, 0, 1, 1], [], []>} : vector<8x8xbf16>, vector<8x32xbf16>, vector<8x32xf32> -> vector<8x32xf32>
    %85 = arith.addf %62, %84 : vector<8x32xf32>
    %c0_47 = arith.constant 0 : index
    %c16 = arith.constant 16 : index
    %86 = vector.load %arg10[%c0_47, %c16] : memref<8x96xbf16, #tpu.memory_space<vmem>>, vector<8x8xbf16>
    %c0_48 = arith.constant 0 : index
    %c48 = arith.constant 48 : index
    %87 = vector.load %arg10[%c0_48, %c48] : memref<8x96xbf16, #tpu.memory_space<vmem>>, vector<8x8xbf16>
    %c0_49 = arith.constant 0 : index
    %c80 = arith.constant 80 : index
    %88 = vector.load %arg10[%c0_49, %c80] : memref<8x96xbf16, #tpu.memory_space<vmem>>, vector<8x8xbf16>
    %cst_50 = arith.constant dense<0.000000e+00> : vector<8x8xf32>
    %89 = tpu.matmul %86, %87, %cst_50 {dimension_numbers = #tpu.dot_dimension_numbers<[1], [1], [0], [0], [0, 0, 1, 0], [], []>} : vector<8x8xbf16>, vector<8x8xbf16>, vector<8x8xf32> -> vector<8x8xf32>
    %cst_51 = arith.constant 0.353553385 : f32
    %90 = vector.broadcast %cst_51 : f32 to vector<8x8xf32>
    %91 = arith.mulf %89, %90 : vector<8x8xf32>
    %92 = vector.broadcast %38 : vector<1x8xf32> to vector<8x8xf32>
    %93 = arith.addf %91, %92 : vector<8x8xf32>
    %cst_52 = arith.constant dense<0xFF800000> : vector<8xf32>
    %94 = vector.multi_reduction <maximumf>, %93, %cst_52 [1] : vector<8x8xf32> to vector<8xf32>
    %95 = vector.shape_cast %94 : vector<8xf32> to vector<8x1xf32>
    %96 = vector.broadcast %95 : vector<8x1xf32> to vector<8x8xf32>
    %97 = arith.subf %93, %96 : vector<8x8xf32>
    %98 = math.exp %97 : vector<8x8xf32>
    %cst_53 = arith.constant dense<0.000000e+00> : vector<8xf32>
    %99 = vector.multi_reduction <add>, %98, %cst_53 [1] : vector<8x8xf32> to vector<8xf32>
    %100 = vector.shape_cast %99 : vector<8xf32> to vector<8x1xf32>
    %101 = vector.broadcast %100 : vector<8x1xf32> to vector<8x8xf32>
    %102 = arith.divf %98, %101 : vector<8x8xf32>
    %103 = arith.truncf %102 : vector<8x8xf32> to vector<8x8xbf16>
    %cst_54 = arith.constant dense<0.000000e+00> : vector<8x8xf32>
    %104 = tpu.matmul %103, %88, %cst_54 {dimension_numbers = #tpu.dot_dimension_numbers<[1], [0], [0], [1], [0, 0, 1, 1], [], []>} : vector<8x8xbf16>, vector<8x8xbf16>, vector<8x8xf32> -> vector<8x8xf32>
    %105 = arith.truncf %104 : vector<8x8xf32> to vector<8x8xbf16>
    %c16_55 = arith.constant 16 : index
    %c0_56 = arith.constant 0 : index
    %106 = vector.load %arg7[%c16_55, %c0_56] : memref<32x32xbf16, #tpu.memory_space<vmem>>, vector<8x32xbf16>
    %cst_57 = arith.constant dense<0.000000e+00> : vector<8x32xf32>
    %107 = tpu.matmul %105, %106, %cst_57 {dimension_numbers = #tpu.dot_dimension_numbers<[1], [0], [0], [1], [0, 0, 1, 1], [], []>} : vector<8x8xbf16>, vector<8x32xbf16>, vector<8x32xf32> -> vector<8x32xf32>
    %108 = arith.addf %85, %107 : vector<8x32xf32>
    %c0_58 = arith.constant 0 : index
    %c24 = arith.constant 24 : index
    %109 = vector.load %arg10[%c0_58, %c24] : memref<8x96xbf16, #tpu.memory_space<vmem>>, vector<8x8xbf16>
    %c0_59 = arith.constant 0 : index
    %c56 = arith.constant 56 : index
    %110 = vector.load %arg10[%c0_59, %c56] : memref<8x96xbf16, #tpu.memory_space<vmem>>, vector<8x8xbf16>
    %c0_60 = arith.constant 0 : index
    %c88 = arith.constant 88 : index
    %111 = vector.load %arg10[%c0_60, %c88] : memref<8x96xbf16, #tpu.memory_space<vmem>>, vector<8x8xbf16>
    %cst_61 = arith.constant dense<0.000000e+00> : vector<8x8xf32>
    %112 = tpu.matmul %109, %110, %cst_61 {dimension_numbers = #tpu.dot_dimension_numbers<[1], [1], [0], [0], [0, 0, 1, 0], [], []>} : vector<8x8xbf16>, vector<8x8xbf16>, vector<8x8xf32> -> vector<8x8xf32>
    %cst_62 = arith.constant 0.353553385 : f32
    %113 = vector.broadcast %cst_62 : f32 to vector<8x8xf32>
    %114 = arith.mulf %112, %113 : vector<8x8xf32>
    %115 = vector.broadcast %38 : vector<1x8xf32> to vector<8x8xf32>
    %116 = arith.addf %114, %115 : vector<8x8xf32>
    %cst_63 = arith.constant dense<0xFF800000> : vector<8xf32>
    %117 = vector.multi_reduction <maximumf>, %116, %cst_63 [1] : vector<8x8xf32> to vector<8xf32>
    %118 = vector.shape_cast %117 : vector<8xf32> to vector<8x1xf32>
    %119 = vector.broadcast %118 : vector<8x1xf32> to vector<8x8xf32>
    %120 = arith.subf %116, %119 : vector<8x8xf32>
    %121 = math.exp %120 : vector<8x8xf32>
    %cst_64 = arith.constant dense<0.000000e+00> : vector<8xf32>
    %122 = vector.multi_reduction <add>, %121, %cst_64 [1] : vector<8x8xf32> to vector<8xf32>
    %123 = vector.shape_cast %122 : vector<8xf32> to vector<8x1xf32>
    %124 = vector.broadcast %123 : vector<8x1xf32> to vector<8x8xf32>
    %125 = arith.divf %121, %124 : vector<8x8xf32>
    %126 = arith.truncf %125 : vector<8x8xf32> to vector<8x8xbf16>
    %cst_65 = arith.constant dense<0.000000e+00> : vector<8x8xf32>
    %127 = tpu.matmul %126, %111, %cst_65 {dimension_numbers = #tpu.dot_dimension_numbers<[1], [0], [0], [1], [0, 0, 1, 1], [], []>} : vector<8x8xbf16>, vector<8x8xbf16>, vector<8x8xf32> -> vector<8x8xf32>
    %128 = arith.truncf %127 : vector<8x8xf32> to vector<8x8xbf16>
    %c24_66 = arith.constant 24 : index
    %c0_67 = arith.constant 0 : index
    %129 = vector.load %arg7[%c24_66, %c0_67] : memref<32x32xbf16, #tpu.memory_space<vmem>>, vector<8x32xbf16>
    %cst_68 = arith.constant dense<0.000000e+00> : vector<8x32xf32>
    %130 = tpu.matmul %128, %129, %cst_68 {dimension_numbers = #tpu.dot_dimension_numbers<[1], [0], [0], [1], [0, 0, 1, 1], [], []>} : vector<8x8xbf16>, vector<8x32xbf16>, vector<8x32xf32> -> vector<8x32xf32>
    %131 = arith.addf %108, %130 : vector<8x32xf32>
    %132 = arith.addf %1, %131 : vector<8x32xf32>
    %c0_69 = arith.constant 0 : index
    %c0_70 = arith.constant 0 : index
    %133 = vector.load %arg8[%c0_69, %c0_70] : memref<1x32xf32, #tpu.memory_space<vmem>>, vector<1x32xf32>
    %134 = vector.broadcast %133 : vector<1x32xf32> to vector<8x32xf32>
    %135 = arith.addf %132, %134 : vector<8x32xf32>
    %c0_71 = arith.constant 0 : index
    %c0_72 = arith.constant 0 : index
    %c0_73 = arith.constant 0 : index
    %136 = vector.load %arg9[%c0_71, %c0_72, %c0_73] : memref<1x8x32xf32, #tpu.memory_space<vmem>>, vector<1x8x32xf32>
    %137 = vector.shape_cast %136 : vector<1x8x32xf32> to vector<8x32xf32>
    %138 = vector.shape_cast %135 : vector<8x32xf32> to vector<1x8x32xf32>
    tpu.vector_store %arg9[%c0_71, %c0_72, %c0_73], %138 {strides = array<i32>} : memref<1x8x32xf32, #tpu.memory_space<vmem>>, vector<1x8x32xf32>,
    return
  }
  func.func @transform_0(%arg0: i32) -> (i32, i32, i32) {
    %c0_i32 = arith.constant 0 : i32
    %c0_i32_0 = arith.constant 0 : i32
    %c0_i32_1 = arith.constant 0 : i32
    return %arg0, %c0_i32, %c0_i32_0 : i32, i32, i32
  }
  func.func @transform_1(%arg0: i32) -> (i32, i32, i32) {
    %c0_i32 = arith.constant 0 : i32
    %c0_i32_0 = arith.constant 0 : i32
    %c0_i32_1 = arith.constant 0 : i32
    return %arg0, %c0_i32, %c0_i32_0 : i32, i32, i32
  }
  func.func @transform_2(%arg0: i32) -> (i32, i32) {
    %c0_i32 = arith.constant 0 : i32
    %c0_i32_0 = arith.constant 0 : i32
    %c0_i32_1 = arith.constant 0 : i32
    return %c0_i32, %c0_i32_0 : i32, i32
  }
  func.func @transform_3(%arg0: i32) -> (i32, i32) {
    %c0_i32 = arith.constant 0 : i32
    %c0_i32_0 = arith.constant 0 : i32
    %c0_i32_1 = arith.constant 0 : i32
    return %c0_i32, %c0_i32_0 : i32, i32
  }
  func.func @transform_4(%arg0: i32) -> (i32, i32) {
    %c0_i32 = arith.constant 0 : i32
    %c0_i32_0 = arith.constant 0 : i32
    %c0_i32_1 = arith.constant 0 : i32
    return %c0_i32, %c0_i32_0 : i32, i32
  }
  func.func @transform_5(%arg0: i32) -> (i32, i32) {
    %c0_i32 = arith.constant 0 : i32
    %c0_i32_0 = arith.constant 0 : i32
    %c0_i32_1 = arith.constant 0 : i32
    return %c0_i32, %c0_i32_0 : i32, i32
  }
  func.func @transform_6(%arg0: i32) -> (i32, i32) {
    %c0_i32 = arith.constant 0 : i32
    %c0_i32_0 = arith.constant 0 : i32
    %c0_i32_1 = arith.constant 0 : i32
    return %c0_i32, %c0_i32_0 : i32, i32
  }
  func.func @transform_7(%arg0: i32) -> (i32, i32) {
    %c0_i32 = arith.constant 0 : i32
    %c0_i32_0 = arith.constant 0 : i32
    %c0_i32_1 = arith.constant 0 : i32
    return %c0_i32, %c0_i32_0 : i32, i32
  }
  func.func @transform_8(%arg0: i32) -> (i32, i32, i32) {
    %c0_i32 = arith.constant 0 : i32
    %c0_i32_0 = arith.constant 0 : i32
    %c0_i32_1 = arith.constant 0 : i32
    return %arg0, %c0_i32, %c0_i32_0 : i32, i32, i32
  }
}

module attributes {stable_mosaic.version = 11 : i64} {
  func.func @_ln_attn_kernel(%arg0: i32, %arg1: memref<1x8x32xf32, #tpu.memory_space<vmem>>, %arg2: memref<1x1x8xf32, #tpu.memory_space<vmem>>, %arg3: memref<1x32xf32, #tpu.memory_space<vmem>>, %arg4: memref<1x32xf32, #tpu.memory_space<vmem>>, %arg5: memref<32x96xbf16, #tpu.memory_space<vmem>>, %arg6: memref<1x96xf32, #tpu.memory_space<vmem>>, %arg7: memref<32x32xbf16, #tpu.memory_space<vmem>>, %arg8: memref<1x32xf32, #tpu.memory_space<vmem>>, %arg9: memref<1x8x32xf32, #tpu.memory_space<vmem>>, %arg10: memref<8x96xbf16, #tpu.memory_space<vmem>>) attributes {dimension_semantics = [#tpu.dimension_semantics<parallel>], iteration_bounds = array<i64: 2>, scalar_prefetch = 0 : i64, scratch_operands = 1 : i64, tpu.core_type = #tpu.core_type<tc>, window_params = [{transform_indices = @transform_0, window_bounds = array<i64: 1, 8, 32>}, {transform_indices = @transform_1, window_bounds = array<i64: 1, 1, 8>}, {pipeline_mode = #tpu.pipeline_mode<synchronous>, transform_indices = @transform_2, window_bounds = array<i64: 1, 32>}, {pipeline_mode = #tpu.pipeline_mode<synchronous>, transform_indices = @transform_3, window_bounds = array<i64: 1, 32>}, {pipeline_mode = #tpu.pipeline_mode<synchronous>, transform_indices = @transform_4, window_bounds = array<i64: 32, 96>}, {pipeline_mode = #tpu.pipeline_mode<synchronous>, transform_indices = @transform_5, window_bounds = array<i64: 1, 96>}, {pipeline_mode = #tpu.pipeline_mode<synchronous>, transform_indices = @transform_6, window_bounds = array<i64: 32, 32>}, {pipeline_mode = #tpu.pipeline_mode<synchronous>, transform_indices = @transform_7, window_bounds = array<i64: 1, 32>}, {transform_indices = @transform_8, window_bounds = array<i64: 1, 8, 32>}]} {
    %c0 = arith.constant 0 : index
    %c0_0 = arith.constant 0 : index
    %c0_1 = arith.constant 0 : index
    %0 = vector.load %arg1[%c0, %c0_0, %c0_1] : memref<1x8x32xf32, #tpu.memory_space<vmem>>, vector<1x8x32xf32>
    %1 = vector.shape_cast %0 : vector<1x8x32xf32> to vector<8x32xf32>
    %c0_2 = arith.constant 0 : index
    %c0_3 = arith.constant 0 : index
    %2 = vector.load %arg3[%c0_2, %c0_3] : memref<1x32xf32, #tpu.memory_space<vmem>>, vector<1x32xf32>
    %c0_4 = arith.constant 0 : index
    %c0_5 = arith.constant 0 : index
    %3 = vector.load %arg4[%c0_4, %c0_5] : memref<1x32xf32, #tpu.memory_space<vmem>>, vector<1x32xf32>
    %cst = arith.constant dense<0.000000e+00> : vector<8xf32>
    %4 = vector.multi_reduction <add>, %1, %cst [1] : vector<8x32xf32> to vector<8xf32>
    %5 = vector.shape_cast %4 : vector<8xf32> to vector<8x1xf32>
    %cst_6 = arith.constant 3.200000e+01 : f32
    %6 = vector.broadcast %cst_6 : f32 to vector<8x1xf32>
    %7 = arith.divf %5, %6 : vector<8x1xf32>
    %8 = vector.broadcast %7 : vector<8x1xf32> to vector<8x32xf32>
    %9 = arith.subf %1, %8 : vector<8x32xf32>
    %10 = arith.mulf %9, %9 : vector<8x32xf32>
    %cst_7 = arith.constant dense<0.000000e+00> : vector<8xf32>
    %11 = vector.multi_reduction <add>, %10, %cst_7 [1] : vector<8x32xf32> to vector<8xf32>
    %12 = vector.shape_cast %11 : vector<8xf32> to vector<8x1xf32>
    %cst_8 = arith.constant 0.0322580636 : f32
    %13 = vector.broadcast %cst_8 : f32 to vector<8x1xf32>
    %14 = arith.mulf %12, %13 : vector<8x1xf32>
    %cst_9 = arith.constant 9.99999997E-7 : f32
    %15 = vector.broadcast %cst_9 : f32 to vector<8x1xf32>
    %16 = arith.addf %14, %15 : vector<8x1xf32>
    %17 = math.rsqrt %16 : vector<8x1xf32>
    %18 = vector.broadcast %17 : vector<8x1xf32> to vector<8x32xf32>
    %19 = arith.mulf %9, %18 : vector<8x32xf32>
    %20 = vector.broadcast %2 : vector<1x32xf32> to vector<8x32xf32>
    %21 = arith.mulf %20, %19 : vector<8x32xf32>
    %22 = vector.broadcast %3 : vector<1x32xf32> to vector<8x32xf32>
    %23 = arith.addf %21, %22 : vector<8x32xf32>
    %24 = arith.truncf %23 : vector<8x32xf32> to vector<8x32xbf16>
    %c0_10 = arith.constant 0 : index
    %c0_11 = arith.constant 0 : index
    %25 = vector.load %arg5[%c0_10, %c0_11] : memref<32x96xbf16, #tpu.memory_space<vmem>>, vector<32x96xbf16>
    %cst_12 = arith.constant dense<0.000000e+00> : vector<8x96xf32>
    %26 = tpu.matmul %24, %25, %cst_12 {dimension_numbers = #tpu.dot_dimension_numbers<[1], [0], [0], [1], [0, 0, 1, 1], [], []>} : vector<8x32xbf16>, vector<32x96xbf16>, vector<8x96xf32> -> vector<8x96xf32>
    %c0_13 = arith.constant 0 : index
    %c0_14 = arith.constant 0 : index
    %27 = vector.load %arg6[%c0_13, %c0_14] : memref<1x96xf32, #tpu.memory_space<vmem>>, vector<1x96xf32>
    %28 = vector.broadcast %27 : vector<1x96xf32> to vector<8x96xf32>
    %29 = arith.addf %26, %28 : vector<8x96xf32>
    %30 = arith.truncf %29 : vector<8x96xf32> to vector<8x96xbf16>
    %c0_15 = arith.constant 0 : index
    %c0_16 = arith.constant 0 : index
    %31 = vector.load %arg10[%c0_15, %c0_16] : memref<8x96xbf16, #tpu.memory_space<vmem>>, vector<8x96xbf16>
    tpu.vector_store %arg10[%c0_15, %c0_16], %30 {strides = array<i32>} : memref<8x96xbf16, #tpu.memory_space<vmem>>, vector<8x96xbf16>,
    %c0_17 = arith.constant 0 : index
    %c0_18 = arith.constant 0 : index
    %c0_19 = arith.constant 0 : index
    %32 = vector.load %arg2[%c0_17, %c0_18, %c0_19] : memref<1x1x8xf32, #tpu.memory_space<vmem>>, vector<1x1x8xf32>
    %33 = vector.shape_cast %32 : vector<1x1x8xf32> to vector<1x8xf32>
    %cst_20 = arith.constant 0.000000e+00 : f32
    %34 = vector.broadcast %cst_20 : f32 to vector<1x8xf32>
    %35 = arith.cmpf oeq, %33, %34 : vector<1x8xf32>
    %cst_21 = arith.constant -1.000000e+09 : f32
    %cst_22 = arith.constant 0.000000e+00 : f32
    %36 = vector.broadcast %cst_21 : f32 to vector<1x8xf32>
    %37 = vector.broadcast %cst_22 : f32 to vector<1x8xf32>
    %38 = arith.select %35, %36, %37 : vector<1x8xi1>, vector<1x8xf32>
    %cst_23 = arith.constant 0.000000e+00 : f32
    %39 = vector.broadcast %cst_23 : f32 to vector<8x32xf32>
    %c0_24 = arith.constant 0 : index
    %c0_25 = arith.constant 0 : index
    %40 = vector.load %arg10[%c0_24, %c0_25] : memref<8x96xbf16, #tpu.memory_space<vmem>>, vector<8x8xbf16>
    %c0_26 = arith.constant 0 : index
    %c32 = arith.constant 32 : index
    %41 = vector.load %arg10[%c0_26, %c32] : memref<8x96xbf16, #tpu.memory_space<vmem>>, vector<8x8xbf16>
    %c0_27 = arith.constant 0 : index
    %c64 = arith.constant 64 : index
    %42 = vector.load %arg10[%c0_27, %c64] : memref<8x96xbf16, #tpu.memory_space<vmem>>, vector<8x8xbf16>
    %cst_28 = arith.constant dense<0.000000e+00> : vector<8x8xf32>
    %43 = tpu.matmul %40, %41, %cst_28 {dimension_numbers = #tpu.dot_dimension_numbers<[1], [1], [0], [0], [0, 0, 1, 0], [], []>} : vector<8x8xbf16>, vector<8x8xbf16>, vector<8x8xf32> -> vector<8x8xf32>
    %cst_29 = arith.constant 0.353553385 : f32
    %44 = vector.broadcast %cst_29 : f32 to vector<8x8xf32>
    %45 = arith.mulf %43, %44 : vector<8x8xf32>
    %46 = vector.broadcast %38 : vector<1x8xf32> to vector<8x8xf32>
    %47 = arith.addf %45, %46 : vector<8x8xf32>
    %cst_30 = arith.constant dense<0xFF800000> : vector<8xf32>
    %48 = vector.multi_reduction <maximumf>, %47, %cst_30 [1] : vector<8x8xf32> to vector<8xf32>
    %49 = vector.shape_cast %48 : vector<8xf32> to vector<8x1xf32>
    %50 = vector.broadcast %49 : vector<8x1xf32> to vector<8x8xf32>
    %51 = arith.subf %47, %50 : vector<8x8xf32>
    %52 = math.exp %51 : vector<8x8xf32>
    %cst_31 = arith.constant dense<0.000000e+00> : vector<8xf32>
    %53 = vector.multi_reduction <add>, %52, %cst_31 [1] : vector<8x8xf32> to vector<8xf32>
    %54 = vector.shape_cast %53 : vector<8xf32> to vector<8x1xf32>
    %55 = vector.broadcast %54 : vector<8x1xf32> to vector<8x8xf32>
    %56 = arith.divf %52, %55 : vector<8x8xf32>
    %57 = arith.truncf %56 : vector<8x8xf32> to vector<8x8xbf16>
    %cst_32 = arith.constant dense<0.000000e+00> : vector<8x8xf32>
    %58 = tpu.matmul %57, %42, %cst_32 {dimension_numbers = #tpu.dot_dimension_numbers<[1], [0], [0], [1], [0, 0, 1, 1], [], []>} : vector<8x8xbf16>, vector<8x8xbf16>, vector<8x8xf32> -> vector<8x8xf32>
    %59 = arith.truncf %58 : vector<8x8xf32> to vector<8x8xbf16>
    %c0_33 = arith.constant 0 : index
    %c0_34 = arith.constant 0 : index
    %60 = vector.load %arg7[%c0_33, %c0_34] : memref<32x32xbf16, #tpu.memory_space<vmem>>, vector<8x32xbf16>
    %cst_35 = arith.constant dense<0.000000e+00> : vector<8x32xf32>
    %61 = tpu.matmul %59, %60, %cst_35 {dimension_numbers = #tpu.dot_dimension_numbers<[1], [0], [0], [1], [0, 0, 1, 1], [], []>} : vector<8x8xbf16>, vector<8x32xbf16>, vector<8x32xf32> -> vector<8x32xf32>
    %62 = arith.addf %39, %61 : vector<8x32xf32>
    %c0_36 = arith.constant 0 : index
    %c8 = arith.constant 8 : index
    %63 = vector.load %arg10[%c0_36, %c8] : memref<8x96xbf16, #tpu.memory_space<vmem>>, vector<8x8xbf16>
    %c0_37 = arith.constant 0 : index
    %c40 = arith.constant 40 : index
    %64 = vector.load %arg10[%c0_37, %c40] : memref<8x96xbf16, #tpu.memory_space<vmem>>, vector<8x8xbf16>
    %c0_38 = arith.constant 0 : index
    %c72 = arith.constant 72 : index
    %65 = vector.load %arg10[%c0_38, %c72] : memref<8x96xbf16, #tpu.memory_space<vmem>>, vector<8x8xbf16>
    %cst_39 = arith.constant dense<0.000000e+00> : vector<8x8xf32>
    %66 = tpu.matmul %63, %64, %cst_39 {dimension_numbers = #tpu.dot_dimension_numbers<[1], [1], [0], [0], [0, 0, 1, 0], [], []>} : vector<8x8xbf16>, vector<8x8xbf16>, vector<8x8xf32> -> vector<8x8xf32>
    %cst_40 = arith.constant 0.353553385 : f32
    %67 = vector.broadcast %cst_40 : f32 to vector<8x8xf32>
    %68 = arith.mulf %66, %67 : vector<8x8xf32>
    %69 = vector.broadcast %38 : vector<1x8xf32> to vector<8x8xf32>
    %70 = arith.addf %68, %69 : vector<8x8xf32>
    %cst_41 = arith.constant dense<0xFF800000> : vector<8xf32>
    %71 = vector.multi_reduction <maximumf>, %70, %cst_41 [1] : vector<8x8xf32> to vector<8xf32>
    %72 = vector.shape_cast %71 : vector<8xf32> to vector<8x1xf32>
    %73 = vector.broadcast %72 : vector<8x1xf32> to vector<8x8xf32>
    %74 = arith.subf %70, %73 : vector<8x8xf32>
    %75 = math.exp %74 : vector<8x8xf32>
    %cst_42 = arith.constant dense<0.000000e+00> : vector<8xf32>
    %76 = vector.multi_reduction <add>, %75, %cst_42 [1] : vector<8x8xf32> to vector<8xf32>
    %77 = vector.shape_cast %76 : vector<8xf32> to vector<8x1xf32>
    %78 = vector.broadcast %77 : vector<8x1xf32> to vector<8x8xf32>
    %79 = arith.divf %75, %78 : vector<8x8xf32>
    %80 = arith.truncf %79 : vector<8x8xf32> to vector<8x8xbf16>
    %cst_43 = arith.constant dense<0.000000e+00> : vector<8x8xf32>
    %81 = tpu.matmul %80, %65, %cst_43 {dimension_numbers = #tpu.dot_dimension_numbers<[1], [0], [0], [1], [0, 0, 1, 1], [], []>} : vector<8x8xbf16>, vector<8x8xbf16>, vector<8x8xf32> -> vector<8x8xf32>
    %82 = arith.truncf %81 : vector<8x8xf32> to vector<8x8xbf16>
    %c8_44 = arith.constant 8 : index
    %c0_45 = arith.constant 0 : index
    %83 = vector.load %arg7[%c8_44, %c0_45] : memref<32x32xbf16, #tpu.memory_space<vmem>>, vector<8x32xbf16>
    %cst_46 = arith.constant dense<0.000000e+00> : vector<8x32xf32>
    %84 = tpu.matmul %82, %83, %cst_46 {dimension_numbers = #tpu.dot_dimension_numbers<[1], [0], [0], [1], [0, 0, 1, 1], [], []>} : vector<8x8xbf16>, vector<8x32xbf16>, vector<8x32xf32> -> vector<8x32xf32>
    %85 = arith.addf %62, %84 : vector<8x32xf32>
    %c0_47 = arith.constant 0 : index
    %c16 = arith.constant 16 : index
    %86 = vector.load %arg10[%c0_47, %c16] : memref<8x96xbf16, #tpu.memory_space<vmem>>, vector<8x8xbf16>
    %c0_48 = arith.constant 0 : index
    %c48 = arith.constant 48 : index
    %87 = vector.load %arg10[%c0_48, %c48] : memref<8x96xbf16, #tpu.memory_space<vmem>>, vector<8x8xbf16>
    %c0_49 = arith.constant 0 : index
    %c80 = arith.constant 80 : index
    %88 = vector.load %arg10[%c0_49, %c80] : memref<8x96xbf16, #tpu.memory_space<vmem>>, vector<8x8xbf16>
    %cst_50 = arith.constant dense<0.000000e+00> : vector<8x8xf32>
    %89 = tpu.matmul %86, %87, %cst_50 {dimension_numbers = #tpu.dot_dimension_numbers<[1], [1], [0], [0], [0, 0, 1, 0], [], []>} : vector<8x8xbf16>, vector<8x8xbf16>, vector<8x8xf32> -> vector<8x8xf32>
    %cst_51 = arith.constant 0.353553385 : f32
    %90 = vector.broadcast %cst_51 : f32 to vector<8x8xf32>
    %91 = arith.mulf %89, %90 : vector<8x8xf32>
    %92 = vector.broadcast %38 : vector<1x8xf32> to vector<8x8xf32>
    %93 = arith.addf %91, %92 : vector<8x8xf32>
    %cst_52 = arith.constant dense<0xFF800000> : vector<8xf32>
    %94 = vector.multi_reduction <maximumf>, %93, %cst_52 [1] : vector<8x8xf32> to vector<8xf32>
    %95 = vector.shape_cast %94 : vector<8xf32> to vector<8x1xf32>
    %96 = vector.broadcast %95 : vector<8x1xf32> to vector<8x8xf32>
    %97 = arith.subf %93, %96 : vector<8x8xf32>
    %98 = math.exp %97 : vector<8x8xf32>
    %cst_53 = arith.constant dense<0.000000e+00> : vector<8xf32>
    %99 = vector.multi_reduction <add>, %98, %cst_53 [1] : vector<8x8xf32> to vector<8xf32>
    %100 = vector.shape_cast %99 : vector<8xf32> to vector<8x1xf32>
    %101 = vector.broadcast %100 : vector<8x1xf32> to vector<8x8xf32>
    %102 = arith.divf %98, %101 : vector<8x8xf32>
    %103 = arith.truncf %102 : vector<8x8xf32> to vector<8x8xbf16>
    %cst_54 = arith.constant dense<0.000000e+00> : vector<8x8xf32>
    %104 = tpu.matmul %103, %88, %cst_54 {dimension_numbers = #tpu.dot_dimension_numbers<[1], [0], [0], [1], [0, 0, 1, 1], [], []>} : vector<8x8xbf16>, vector<8x8xbf16>, vector<8x8xf32> -> vector<8x8xf32>
    %105 = arith.truncf %104 : vector<8x8xf32> to vector<8x8xbf16>
    %c16_55 = arith.constant 16 : index
    %c0_56 = arith.constant 0 : index
    %106 = vector.load %arg7[%c16_55, %c0_56] : memref<32x32xbf16, #tpu.memory_space<vmem>>, vector<8x32xbf16>
    %cst_57 = arith.constant dense<0.000000e+00> : vector<8x32xf32>
    %107 = tpu.matmul %105, %106, %cst_57 {dimension_numbers = #tpu.dot_dimension_numbers<[1], [0], [0], [1], [0, 0, 1, 1], [], []>} : vector<8x8xbf16>, vector<8x32xbf16>, vector<8x32xf32> -> vector<8x32xf32>
    %108 = arith.addf %85, %107 : vector<8x32xf32>
    %c0_58 = arith.constant 0 : index
    %c24 = arith.constant 24 : index
    %109 = vector.load %arg10[%c0_58, %c24] : memref<8x96xbf16, #tpu.memory_space<vmem>>, vector<8x8xbf16>
    %c0_59 = arith.constant 0 : index
    %c56 = arith.constant 56 : index
    %110 = vector.load %arg10[%c0_59, %c56] : memref<8x96xbf16, #tpu.memory_space<vmem>>, vector<8x8xbf16>
    %c0_60 = arith.constant 0 : index
    %c88 = arith.constant 88 : index
    %111 = vector.load %arg10[%c0_60, %c88] : memref<8x96xbf16, #tpu.memory_space<vmem>>, vector<8x8xbf16>
    %cst_61 = arith.constant dense<0.000000e+00> : vector<8x8xf32>
    %112 = tpu.matmul %109, %110, %cst_61 {dimension_numbers = #tpu.dot_dimension_numbers<[1], [1], [0], [0], [0, 0, 1, 0], [], []>} : vector<8x8xbf16>, vector<8x8xbf16>, vector<8x8xf32> -> vector<8x8xf32>
    %cst_62 = arith.constant 0.353553385 : f32
    %113 = vector.broadcast %cst_62 : f32 to vector<8x8xf32>
    %114 = arith.mulf %112, %113 : vector<8x8xf32>
    %115 = vector.broadcast %38 : vector<1x8xf32> to vector<8x8xf32>
    %116 = arith.addf %114, %115 : vector<8x8xf32>
    %cst_63 = arith.constant dense<0xFF800000> : vector<8xf32>
    %117 = vector.multi_reduction <maximumf>, %116, %cst_63 [1] : vector<8x8xf32> to vector<8xf32>
    %118 = vector.shape_cast %117 : vector<8xf32> to vector<8x1xf32>
    %119 = vector.broadcast %118 : vector<8x1xf32> to vector<8x8xf32>
    %120 = arith.subf %116, %119 : vector<8x8xf32>
    %121 = math.exp %120 : vector<8x8xf32>
    %cst_64 = arith.constant dense<0.000000e+00> : vector<8xf32>
    %122 = vector.multi_reduction <add>, %121, %cst_64 [1] : vector<8x8xf32> to vector<8xf32>
    %123 = vector.shape_cast %122 : vector<8xf32> to vector<8x1xf32>
    %124 = vector.broadcast %123 : vector<8x1xf32> to vector<8x8xf32>
    %125 = arith.divf %121, %124 : vector<8x8xf32>
    %126 = arith.truncf %125 : vector<8x8xf32> to vector<8x8xbf16>
    %cst_65 = arith.constant dense<0.000000e+00> : vector<8x8xf32>
    %127 = tpu.matmul %126, %111, %cst_65 {dimension_numbers = #tpu.dot_dimension_numbers<[1], [0], [0], [1], [0, 0, 1, 1], [], []>} : vector<8x8xbf16>, vector<8x8xbf16>, vector<8x8xf32> -> vector<8x8xf32>
    %128 = arith.truncf %127 : vector<8x8xf32> to vector<8x8xbf16>
    %c24_66 = arith.constant 24 : index
    %c0_67 = arith.constant 0 : index
    %129 = vector.load %arg7[%c24_66, %c0_67] : memref<32x32xbf16, #tpu.memory_space<vmem>>, vector<8x32xbf16>
    %cst_68 = arith.constant dense<0.000000e+00> : vector<8x32xf32>
    %130 = tpu.matmul %128, %129, %cst_68 {dimension_numbers = #tpu.dot_dimension_numbers<[1], [0], [0], [1], [0, 0, 1, 1], [], []>} : vector<8x8xbf16>, vector<8x32xbf16>, vector<8x32xf32> -> vector<8x32xf32>
    %131 = arith.addf %108, %130 : vector<8x32xf32>
    %132 = arith.addf %1, %131 : vector<8x32xf32>
    %c0_69 = arith.constant 0 : index
    %c0_70 = arith.constant 0 : index
    %133 = vector.load %arg8[%c0_69, %c0_70] : memref<1x32xf32, #tpu.memory_space<vmem>>, vector<1x32xf32>
    %134 = vector.broadcast %133 : vector<1x32xf32> to vector<8x32xf32>
    %135 = arith.addf %132, %134 : vector<8x32xf32>
    %c0_71 = arith.constant 0 : index
    %c0_72 = arith.constant 0 : index
    %c0_73 = arith.constant 0 : index
    %136 = vector.load %arg9[%c0_71, %c0_72, %c0_73] : memref<1x8x32xf32, #tpu.memory_space<vmem>>, vector<1x8x32xf32>
    %137 = vector.shape_cast %136 : vector<1x8x32xf32> to vector<8x32xf32>
    %138 = vector.shape_cast %135 : vector<8x32xf32> to vector<1x8x32xf32>
    tpu.vector_store %arg9[%c0_71, %c0_72, %c0_73], %138 {strides = array<i32>} : memref<1x8x32xf32, #tpu.memory_space<vmem>>, vector<1x8x32xf32>,
    return
  }
  func.func @transform_0(%arg0: i32) -> (i32, i32, i32) {
    %c0_i32 = arith.constant 0 : i32
    %c0_i32_0 = arith.constant 0 : i32
    %c0_i32_1 = arith.constant 0 : i32
    return %arg0, %c0_i32, %c0_i32_0 : i32, i32, i32
  }
  func.func @transform_1(%arg0: i32) -> (i32, i32, i32) {
    %c0_i32 = arith.constant 0 : i32
    %c0_i32_0 = arith.constant 0 : i32
    %c0_i32_1 = arith.constant 0 : i32
    return %arg0, %c0_i32, %c0_i32_0 : i32, i32, i32
  }
  func.func @transform_2(%arg0: i32) -> (i32, i32) {
    %c0_i32 = arith.constant 0 : i32
    %c0_i32_0 = arith.constant 0 : i32
    %c0_i32_1 = arith.constant 0 : i32
    return %c0_i32, %c0_i32_0 : i32, i32
  }
  func.func @transform_3(%arg0: i32) -> (i32, i32) {
    %c0_i32 = arith.constant 0 : i32
    %c0_i32_0 = arith.constant 0 : i32
    %c0_i32_1 = arith.constant 0 : i32
    return %c0_i32, %c0_i32_0 : i32, i32
  }
  func.func @transform_4(%arg0: i32) -> (i32, i32) {
    %c0_i32 = arith.constant 0 : i32
    %c0_i32_0 = arith.constant 0 : i32
    %c0_i32_1 = arith.constant 0 : i32
    return %c0_i32, %c0_i32_0 : i32, i32
  }
  func.func @transform_5(%arg0: i32) -> (i32, i32) {
    %c0_i32 = arith.constant 0 : i32
    %c0_i32_0 = arith.constant 0 : i32
    %c0_i32_1 = arith.constant 0 : i32
    return %c0_i32, %c0_i32_0 : i32, i32
  }
  func.func @transform_6(%arg0: i32) -> (i32, i32) {
    %c0_i32 = arith.constant 0 : i32
    %c0_i32_0 = arith.constant 0 : i32
    %c0_i32_1 = arith.constant 0 : i32
    return %c0_i32, %c0_i32_0 : i32, i32
  }
  func.func @transform_7(%arg0: i32) -> (i32, i32) {
    %c0_i32 = arith.constant 0 : i32
    %c0_i32_0 = arith.constant 0 : i32
    %c0_i32_1 = arith.constant 0 : i32
    return %c0_i32, %c0_i32_0 : i32, i32
  }
  func.func @transform_8(%arg0: i32) -> (i32, i32, i32) {
    %c0_i32 = arith.constant 0 : i32
    %c0_i32_0 = arith.constant 0 : i32
    %c0_i32_1 = arith.constant 0 : i32
    return %arg0, %c0_i32, %c0_i32_0 : i32, i32, i32
  }
}

module attributes {stable_mosaic.version = 11 : i64} {
  func.func @_layernorm_kernel(%arg0: i32, %arg1: memref<16x32xf32, #tpu.memory_space<vmem>>, %arg2: memref<1x32xf32, #tpu.memory_space<vmem>>, %arg3: memref<1x32xf32, #tpu.memory_space<vmem>>, %arg4: memref<16x32xf32, #tpu.memory_space<vmem>>) attributes {dimension_semantics = [#tpu.dimension_semantics<parallel>], iteration_bounds = array<i64: 1>, scalar_prefetch = 0 : i64, scratch_operands = 0 : i64, tpu.core_type = #tpu.core_type<tc>, window_params = [{transform_indices = @transform_0, window_bounds = array<i64: 16, 32>}, {pipeline_mode = #tpu.pipeline_mode<synchronous>, transform_indices = @transform_1, window_bounds = array<i64: 1, 32>}, {pipeline_mode = #tpu.pipeline_mode<synchronous>, transform_indices = @transform_2, window_bounds = array<i64: 1, 32>}, {transform_indices = @transform_3, window_bounds = array<i64: 16, 32>}]} {
    %c0 = arith.constant 0 : index
    %c0_0 = arith.constant 0 : index
    %0 = vector.load %arg1[%c0, %c0_0] : memref<16x32xf32, #tpu.memory_space<vmem>>, vector<16x32xf32>
    %c0_1 = arith.constant 0 : index
    %c0_2 = arith.constant 0 : index
    %1 = vector.load %arg2[%c0_1, %c0_2] : memref<1x32xf32, #tpu.memory_space<vmem>>, vector<1x32xf32>
    %c0_3 = arith.constant 0 : index
    %c0_4 = arith.constant 0 : index
    %2 = vector.load %arg3[%c0_3, %c0_4] : memref<1x32xf32, #tpu.memory_space<vmem>>, vector<1x32xf32>
    %cst = arith.constant dense<0.000000e+00> : vector<16xf32>
    %3 = vector.multi_reduction <add>, %0, %cst [1] : vector<16x32xf32> to vector<16xf32>
    %4 = vector.shape_cast %3 : vector<16xf32> to vector<16x1xf32>
    %cst_5 = arith.constant 3.200000e+01 : f32
    %5 = vector.broadcast %cst_5 : f32 to vector<16x1xf32>
    %6 = arith.divf %4, %5 : vector<16x1xf32>
    %7 = vector.broadcast %6 : vector<16x1xf32> to vector<16x32xf32>
    %8 = arith.subf %0, %7 : vector<16x32xf32>
    %9 = arith.mulf %8, %8 : vector<16x32xf32>
    %cst_6 = arith.constant dense<0.000000e+00> : vector<16xf32>
    %10 = vector.multi_reduction <add>, %9, %cst_6 [1] : vector<16x32xf32> to vector<16xf32>
    %11 = vector.shape_cast %10 : vector<16xf32> to vector<16x1xf32>
    %cst_7 = arith.constant 0.0322580636 : f32
    %12 = vector.broadcast %cst_7 : f32 to vector<16x1xf32>
    %13 = arith.mulf %11, %12 : vector<16x1xf32>
    %cst_8 = arith.constant 9.99999997E-7 : f32
    %14 = vector.broadcast %cst_8 : f32 to vector<16x1xf32>
    %15 = arith.addf %13, %14 : vector<16x1xf32>
    %16 = math.rsqrt %15 : vector<16x1xf32>
    %17 = vector.broadcast %16 : vector<16x1xf32> to vector<16x32xf32>
    %18 = arith.mulf %8, %17 : vector<16x32xf32>
    %19 = vector.broadcast %1 : vector<1x32xf32> to vector<16x32xf32>
    %20 = arith.mulf %19, %18 : vector<16x32xf32>
    %21 = vector.broadcast %2 : vector<1x32xf32> to vector<16x32xf32>
    %22 = arith.addf %20, %21 : vector<16x32xf32>
    %c0_9 = arith.constant 0 : index
    %c0_10 = arith.constant 0 : index
    %23 = vector.load %arg4[%c0_9, %c0_10] : memref<16x32xf32, #tpu.memory_space<vmem>>, vector<16x32xf32>
    tpu.vector_store %arg4[%c0_9, %c0_10], %22 {strides = array<i32>} : memref<16x32xf32, #tpu.memory_space<vmem>>, vector<16x32xf32>,
    return
  }
  func.func @transform_0(%arg0: i32) -> (i32, i32) {
    %c0_i32 = arith.constant 0 : i32
    %c0_i32_0 = arith.constant 0 : i32
    return %arg0, %c0_i32 : i32, i32
  }
  func.func @transform_1(%arg0: i32) -> (i32, i32) {
    %c0_i32 = arith.constant 0 : i32
    %c0_i32_0 = arith.constant 0 : i32
    %c0_i32_1 = arith.constant 0 : i32
    return %c0_i32, %c0_i32_0 : i32, i32
  }
  func.func @transform_2(%arg0: i32) -> (i32, i32) {
    %c0_i32 = arith.constant 0 : i32
    %c0_i32_0 = arith.constant 0 : i32
    %c0_i32_1 = arith.constant 0 : i32
    return %c0_i32, %c0_i32_0 : i32, i32
  }
  func.func @transform_3(%arg0: i32) -> (i32, i32) {
    %c0_i32 = arith.constant 0 : i32
    %c0_i32_0 = arith.constant 0 : i32
    return %arg0, %c0_i32 : i32, i32
  }
}

</mosaic_0001>

<llo_original>
// kernel: _lambda_.6
$region0: #{_lambda_.6}
  #allocation0 [shape = 'u32[]', space=smem, size = 0x4, offset = 0x4, fixed_abs, tag = 'smem constant byte address 0x4 - core index']
  #allocation1 [shape = 'u32[144,128]{1,0:T(1,128)}', space=vmem, size = 0x12000, scoped, tag = 'internal scratch']
  %s0 = inlined_call_operand.vmem [shape: f32[16,32], index: 0, kind: input, shape index: {}]
  %s1 = inlined_call_operand.vmem [shape: f32[1,32], index: 1, kind: input, shape index: {}]
  %s2 = inlined_call_operand.vmem [shape: f32[1,32], index: 2, kind: input, shape index: {}]
  %s3 = inlined_call_operand.vmem [shape: bf16[32,64], index: 3, kind: input, shape index: {}]
  %s4 = inlined_call_operand.vmem [shape: f32[1,64], index: 4, kind: input, shape index: {}]
  %s5 = inlined_call_operand.vmem [shape: bf16[64,32], index: 5, kind: input, shape index: {}]
  %s6 = inlined_call_operand.vmem [shape: f32[1,32], index: 6, kind: input, shape index: {}]
  %s7 = inlined_call_operand.vmem [shape: f32[16,32], index: 7, kind: output, shape index: {}]
  %s8 = sld [smem:[#allocation0]]
  $region38: #{_lambda_.6} parent=0
    _
  %s10 = ssub.s32 1, %s8
  %s11 = scalar_select 0, %s10, %s8
  // Predicated region
  $region2: #{_lambda_.6} parent=0 // pred_check
    _
  $region3: #{_lambda_.6} parent=0 // pred_check_branch
    %13 = sbr.rel (0) target = $region5
  $region4: #{_lambda_.6} parent=0 // pred_region
    _
  $region5: #{_lambda_.6} parent=0 // pred_fallthru
    _
  // Predicated region
  $region6: #{_lambda_.6} parent=0 // pred_check
    _
  $region7: #{_lambda_.6} parent=0 // pred_check_branch
    %15 = sbr.rel (0) target = $region9
  $region8: #{_lambda_.6} parent=0 // pred_region
    _
  $region9: #{_lambda_.6} parent=0 // pred_fallthru
    _
  // Predicated region
  $region10: #{_lambda_.6} parent=0 // pred_check
    _
  $region11: #{_lambda_.6} parent=0 // pred_check_branch
    %17 = sbr.rel (0) target = $region13
  $region12: #{_lambda_.6} parent=0 // pred_region
    _
  $region13: #{_lambda_.6} parent=0 // pred_fallthru
    _
  // Predicated region
  $region14: #{_lambda_.6} parent=0 // pred_check
    _
  $region15: #{_lambda_.6} parent=0 // pred_check_branch
    %19 = sbr.rel (0) target = $region17
  $region16: #{_lambda_.6} parent=0 // pred_region
    _
  $region17: #{_lambda_.6} parent=0 // pred_fallthru
    _
  // Predicated region
  $region18: #{_lambda_.6} parent=0 // pred_check
    _
  $region19: #{_lambda_.6} parent=0 // pred_check_branch
    %21 = sbr.rel (0) target = $region21
  $region20: #{_lambda_.6} parent=0 // pred_region
    _
  $region21: #{_lambda_.6} parent=0 // pred_fallthru
    _
  // Predicated region
  $region22: #{_lambda_.6} parent=0 // pred_check
    _
  $region23: #{_lambda_.6} parent=0 // pred_check_branch
    %23 = sbr.rel (0) target = $region25
  $region24: #{_lambda_.6} parent=0 // pred_region
    _
  $region25: #{_lambda_.6} parent=0 // pred_fallthru
    _
  // Predicated region
  $region26: #{_lambda_.6} parent=0 // pred_check
    _
  $region27: #{_lambda_.6} parent=0 // pred_check_branch
    %25 = sbr.rel (0) target = $region29
  $region28: #{_lambda_.6} parent=0 // pred_region
    _
  $region29: #{_lambda_.6} parent=0 // pred_fallthru
    _
  %v27 = vld [vmem:[%s0] sm:$0xff]
  %v28 = vld [vmem:[%s0 + $0x8] sm:$0xff]
  %v29 = vld [vmem:[%s1] sm:$0x1]
  %v30 = vld [vmem:[%s2] sm:$0x1]
  %vm31 = vcmask 261120
  %v32 = vsel %vm31, %v27, 0.0
  %33 = vadd.xlane.f32.xlu0 %v32
  %v34 = vpop.xlane.xlu0 %33
  %v35 = vsel %vm31, %v28, 0.0
  %36 = vadd.xlane.f32.xlu0 %v35
  %v37 = vpop.xlane.xlu0 %36
  %v38 = vrcp.pop 32.0
  %v39 = vmul.f32 %v34, %v38
  %v40 = vmul.f32 %v37, %v38
  %v41 = vsub.f32 %v27, %v39
  %v42 = vsub.f32 %v28, %v40
  %v43 = vmul.f32 %v41, %v41
  %v44 = vmul.f32 %v42, %v42
  %v45 = vsel %vm31, %v43, 0.0
  %46 = vadd.xlane.f32.xlu0 %v45
  %v47 = vpop.xlane.xlu0 %46
  %v48 = vsel %vm31, %v44, 0.0
  %49 = vadd.xlane.f32.xlu0 %v48
  %v50 = vpop.xlane.xlu0 %49
  %v51 = vmul.f32 %v47, 0.032258064
  %v52 = vmul.f32 %v50, 0.032258064
  %v53 = vadd.f32 %v51, 1e-06
  %v54 = vadd.f32 %v52, 1e-06
  %v55 = vrsqrt.pop %v53
  %v56 = vrsqrt.pop %v54
  %v57 = vmul.f32 %v41, %v55
  %v58 = vmul.f32 %v42, %v56
  %v60 = vlaneseq
  %v61 = vshrl.u32 %v60, 7
  %v62 = vsub.s32 0, %v61
  %v63 = vrot.slane %v29, %v62
  %v65 = vmul.f32 %v63, %v57
  %v66 = vmul.f32 %v63, %v58
  %v68 = vlaneseq
  %v69 = vshrl.u32 %v68, 7
  %v70 = vsub.s32 0, %v69
  %v71 = vrot.slane %v30, %v70
  %v73 = vadd.f32 %v65, %v71
  %v74 = vadd.f32 %v66, %v71
  %v75 = vpack.c.bf16 %v74, %v73
  %v76 = vld [vmem:[%s3] sm:$0xf]
  %v77 = vld [vmem:[%s3 + $0x4] sm:$0xf]
  %v78 = vld [vmem:[%s3 + $0x8] sm:$0xf]
  %v79 = vld [vmem:[%s3 + $0xc] sm:$0xf]
  %v80 = vld [vmem:[%s4] sm:$0x1]
  %v82 = vlaneseq
  %v83 = vshrl.u32 %v82, 7
  %v84 = vsub.s32 0, %v83
  %v85 = vrot.slane %v80, %v84
  %v91 = vunpack.c.l.b16 %v76
  %v92 = vunpack.c.l.b16 %v77
  %v93 = vunpack.c.l.b16 %v78
  %v94 = vunpack.c.l.b16 %v79
  %v95 = vpack.c.b16 %v92, %v91
  %v96 = vpack.c.b16 %v94, %v93
  %v100 = vsel %vm31, %v75, 0
  %102 = vmatprep.subr.bf16.mxu0 0
  %103 = vmatpush1.bf16.msra.mxu0 0
  %104 = vmatprep.subr.bf16.mxu0 0
  %105 = vmatpush1.bf16.msra.mxu0 0
  %106 = vmatprep.subr.bf16.mxu0 0
  %107 = vmatpush1.bf16.msra.mxu0 0
  %108 = vmatprep.subr.bf16.mxu0 0
  %109 = vmatpush1.bf16.msra.mxu0 0
  %110 = vmatprep.subr.bf16.mxu0 0
  %111 = vmatpush1.bf16.msra.mxu0 0
  %112 = vmatprep.subr.bf16.mxu0 0
  %113 = vmatpush1.bf16.msra.mxu0 0
  %114 = vmatprep.subr.bf16.mxu0 0
  %115 = vmatpush1.bf16.msra.mxu0 %v96
  %116 = vmatprep.subr.bf16.mxu0 0
  %117 = vmatpush1.bf16.msra.mxu0 %v95
  %118 = vmatprep.subr.bf16.mxu0 0
  %119 = vmatpush2.bf16.msra.mxu0 0
  %120 = vmatprep.subr.bf16.mxu0 0
  %121 = vmatpush2.bf16.msra.mxu0 0
  %122 = vmatprep.subr.bf16.mxu0 0
  %123 = vmatpush2.bf16.msra.mxu0 0
  %124 = vmatprep.subr.bf16.mxu0 0
  %125 = vmatpush2.bf16.msra.mxu0 0
  %126 = vmatprep.subr.bf16.mxu0 0
  %127 = vmatpush2.bf16.msra.mxu0 0
  %128 = vmatprep.subr.bf16.mxu0 0
  %129 = vmatpush2.bf16.msra.mxu0 0
  %130 = vmatprep.subr.bf16.mxu0 0
  %131 = vmatpush2.bf16.msra.mxu0 0
  %132 = vmatprep.subr.bf16.mxu0 0
  %133 = vmatpush2.bf16.msra.mxu0 0
  %134 = vmatprep.mubr.bf16.mxu0 0
  %135 = vmatmul.mubr.bf16.gmra.mxu0 %v100
  %v136 = vpop.f32.mrf.mxu0
  %v137 = vadd.f32 %v85, %v136
  %v138 = vpop.f32.mrf.mxu0
  %v139 = vpop.f32.mrf.mxu0
  %v140 = vadd.f32 %v85, %v139
  %v141 = vpop.f32.mrf.mxu0
  %142 = vdwg.mxu0
  %v143 = vmax.f32 %v137, 0.0
  %v144 = vmax.f32 %v140, 0.0
  %v145 = vpack.c.bf16 %v144, %v143
  %v146 = vld [vmem:[%s5] sm:$0xf]
  %v147 = vld [vmem:[%s5 + $0x4] sm:$0xf]
  %v148 = vld [vmem:[%s5 + $0x8] sm:$0xf]
  %v149 = vld [vmem:[%s5 + $0xc] sm:$0xf]
  %v150 = vld [vmem:[%s5 + $0x10] sm:$0xf]
  %v151 = vld [vmem:[%s5 + $0x14] sm:$0xf]
  %v152 = vld [vmem:[%s5 + $0x18] sm:$0xf]
  %v153 = vld [vmem:[%s5 + $0x1c] sm:$0xf]
  %v154 = vld [vmem:[%s6] sm:$0x1]
  %v156 = vlaneseq
  %v157 = vshrl.u32 %v156, 7
  %v158 = vsub.s32 0, %v157
  %v159 = vrot.slane %v154, %v158
  %v169 = vunpack.c.l.b16 %v146
  %v170 = vunpack.c.l.b16 %v147
  %v171 = vunpack.c.l.b16 %v148
  %v172 = vunpack.c.l.b16 %v149
  %v173 = vunpack.c.l.b16 %v150
  %v174 = vunpack.c.l.b16 %v151
  %v175 = vunpack.c.l.b16 %v152
  %v176 = vunpack.c.l.b16 %v153
  %v177 = vpack.c.b16 %v170, %v169
  %v178 = vpack.c.b16 %v172, %v171
  %v179 = vpack.c.b16 %v174, %v173
  %v180 = vpack.c.b16 %v176, %v175
  %vm185 = vcmask 523264
  %v187 = vsel %vm185, %v145, 0
  %189 = vmatprep.subr.bf16.mxu0 0
  %190 = vmatpush1.bf16.msra.mxu0 0
  %191 = vmatprep.subr.bf16.mxu0 0
  %192 = vmatpush1.bf16.msra.mxu0 0
  %193 = vmatprep.subr.bf16.mxu0 0
  %194 = vmatpush1.bf16.msra.mxu0 0
  %195 = vmatprep.subr.bf16.mxu0 0
  %196 = vmatpush1.bf16.msra.mxu0 0
  %197 = vmatprep.subr.bf16.mxu0 0
  %198 = vmatpush1.bf16.msra.mxu0 %v180
  %199 = vmatprep.subr.bf16.mxu0 0
  %200 = vmatpush1.bf16.msra.mxu0 %v179
  %201 = vmatprep.subr.bf16.mxu0 0
  %202 = vmatpush1.bf16.msra.mxu0 %v178
  %203 = vmatprep.subr.bf16.mxu0 0
  %204 = vmatpush1.bf16.msra.mxu0 %v177
  %205 = vmatprep.subr.bf16.mxu0 0
  %206 = vmatpush2.bf16.msra.mxu0 0
  %207 = vmatprep.subr.bf16.mxu0 0
  %208 = vmatpush2.bf16.msra.mxu0 0
  %209 = vmatprep.subr.bf16.mxu0 0
  %210 = vmatpush2.bf16.msra.mxu0 0
  %211 = vmatprep.subr.bf16.mxu0 0
  %212 = vmatpush2.bf16.msra.mxu0 0
  %213 = vmatprep.subr.bf16.mxu0 0
  %214 = vmatpush2.bf16.msra.mxu0 0
  %215 = vmatprep.subr.bf16.mxu0 0
  %216 = vmatpush2.bf16.msra.mxu0 0
  %217 = vmatprep.subr.bf16.mxu0 0
  %218 = vmatpush2.bf16.msra.mxu0 0
  %219 = vmatprep.subr.bf16.mxu0 0
  %220 = vmatpush2.bf16.msra.mxu0 0
  %221 = vmatprep.mubr.bf16.mxu0 0
  %222 = vmatmul.mubr.bf16.gmra.mxu0 %v187
  %v223 = vpop.f32.mrf.mxu0
  %v224 = vadd.f32 %v159, %v223
  %v225 = vpop.f32.mrf.mxu0
  %v226 = vpop.f32.mrf.mxu0
  %v227 = vadd.f32 %v159, %v226
  %v228 = vpop.f32.mrf.mxu0
  %229 = vdwg.mxu0
  %v230 = vadd.f32 %v27, %v224
  %v231 = vadd.f32 %v28, %v227
  %232 = vst.msk [vmem:[%s7] sm:$0xff] %vm31, %v230
  %233 = vst.msk [vmem:[%s7 + $0x8] sm:$0xff] %vm31, %v231
  // Predicated region
  $region30: #{_lambda_.6} parent=0 // pred_check
    _
  $region31: #{_lambda_.6} parent=0 // pred_check_branch
    %235 = sbr.rel (0) target = $region33
  $region32: #{_lambda_.6} parent=0 // pred_region
    _
  $region33: #{_lambda_.6} parent=0 // pred_fallthru
    _
  // Predicated region
  $region34: #{_lambda_.6} parent=0 // pred_check
    _
  $region35: #{_lambda_.6} parent=0 // pred_check_branch
    %237 = sbr.rel (0) target = $region37
  $region36: #{_lambda_.6} parent=0 // pred_region
    _
  $region37: #{_lambda_.6} parent=0 // pred_fallthru
    _

// kernel: _lambda_.9
$region0: #{_lambda_.9}
  #allocation0 [shape = 'u32[]', space=smem, size = 0x4, offset = 0x4, fixed_abs, tag = 'smem constant byte address 0x4 - core index']
  #allocation1 [shape = 'u32[144,128]{1,0:T(1,128)}', space=vmem, size = 0x12000, scoped, tag = 'internal scratch']
  %s0 = inlined_call_operand.vmem [shape: f32[16,32], index: 0, kind: input, shape index: {}]
  %s1 = inlined_call_operand.vmem [shape: f32[1,32], index: 1, kind: input, shape index: {}]
  %s2 = inlined_call_operand.vmem [shape: f32[1,32], index: 2, kind: input, shape index: {}]
  %s3 = inlined_call_operand.hbm [shape: f32[16,32], index: 3, kind: output, shape index: {}]
  %s4 = sld [smem:[#allocation0]]
  $region22: #{_lambda_.9} parent=0
    _
  %s6 = ssub.s32 1, %s4
  %s7 = scalar_select 0, %s6, %s4
  $region1: #{_lambda_.9} parent=0
    #allocation2 [shape = 'u8[8192]{0}', space=vmem, size = 0x2000, scoped, tag = 'output window, operand 0, single buffered']
    #allocation3 [shape = 's32[1]{0}', space=sflag, size = 0x4, scoped, tag = 'scoped memory for _lambda_.9']
    %8 = vsyncpa [#allocation3], 0
    // Predicated region
    $region2: #{_lambda_.9} parent=1 // pred_check
      _
    $region3: #{_lambda_.9} parent=1 // pred_check_branch
      %10 = sbr.rel (0) target = $region5
    $region4: #{_lambda_.9} parent=1 // pred_region
      _
    $region5: #{_lambda_.9} parent=1 // pred_fallthru
      _
    // Predicated region
    $region6: #{_lambda_.9} parent=1 // pred_check
      _
    $region7: #{_lambda_.9} parent=1 // pred_check_branch
      %12 = sbr.rel (0) target = $region9
    $region8: #{_lambda_.9} parent=1 // pred_region
      _
    $region9: #{_lambda_.9} parent=1 // pred_fallthru
      _
    // Predicated region
    $region10: #{_lambda_.9} parent=1 // pred_check
      _
    $region11: #{_lambda_.9} parent=1 // pred_check_branch
      %14 = sbr.rel (0) target = $region13
    $region12: #{_lambda_.9} parent=1 // pred_region
      _
    $region13: #{_lambda_.9} parent=1 // pred_fallthru
      _
    %v15 = vld [vmem:[%s0] sm:$0xff]
    %v16 = vld [vmem:[%s0 + $0x8] sm:$0xff]
    %v17 = vld [vmem:[%s1] sm:$0x1]
    %v18 = vld [vmem:[%s2] sm:$0x1]
    %vm19 = vcmask 261120
    %v20 = vsel %vm19, %v15, 0.0
    %21 = vadd.xlane.f32.xlu0 %v20
    %v22 = vpop.xlane.xlu0 %21
    %v23 = vsel %vm19, %v16, 0.0
    %24 = vadd.xlane.f32.xlu0 %v23
    %v25 = vpop.xlane.xlu0 %24
    %v26 = vrcp.pop 32.0
    %v27 = vmul.f32 %v22, %v26
    %v28 = vmul.f32 %v25, %v26
    %v29 = vsub.f32 %v15, %v27
    %v30 = vsub.f32 %v16, %v28
    %v31 = vmul.f32 %v29, %v29
    %v32 = vmul.f32 %v30, %v30
    %v33 = vsel %vm19, %v31, 0.0
    %34 = vadd.xlane.f32.xlu0 %v33
    %v35 = vpop.xlane.xlu0 %34
    %v36 = vsel %vm19, %v32, 0.0
    %37 = vadd.xlane.f32.xlu0 %v36
    %v38 = vpop.xlane.xlu0 %37
    %v39 = vmul.f32 %v35, 0.032258064
    %v40 = vmul.f32 %v38, 0.032258064
    %v41 = vadd.f32 %v39, 1e-06
    %v42 = vadd.f32 %v40, 1e-06
    %v43 = vrsqrt.pop %v41
    %v44 = vrsqrt.pop %v42
    %v45 = vmul.f32 %v29, %v43
    %v46 = vmul.f32 %v30, %v44
    %v48 = vlaneseq
    %v49 = vshrl.u32 %v48, 7
    %v50 = vsub.s32 0, %v49
    %v51 = vrot.slane %v17, %v50
    %v53 = vmul.f32 %v51, %v45
    %v54 = vmul.f32 %v51, %v46
    %v56 = vlaneseq
    %v57 = vshrl.u32 %v56, 7
    %v58 = vsub.s32 0, %v57
    %v59 = vrot.slane %v18, %v58
    %v61 = vadd.f32 %v53, %v59
    %v62 = vadd.f32 %v54, %v59
    %63 = vst.msk [vmem:[#allocation2] sm:$0xff] %vm19, %v61
    %64 = vst.msk [vmem:[#allocation2 + $0x8] sm:$0xff] %vm19, %v62
    // Predicated region
    $region14: #{_lambda_.9} parent=1 // pred_check
      _
    $region15: #{_lambda_.9} parent=1 // pred_check_branch
      %66 = sbr.rel (0) target = $region17
    $region16: #{_lambda_.9} parent=1 // pred_region
      %s68 = ssub.s32 256, 256
      %69 = vsyncadd [#allocation3], %s68
      %s70 = sshll.u32 [#allocation2], 4
      %s71 = int_to_ptr.vmem [resolvable:$true] %s70
      %76 = dma.vmem_to_hbm [thread:$0]  %s71, 256, %s3, [#allocation3], 128, 128, 8
    $region17: #{_lambda_.9} parent=1 // pred_fallthru
      _
    // Predicated region
    $region18: #{_lambda_.9} parent=1 // pred_check
      _
    $region19: #{_lambda_.9} parent=1 // pred_check_branch
      %78 = sbr.rel (0) target = $region21
    $region20: #{_lambda_.9} parent=1 // pred_region
      %79 = dma.done [#allocation3], 256
    $region21: #{_lambda_.9} parent=1 // pred_fallthru
      _
    %80 = vsyncpa [#allocation3], 1

// kernel: _lambda_.7
$region0: #{_lambda_.7}
  #allocation0 [shape = 'u32[]', space=smem, size = 0x4, offset = 0x4, fixed_abs, tag = 'smem constant byte address 0x4 - core index']
  #allocation1 [shape = 'u32[144,128]{1,0:T(1,128)}', space=vmem, size = 0x12000, scoped, tag = 'internal scratch']
  #allocation2 [shape = 'bf16[8,96]{1,0:T(8,128)(2,1)}', space=vmem, size = 0x800, scoped, tag = 'scratch operand']
  %s0 = inlined_call_operand.vmem [shape: f32[2,8,32], index: 0, kind: input, shape index: {}]
  %s1 = inlined_call_operand.vmem [shape: f32[2,1,8], index: 1, kind: input, shape index: {}]
  %s2 = inlined_call_operand.vmem [shape: f32[1,32], index: 2, kind: input, shape index: {}]
  %s3 = inlined_call_operand.vmem [shape: f32[1,32], index: 3, kind: input, shape index: {}]
  %s4 = inlined_call_operand.vmem [shape: bf16[32,96], index: 4, kind: input, shape index: {}]
  %s5 = inlined_call_operand.vmem [shape: f32[1,96], index: 5, kind: input, shape index: {}]
  %s6 = inlined_call_operand.vmem [shape: bf16[32,32], index: 6, kind: input, shape index: {}]
  %s7 = inlined_call_operand.vmem [shape: f32[1,32], index: 7, kind: input, shape index: {}]
  %s8 = inlined_call_operand.vmem [shape: f32[2,8,32], index: 8, kind: output, shape index: {}]
  %s9 = sld [smem:[#allocation0]]
  $region65: #{_lambda_.7} parent=0
    _
  %s11 = ssub.s32 1, %s9
  %s12 = scalar_select 0, %s11, %s9
  loop: start=0, step=1, limit=4
  $region2: #{_lambda_.7} parent=0 // loop_pre_header
    _
  $region3: #{_lambda_.7} parent=0 // loop_header
    %s14 = sphi 0, %s18
    %p15 = scmp.ge.s32.totalorder %s14, 4
    %s24 = sphi 0, %s26
    %s27 = sphi 0, %s24
    %s28 = sphi 0, %s27
    %s44 = sphi 0, %s28
    %s50 = sphi 0, %s52
    %s53 = sphi 0, %s50
    %s54 = sphi 0, %s53
    %s70 = sphi 0, %s54
    %s74 = sphi 0, %s74
    %s76 = sphi 0, %s74
    %s77 = sphi 0, %s76
    %s91 = sphi 0, %s77
    %s95 = sphi 0, %s95
    %s97 = sphi 0, %s95
    %s98 = sphi 0, %s97
    %s112 = sphi 0, %s98
    %s116 = sphi 0, %s116
    %s118 = sphi 0, %s116
    %s119 = sphi 0, %s118
    %s133 = sphi 0, %s119
    %s137 = sphi 0, %s137
    %s139 = sphi 0, %s137
    %s140 = sphi 0, %s139
    %s154 = sphi 0, %s140
    %s158 = sphi 0, %s158
    %s160 = sphi 0, %s158
    %s161 = sphi 0, %s160
    %s175 = sphi 0, %s161
    %s179 = sphi 0, %s179
    %s181 = sphi 0, %s179
    %s182 = sphi 0, %s181
    %s196 = sphi 0, %s182
    %s202 = sphi 0, %s204
    %s205 = sphi 0, %s202
    %s206 = sphi 0, %s205
    %s222 = sphi 0, %s206
  $region4: #{_lambda_.7} parent=0 // loop_header_branch
    %17 = sbr.rel (%p15) target = $region8
  $region5: #{_lambda_.7} parent=0 // loop_body
    %s19 = ssub.s32 %s14, 1
    %s20 = ssub.s32 %s14, 2
    %s21 = sadd.s32 %s14, 1
    %s22 = ssub.s32 %s14, %s21
    %p23 = scmp.eq.s32.totalorder %s22, 0
    %s25 = sadd.s32 %s24, 1
    %s26 = scalar_select %p23, %s24, %s25
    %p29 = pneg %p23
    %p30 = scmp.eq.s32.totalorder %s14, 1
    %p31 = por %p29, %p30
    %p32 = scmp.ne.s32.totalorder %s24, %s27
    %p33 = scmp.eq.s32.totalorder %s14, 0
    %p34 = por %p32, %p33
    %p35 = scmp.ne.s32.totalorder %s24, %s27
    %p36 = scmp.eq.s32.totalorder %s19, 1
    %p37 = por %p35, %p36
    %p38 = scmp.ne.s32.totalorder %s27, %s28
    %p39 = scmp.eq.s32.totalorder %s19, 0
    %p40 = por %p38, %p39
    %p41 = scmp.ne.s32.totalorder %s27, %s28
    %p42 = scmp.eq.s32.totalorder %s20, 1
    %p43 = por %p41, %p42
    %p45 = scmp.ne.s32.totalorder %s28, %s44
    %p46 = scmp.eq.s32.totalorder %s20, 0
    %p47 = por %p45, %p46
    %s48 = ssub.s32 %s14, %s21
    %p49 = scmp.eq.s32.totalorder %s48, 0
    %s51 = sadd.s32 %s50, 1
    %s52 = scalar_select %p49, %s50, %s51
    %p55 = pneg %p49
    %p56 = scmp.eq.s32.totalorder %s14, 1
    %p57 = por %p55, %p56
    %p58 = scmp.ne.s32.totalorder %s50, %s53
    %p59 = scmp.eq.s32.totalorder %s14, 0
    %p60 = por %p58, %p59
    %p61 = scmp.ne.s32.totalorder %s50, %s53
    %p62 = scmp.eq.s32.totalorder %s19, 1
    %p63 = por %p61, %p62
    %p64 = scmp.ne.s32.totalorder %s53, %s54
    %p65 = scmp.eq.s32.totalorder %s19, 0
    %p66 = por %p64, %p65
    %p67 = scmp.ne.s32.totalorder %s53, %s54
    %p68 = scmp.eq.s32.totalorder %s20, 1
    %p69 = por %p67, %p68
    %p71 = scmp.ne.s32.totalorder %s54, %s70
    %p72 = scmp.eq.s32.totalorder %s20, 0
    %p73 = por %p71, %p72
    %s75 = sadd.s32 %s74, 1
    %p78 = scmp.eq.s32.totalorder %s14, 1
    %p79 = scmp.ne.s32.totalorder %s74, %s76
    %p80 = scmp.eq.s32.totalorder %s14, 0
    %p81 = por %p79, %p80
    %p82 = scmp.ne.s32.totalorder %s74, %s76
    %p83 = scmp.eq.s32.totalorder %s19, 1
    %p84 = por %p82, %p83
    %p85 = scmp.ne.s32.totalorder %s76, %s77
    %p86 = scmp.eq.s32.totalorder %s19, 0
    %p87 = por %p85, %p86
    %p88 = scmp.ne.s32.totalorder %s76, %s77
    %p89 = scmp.eq.s32.totalorder %s20, 1
    %p90 = por %p88, %p89
    %p92 = scmp.ne.s32.totalorder %s77, %s91
    %p93 = scmp.eq.s32.totalorder %s20, 0
    %p94 = por %p92, %p93
    %s96 = sadd.s32 %s95, 1
    %p99 = scmp.eq.s32.totalorder %s14, 1
    %p100 = scmp.ne.s32.totalorder %s95, %s97
    %p101 = scmp.eq.s32.totalorder %s14, 0
    %p102 = por %p100, %p101
    %p103 = scmp.ne.s32.totalorder %s95, %s97
    %p104 = scmp.eq.s32.totalorder %s19, 1
    %p105 = por %p103, %p104
    %p106 = scmp.ne.s32.totalorder %s97, %s98
    %p107 = scmp.eq.s32.totalorder %s19, 0
    %p108 = por %p106, %p107
    %p109 = scmp.ne.s32.totalorder %s97, %s98
    %p110 = scmp.eq.s32.totalorder %s20, 1
    %p111 = por %p109, %p110
    %p113 = scmp.ne.s32.totalorder %s98, %s112
    %p114 = scmp.eq.s32.totalorder %s20, 0
    %p115 = por %p113, %p114
    %s117 = sadd.s32 %s116, 1
    %p120 = scmp.eq.s32.totalorder %s14, 1
    %p121 = scmp.ne.s32.totalorder %s116, %s118
    %p122 = scmp.eq.s32.totalorder %s14, 0
    %p123 = por %p121, %p122
    %p124 = scmp.ne.s32.totalorder %s116, %s118
    %p125 = scmp.eq.s32.totalorder %s19, 1
    %p126 = por %p124, %p125
    %p127 = scmp.ne.s32.totalorder %s118, %s119
    %p128 = scmp.eq.s32.totalorder %s19, 0
    %p129 = por %p127, %p128
    %p130 = scmp.ne.s32.totalorder %s118, %s119
    %p131 = scmp.eq.s32.totalorder %s20, 1
    %p132 = por %p130, %p131
    %p134 = scmp.ne.s32.totalorder %s119, %s133
    %p135 = scmp.eq.s32.totalorder %s20, 0
    %p136 = por %p134, %p135
    %s138 = sadd.s32 %s137, 1
    %p141 = scmp.eq.s32.totalorder %s14, 1
    %p142 = scmp.ne.s32.totalorder %s137, %s139
    %p143 = scmp.eq.s32.totalorder %s14, 0
    %p144 = por %p142, %p143
    %p145 = scmp.ne.s32.totalorder %s137, %s139
    %p146 = scmp.eq.s32.totalorder %s19, 1
    %p147 = por %p145, %p146
    %p148 = scmp.ne.s32.totalorder %s139, %s140
    %p149 = scmp.eq.s32.totalorder %s19, 0
    %p150 = por %p148, %p149
    %p151 = scmp.ne.s32.totalorder %s139, %s140
    %p152 = scmp.eq.s32.totalorder %s20, 1
    %p153 = por %p151, %p152
    %p155 = scmp.ne.s32.totalorder %s140, %s154
    %p156 = scmp.eq.s32.totalorder %s20, 0
    %p157 = por %p155, %p156
    %s159 = sadd.s32 %s158, 1
    %p162 = scmp.eq.s32.totalorder %s14, 1
    %p163 = scmp.ne.s32.totalorder %s158, %s160
    %p164 = scmp.eq.s32.totalorder %s14, 0
    %p165 = por %p163, %p164
    %p166 = scmp.ne.s32.totalorder %s158, %s160
    %p167 = scmp.eq.s32.totalorder %s19, 1
    %p168 = por %p166, %p167
    %p169 = scmp.ne.s32.totalorder %s160, %s161
    %p170 = scmp.eq.s32.totalorder %s19, 0
    %p171 = por %p169, %p170
    %p172 = scmp.ne.s32.totalorder %s160, %s161
    %p173 = scmp.eq.s32.totalorder %s20, 1
    %p174 = por %p172, %p173
    %p176 = scmp.ne.s32.totalorder %s161, %s175
    %p177 = scmp.eq.s32.totalorder %s20, 0
    %p178 = por %p176, %p177
    %s180 = sadd.s32 %s179, 1
    %p183 = scmp.eq.s32.totalorder %s14, 1
    %p184 = scmp.ne.s32.totalorder %s179, %s181
    %p185 = scmp.eq.s32.totalorder %s14, 0
    %p186 = por %p184, %p185
    %p187 = scmp.ne.s32.totalorder %s179, %s181
    %p188 = scmp.eq.s32.totalorder %s19, 1
    %p189 = por %p187, %p188
    %p190 = scmp.ne.s32.totalorder %s181, %s182
    %p191 = scmp.eq.s32.totalorder %s19, 0
    %p192 = por %p190, %p191
    %p193 = scmp.ne.s32.totalorder %s181, %s182
    %p194 = scmp.eq.s32.totalorder %s20, 1
    %p195 = por %p193, %p194
    %p197 = scmp.ne.s32.totalorder %s182, %s196
    %p198 = scmp.eq.s32.totalorder %s20, 0
    %p199 = por %p197, %p198
    %s200 = ssub.s32 %s14, %s21
    %p201 = scmp.eq.s32.totalorder %s200, 0
    %s203 = sadd.s32 %s202, 1
    %s204 = scalar_select %p201, %s202, %s203
    %p207 = pneg %p201
    %p208 = scmp.eq.s32.totalorder %s14, 1
    %p209 = por %p207, %p208
    %p210 = scmp.ne.s32.totalorder %s202, %s205
    %p211 = scmp.eq.s32.totalorder %s14, 0
    %p212 = por %p210, %p211
    %p213 = scmp.ne.s32.totalorder %s202, %s205
    %p214 = scmp.eq.s32.totalorder %s19, 1
    %p215 = por %p213, %p214
    %p216 = scmp.ne.s32.totalorder %s205, %s206
    %p217 = scmp.eq.s32.totalorder %s19, 0
    %p218 = por %p216, %p217
    %p219 = scmp.ne.s32.totalorder %s205, %s206
    %p220 = scmp.eq.s32.totalorder %s20, 1
    %p221 = por %p219, %p220
    %p223 = scmp.ne.s32.totalorder %s206, %s222
    %p224 = scmp.eq.s32.totalorder %s20, 0
    %p225 = por %p223, %p224
    %p226 = scmp.le.s32.totalorder 1, %s14
    %p227 = scmp.lt.s32.totalorder %s14, 3
    %p228 = pnand %p226, %p227
    %p229 = pneg %p228
    // Predicated region
    $region9: #{_lambda_.7} parent=5 // pred_check
      _
    $region10: #{_lambda_.7} parent=5 // pred_check_branch
      %231 = sbr.rel (%p228) target = $region12
    $region11: #{_lambda_.7} parent=5 // pred_region
      %s232 = ssub.s32 %s14, 1
      // Predicated region
      $region13: #{_lambda_.7} parent=11 // pred_check
        %p233 = pneg %p87
      $region14: #{_lambda_.7} parent=11 // pred_check_branch
        %235 = sbr.rel (%p233) target = $region16
      $region15: #{_lambda_.7} parent=11 // pred_region
        _
      $region16: #{_lambda_.7} parent=11 // pred_fallthru
        _
      // Predicated region
      $region17: #{_lambda_.7} parent=11 // pred_check
        %p236 = pneg %p108
      $region18: #{_lambda_.7} parent=11 // pred_check_branch
        %238 = sbr.rel (%p236) target = $region20
      $region19: #{_lambda_.7} parent=11 // pred_region
        _
      $region20: #{_lambda_.7} parent=11 // pred_fallthru
        _
      // Predicated region
      $region21: #{_lambda_.7} parent=11 // pred_check
        %p239 = pneg %p129
      $region22: #{_lambda_.7} parent=11 // pred_check_branch
        %241 = sbr.rel (%p239) target = $region24
      $region23: #{_lambda_.7} parent=11 // pred_region
        _
      $region24: #{_lambda_.7} parent=11 // pred_fallthru
        _
      // Predicated region
      $region25: #{_lambda_.7} parent=11 // pred_check
        %p242 = pneg %p150
      $region26: #{_lambda_.7} parent=11 // pred_check_branch
        %244 = sbr.rel (%p242) target = $region28
      $region27: #{_lambda_.7} parent=11 // pred_region
        _
      $region28: #{_lambda_.7} parent=11 // pred_fallthru
        _
      // Predicated region
      $region29: #{_lambda_.7} parent=11 // pred_check
        %p245 = pneg %p171
      $region30: #{_lambda_.7} parent=11 // pred_check_branch
        %247 = sbr.rel (%p245) target = $region32
      $region31: #{_lambda_.7} parent=11 // pred_region
        _
      $region32: #{_lambda_.7} parent=11 // pred_fallthru
        _
      // Predicated region
      $region33: #{_lambda_.7} parent=11 // pred_check
        %p248 = pneg %p192
      $region34: #{_lambda_.7} parent=11 // pred_check_branch
        %250 = sbr.rel (%p248) target = $region36
      $region35: #{_lambda_.7} parent=11 // pred_region
        _
      $region36: #{_lambda_.7} parent=11 // pred_fallthru
        _
    $region12: #{_lambda_.7} parent=5 // pred_fallthru
      _
    %p251 = scmp.lt.s32.totalorder %s14, 2
    // Predicated region
    $region37: #{_lambda_.7} parent=5 // pred_check
      %p252 = pneg %p251
    $region38: #{_lambda_.7} parent=5 // pred_check_branch
      %254 = sbr.rel (%p252) target = $region40
    $region39: #{_lambda_.7} parent=5 // pred_region
      // Predicated region
      $region41: #{_lambda_.7} parent=39 // pred_check
        %p255 = pneg %p34
      $region42: #{_lambda_.7} parent=39 // pred_check_branch
        %257 = sbr.rel (%p255) target = $region44
      $region43: #{_lambda_.7} parent=39 // pred_region
        %p258 = scmp.lt.s32.totalorder %s14, 1
        %s259 = scalar_select %p258, %s14, 1
        %s260 = smul.addr %s259, 8
        %s261 = scalar_lea.vmem %s0, %s260
      $region44: #{_lambda_.7} parent=39 // pred_fallthru
        _
      // Predicated region
      $region45: #{_lambda_.7} parent=39 // pred_check
        %p262 = pneg %p60
      $region46: #{_lambda_.7} parent=39 // pred_check_branch
        %264 = sbr.rel (%p262) target = $region48
      $region47: #{_lambda_.7} parent=39 // pred_region
        %p265 = scmp.lt.s32.totalorder %s14, 1
        %s266 = scalar_select %p265, %s14, 1
        %s267 = scalar_lea.vmem %s1, %s266
      $region48: #{_lambda_.7} parent=39 // pred_fallthru
        _
    $region40: #{_lambda_.7} parent=5 // pred_fallthru
      _
    %p268 = scmp.le.s32.totalorder 1, %s14
    %p269 = scmp.lt.s32.totalorder %s14, 3
    %p270 = pnand %p268, %p269
    %p271 = pneg %p270
    // Predicated region
    $region49: #{_lambda_.7} parent=5 // pred_check
      _
    $region50: #{_lambda_.7} parent=5 // pred_check_branch
      %273 = sbr.rel (%p270) target = $region52
    $region51: #{_lambda_.7} parent=5 // pred_region
      %s274 = ssub.s32 %s14, 1
      %p275 = scmp.lt.s32.totalorder %s19, 1
      %s276 = scalar_select %p275, %s19, 1
      %s277 = smul.addr %s276, 8
      %s278 = scalar_lea.vmem %s0, %s277
      %p279 = pneg %p40
      %p280 = pneg %p37
      %p281 = scmp.lt.s32.totalorder %s19, 1
      %s282 = scalar_select %p281, %s19, 1
      %s283 = scalar_lea.vmem %s1, %s282
      %p284 = pneg %p66
      %p285 = pneg %p63
      %p286 = pneg %p87
      %p287 = pneg %p84
      %p288 = pneg %p108
      %p289 = pneg %p105
      %p290 = pneg %p129
      %p291 = pneg %p126
      %p292 = pneg %p150
      %p293 = pneg %p147
      %p294 = pneg %p171
      %p295 = pneg %p168
      %p296 = pneg %p192
      %p297 = pneg %p189
      %p298 = pneg %p218
      %p299 = pneg %p215
      %p300 = scmp.lt.s32.totalorder %s19, 1
      %s301 = scalar_select %p300, %s19, 1
      %s302 = smul.addr %s301, 8
      %s303 = scalar_lea.vmem %s8, %s302
      %p304 = scmp.lt.s32.totalorder %s19, 1
      %s305 = scalar_select %p304, %s19, 1
      %s306 = smul.addr %s305, 8
      %s307 = scalar_lea.vmem %s0, %s306
      %p308 = scmp.lt.s32.totalorder %s19, 1
      %s309 = scalar_select %p308, %s19, 1
      %s310 = scalar_lea.vmem %s1, %s309
      %p311 = scmp.lt.s32.totalorder %s19, 1
      %s312 = scalar_select %p311, %s19, 1
      %s313 = smul.addr %s312, 8
      %s314 = scalar_lea.vmem %s8, %s313
      %v316 = vld [vmem:[%s307] sm:$0xff]
      %v317 = vld [vmem:[%s2] sm:$0x1]
      %v318 = vld [vmem:[%s3] sm:$0x1]
      %vm319 = vcmask 261120
      %v320 = vsel %vm319, %v316, 0.0
      %321 = vadd.xlane.f32.xlu0 %v320
      %v322 = vpop.xlane.xlu0 %321
      %v323 = vrcp.pop 32.0
      %v324 = vmul.f32 %v322, %v323
      %v325 = vsub.f32 %v316, %v324
      %v326 = vmul.f32 %v325, %v325
      %v327 = vsel %vm319, %v326, 0.0
      %328 = vadd.xlane.f32.xlu0 %v327
      %v329 = vpop.xlane.xlu0 %328
      %v330 = vmul.f32 %v329, 0.032258064
      %v331 = vadd.f32 %v330, 1e-06
      %v332 = vrsqrt.pop %v331
      %v333 = vmul.f32 %v325, %v332
      %v335 = vlaneseq
      %v336 = vshrl.u32 %v335, 7
      %v337 = vsub.s32 0, %v336
      %v338 = vrot.slane %v317, %v337
      %v340 = vmul.f32 %v338, %v333
      %v342 = vlaneseq
      %v343 = vshrl.u32 %v342, 7
      %v344 = vsub.s32 0, %v343
      %v345 = vrot.slane %v318, %v344
      %v347 = vadd.f32 %v340, %v345
      %v348 = vpack.c.bf16 %v347, %v347
      %v349 = vld [vmem:[%s4] sm:$0xf]
      %v350 = vld [vmem:[%s4 + $0x4] sm:$0xf]
      %v351 = vld [vmem:[%s4 + $0x8] sm:$0xf]
      %v352 = vld [vmem:[%s4 + $0xc] sm:$0xf]
      %v353 = vld [vmem:[%s5] sm:$0x1]
      %v355 = vlaneseq
      %v356 = vshrl.u32 %v355, 7
      %v357 = vsub.s32 0, %v356
      %v358 = vrot.slane %v353, %v357
      %v364 = vunpack.c.l.b16 %v349
      %v365 = vunpack.c.l.b16 %v350
      %v366 = vunpack.c.l.b16 %v351
      %v367 = vunpack.c.l.b16 %v352
      %v368 = vpack.c.b16 %v365, %v364
      %v369 = vpack.c.b16 %v367, %v366
      %v373 = vsel %vm319, %v348, 0
      %375 = vmatprep.subr.bf16.mxu0 0
      %376 = vmatpush1.bf16.msra.mxu0 0
      %377 = vmatprep.subr.bf16.mxu0 0
      %378 = vmatpush1.bf16.msra.mxu0 0
      %379 = vmatprep.subr.bf16.mxu0 0
      %380 = vmatpush1.bf16.msra.mxu0 0
      %381 = vmatprep.subr.bf16.mxu0 0
      %382 = vmatpush1.bf16.msra.mxu0 0
      %383 = vmatprep.subr.bf16.mxu0 0
      %384 = vmatpush1.bf16.msra.mxu0 0
      %385 = vmatprep.subr.bf16.mxu0 0
      %386 = vmatpush1.bf16.msra.mxu0 0
      %387 = vmatprep.subr.bf16.mxu0 0
      %388 = vmatpush1.bf16.msra.mxu0 %v369
      %389 = vmatprep.subr.bf16.mxu0 0
      %390 = vmatpush1.bf16.msra.mxu0 %v368
      %391 = vmatprep.subr.bf16.mxu0 0
      %392 = vmatpush2.bf16.msra.mxu0 0
      %393 = vmatprep.subr.bf16.mxu0 0
      %394 = vmatpush2.bf16.msra.mxu0 0
      %395 = vmatprep.subr.bf16.mxu0 0
      %396 = vmatpush2.bf16.msra.mxu0 0
      %397 = vmatprep.subr.bf16.mxu0 0
      %398 = vmatpush2.bf16.msra.mxu0 0
      %399 = vmatprep.subr.bf16.mxu0 0
      %400 = vmatpush2.bf16.msra.mxu0 0
      %401 = vmatprep.subr.bf16.mxu0 0
      %402 = vmatpush2.bf16.msra.mxu0 0
      %403 = vmatprep.subr.bf16.mxu0 0
      %404 = vmatpush2.bf16.msra.mxu0 0
      %405 = vmatprep.subr.bf16.mxu0 0
      %406 = vmatpush2.bf16.msra.mxu0 0
      %407 = vmatprep.mubr.bf16.mxu0 0
      %408 = vmatmul.mubr.bf16.gmra.mxu0 %v373
      %v409 = vpop.f32.mrf.mxu0
      %v410 = vadd.f32 %v358, %v409
      %v411 = vpop.f32.mrf.mxu0
      %v412 = vpop.f32.mrf.mxu0
      %v413 = vpop.f32.mrf.mxu0
      %414 = vdwg.mxu0
      %v415 = vpack.c.bf16 %v410, %v410
      %vm416 = vcmask 781312
      %417 = vst.msk [vmem:[#allocation2] sm:$0xf] %vm416, %v415
      %v418 = vld [vmem:[%s310] sm:$0x1]
      %vm419 = vcmp.eq.f32.partialorder %v418, 0.0
      %v420 = vsel %vm419, -1e+09, 0.0
      %v421 = vld [vmem:[#allocation2] sm:$0xf]
      %v423 = vunpack.c.l.b16 %v421
      %v424 = vpack.c.b16 %v423, %v423
      %425 = vrot.lane.b32.xlu0 %v424, 96
      %v426 = vpop.permute.xlu0 %425
      %vm427 = vcmask 64512
      %v429 = vsel %vm427, %v421, 0
      %v432 = vsel %vm427, %v426, 0
      %434 = vmatprep.subr.bf16.mxu0 0
      %435 = vmatpush1.bf16.xpose.msra.mxu0 0
      %436 = vmatprep.subr.bf16.mxu0 0
      %437 = vmatpush1.bf16.xpose.msra.mxu0 0
      %438 = vmatprep.subr.bf16.mxu0 0
      %439 = vmatpush1.bf16.xpose.msra.mxu0 0
      %440 = vmatprep.subr.bf16.mxu0 0
      %441 = vmatpush1.bf16.xpose.msra.mxu0 0
      %442 = vmatprep.subr.bf16.mxu0 0
      %443 = vmatpush1.bf16.xpose.msra.mxu0 0
      %444 = vmatprep.subr.bf16.mxu0 0
      %445 = vmatpush1.bf16.xpose.msra.mxu0 0
      %446 = vmatprep.subr.bf16.mxu0 0
      %447 = vmatpush1.bf16.xpose.msra.mxu0 0
      %448 = vmatprep.subr.bf16.mxu0 0
      %449 = vmatpush1.bf16.xpose.msra.mxu0 %v432
      %450 = vmatprep.subr.bf16.mxu0 0
      %451 = vmatpush2.bf16.xpose.msra.mxu0 0
      %452 = vmatprep.subr.bf16.mxu0 0
      %453 = vmatpush2.bf16.xpose.msra.mxu0 0
      %454 = vmatprep.subr.bf16.mxu0 0
      %455 = vmatpush2.bf16.xpose.msra.mxu0 0
      %456 = vmatprep.subr.bf16.mxu0 0
      %457 = vmatpush2.bf16.xpose.msra.mxu0 0
      %458 = vmatprep.subr.bf16.mxu0 0
      %459 = vmatpush2.bf16.xpose.msra.mxu0 0
      %460 = vmatprep.subr.bf16.mxu0 0
      %461 = vmatpush2.bf16.xpose.msra.mxu0 0
      %462 = vmatprep.subr.bf16.mxu0 0
      %463 = vmatpush2.bf16.xpose.msra.mxu0 0
      %464 = vmatprep.subr.bf16.mxu0 0
      %465 = vmatpush2.bf16.xpose.msra.mxu0 0
      %466 = vmatprep.mubr.bf16.mxu0 0
      %467 = vmatmul.mubr.bf16.gmra.mxu0 %v429
      %v468 = vpop.f32.mrf.mxu0
      %v469 = vadd.f32 0.0, %v468
      %v470 = vpop.f32.mrf.mxu0
      %v471 = vpop.f32.mrf.mxu0
      %v472 = vpop.f32.mrf.mxu0
      %473 = vdwg.mxu0
      %v474 = vmul.f32 %v469, 0.35355338
      %v476 = vlaneseq
      %v477 = vshrl.u32 %v476, 7
      %v478 = vsub.s32 0, %v477
      %v479 = vrot.slane %v420, %v478
      %v481 = vadd.f32 %v474, %v479
      %v482 = vsel %vm427, %v481, -inf
      %483 = vmax.xlane.f32.xlu0 %v482
      %v484 = vpop.xlane.xlu0 %483
      %v485 = vsub.f32 %v481, %v484
      %v486 = vmul.f32 %v485, 1.442695
      %v487 = vpow.pop %v486
      %v488 = vsel %vm427, %v487, 0.0
      %489 = vadd.xlane.f32.xlu0 %v488
      %v490 = vpop.xlane.xlu0 %489
      %v491 = vrcp.pop %v490
      %v492 = vmul.f32 %v487, %v491
      %v493 = vpack.c.bf16 %v492, %v492
      %494 = vrot.lane.b32.xlu0 %v424, 64
      %v495 = vpop.permute.xlu0 %494
      %v497 = vsel %vm427, %v493, 0
      %vm499 = vcmask 1043456
      %v501 = vsel %vm499, %v495, 0
      %503 = vmatprep.subr.bf16.mxu0 0
      %504 = vmatpush1.bf16.msra.mxu0 0
      %505 = vmatprep.subr.bf16.mxu0 0
      %506 = vmatpush1.bf16.msra.mxu0 0
      %507 = vmatprep.subr.bf16.mxu0 0
      %508 = vmatpush1.bf16.msra.mxu0 0
      %509 = vmatprep.subr.bf16.mxu0 0
      %510 = vmatpush1.bf16.msra.mxu0 0
      %511 = vmatprep.subr.bf16.mxu0 0
      %512 = vmatpush1.bf16.msra.mxu0 0
      %513 = vmatprep.subr.bf16.mxu0 0
      %514 = vmatpush1.bf16.msra.mxu0 0
      %515 = vmatprep.subr.bf16.mxu0 0
      %516 = vmatpush1.bf16.msra.mxu0 0
      %517 = vmatprep.subr.bf16.mxu0 0
      %518 = vmatpush1.bf16.msra.mxu0 %v501
      %519 = vmatprep.subr.bf16.mxu0 0
      %520 = vmatpush2.bf16.msra.mxu0 0
      %521 = vmatprep.subr.bf16.mxu0 0
      %522 = vmatpush2.bf16.msra.mxu0 0
      %523 = vmatprep.subr.bf16.mxu0 0
      %524 = vmatpush2.bf16.msra.mxu0 0
      %525 = vmatprep.subr.bf16.mxu0 0
      %526 = vmatpush2.bf16.msra.mxu0 0
      %527 = vmatprep.subr.bf16.mxu0 0
      %528 = vmatpush2.bf16.msra.mxu0 0
      %529 = vmatprep.subr.bf16.mxu0 0
      %530 = vmatpush2.bf16.msra.mxu0 0
      %531 = vmatprep.subr.bf16.mxu0 0
      %532 = vmatpush2.bf16.msra.mxu0 0
      %533 = vmatprep.subr.bf16.mxu0 0
      %534 = vmatpush2.bf16.msra.mxu0 0
      %535 = vmatprep.mubr.bf16.mxu0 0
      %536 = vmatmul.mubr.bf16.gmra.mxu0 %v497
      %v537 = vpop.f32.mrf.mxu0
      %v538 = vadd.f32 0.0, %v537
      %v539 = vpop.f32.mrf.mxu0
      %v540 = vpop.f32.mrf.mxu0
      %v541 = vpop.f32.mrf.mxu0
      %542 = vdwg.mxu0
      %v543 = vpack.c.bf16 %v538, %v538
      %v544 = vld [vmem:[%s6] sm:$0xf]
      %545 = vrot.lane.b32.xlu0 %v424, 120
      %v546 = vpop.permute.xlu0 %545
      %547 = vrot.lane.b32.xlu0 %v424, 88
      %v548 = vpop.permute.xlu0 %547
      %v550 = vsel %vm427, %v546, 0
      %v553 = vsel %vm427, %v548, 0
      %555 = vmatprep.subr.bf16.mxu0 0
      %556 = vmatpush1.bf16.xpose.msra.mxu0 0
      %557 = vmatprep.subr.bf16.mxu0 0
      %558 = vmatpush1.bf16.xpose.msra.mxu0 0
      %559 = vmatprep.subr.bf16.mxu0 0
      %560 = vmatpush1.bf16.xpose.msra.mxu0 0
      %561 = vmatprep.subr.bf16.mxu0 0
      %562 = vmatpush1.bf16.xpose.msra.mxu0 0
      %563 = vmatprep.subr.bf16.mxu0 0
      %564 = vmatpush1.bf16.xpose.msra.mxu0 0
      %565 = vmatprep.subr.bf16.mxu0 0
      %566 = vmatpush1.bf16.xpose.msra.mxu0 0
      %567 = vmatprep.subr.bf16.mxu0 0
      %568 = vmatpush1.bf16.xpose.msra.mxu0 0
      %569 = vmatprep.subr.bf16.mxu0 0
      %570 = vmatpush1.bf16.xpose.msra.mxu0 %v553
      %571 = vmatprep.subr.bf16.mxu0 0
      %572 = vmatpush2.bf16.xpose.msra.mxu0 0
      %573 = vmatprep.subr.bf16.mxu0 0
      %574 = vmatpush2.bf16.xpose.msra.mxu0 0
      %575 = vmatprep.subr.bf16.mxu0 0
      %576 = vmatpush2.bf16.xpose.msra.mxu0 0
      %577 = vmatprep.subr.bf16.mxu0 0
      %578 = vmatpush2.bf16.xpose.msra.mxu0 0
      %579 = vmatprep.subr.bf16.mxu0 0
      %580 = vmatpush2.bf16.xpose.msra.mxu0 0
      %581 = vmatprep.subr.bf16.mxu0 0
      %582 = vmatpush2.bf16.xpose.msra.mxu0 0
      %583 = vmatprep.subr.bf16.mxu0 0
      %584 = vmatpush2.bf16.xpose.msra.mxu0 0
      %585 = vmatprep.subr.bf16.mxu0 0
      %586 = vmatpush2.bf16.xpose.msra.mxu0 0
      %587 = vmatprep.mubr.bf16.mxu0 0
      %588 = vmatmul.mubr.bf16.gmra.mxu0 %v550
      %v589 = vpop.f32.mrf.mxu0
      %v590 = vadd.f32 0.0, %v589
      %v591 = vpop.f32.mrf.mxu0
      %v592 = vpop.f32.mrf.mxu0
      %v593 = vpop.f32.mrf.mxu0
      %594 = vdwg.mxu0
      %v595 = vmul.f32 %v590, 0.35355338
      %v596 = vadd.f32 %v595, %v479
      %v597 = vsel %vm427, %v596, -inf
      %598 = vmax.xlane.f32.xlu0 %v597
      %v599 = vpop.xlane.xlu0 %598
      %v600 = vsub.f32 %v596, %v599
      %v601 = vmul.f32 %v600, 1.442695
      %v602 = vpow.pop %v601
      %v603 = vsel %vm427, %v602, 0.0
      %604 = vadd.xlane.f32.xlu0 %v603
      %v605 = vpop.xlane.xlu0 %604
      %v606 = vrcp.pop %v605
      %v607 = vmul.f32 %v602, %v606
      %v608 = vpack.c.bf16 %v607, %v607
      %609 = vrot.lane.b32.xlu0 %v424, 56
      %v610 = vpop.permute.xlu0 %609
      %v612 = vsel %vm427, %v608, 0
      %v615 = vsel %vm499, %v610, 0
      %617 = vmatprep.subr.bf16.mxu0 0
      %618 = vmatpush1.bf16.msra.mxu0 0
      %619 = vmatprep.subr.bf16.mxu0 0
      %620 = vmatpush1.bf16.msra.mxu0 0
      %621 = vmatprep.subr.bf16.mxu0 0
      %622 = vmatpush1.bf16.msra.mxu0 0
      %623 = vmatprep.subr.bf16.mxu0 0
      %624 = vmatpush1.bf16.msra.mxu0 0
      %625 = vmatprep.subr.bf16.mxu0 0
      %626 = vmatpush1.bf16.msra.mxu0 0
      %627 = vmatprep.subr.bf16.mxu0 0
      %628 = vmatpush1.bf16.msra.mxu0 0
      %629 = vmatprep.subr.bf16.mxu0 0
      %630 = vmatpush1.bf16.msra.mxu0 0
      %631 = vmatprep.subr.bf16.mxu0 0
      %632 = vmatpush1.bf16.msra.mxu0 %v615
      %633 = vmatprep.subr.bf16.mxu0 0
      %634 = vmatpush2.bf16.msra.mxu0 0
      %635 = vmatprep.subr.bf16.mxu0 0
      %636 = vmatpush2.bf16.msra.mxu0 0
      %637 = vmatprep.subr.bf16.mxu0 0
      %638 = vmatpush2.bf16.msra.mxu0 0
      %639 = vmatprep.subr.bf16.mxu0 0
      %640 = vmatpush2.bf16.msra.mxu0 0
      %641 = vmatprep.subr.bf16.mxu0 0
      %642 = vmatpush2.bf16.msra.mxu0 0
      %643 = vmatprep.subr.bf16.mxu0 0
      %644 = vmatpush2.bf16.msra.mxu0 0
      %645 = vmatprep.subr.bf16.mxu0 0
      %646 = vmatpush2.bf16.msra.mxu0 0
      %647 = vmatprep.subr.bf16.mxu0 0
      %648 = vmatpush2.bf16.msra.mxu0 0
      %649 = vmatprep.mubr.bf16.mxu0 0
      %650 = vmatmul.mubr.bf16.gmra.mxu0 %v612
      %v651 = vpop.f32.mrf.mxu0
      %v652 = vadd.f32 0.0, %v651
      %v653 = vpop.f32.mrf.mxu0
      %v654 = vpop.f32.mrf.mxu0
      %v655 = vpop.f32.mrf.mxu0
      %656 = vdwg.mxu0
      %v657 = vpack.c.bf16 %v652, %v652
      %v658 = vld [vmem:[%s6 + $0x4] sm:$0xf]
      %v660 = vsel %vm427, %v657, 0
      %v663 = vsel %vm499, %v658, 0
      %665 = vmatprep.subr.bf16.mxu0 0
      %666 = vmatpush1.bf16.msra.mxu0 0
      %667 = vmatprep.subr.bf16.mxu0 0
      %668 = vmatpush1.bf16.msra.mxu0 0
      %669 = vmatprep.subr.bf16.mxu0 0
      %670 = vmatpush1.bf16.msra.mxu0 0
      %671 = vmatprep.subr.bf16.mxu0 0
      %672 = vmatpush1.bf16.msra.mxu0 0
      %673 = vmatprep.subr.bf16.mxu0 0
      %674 = vmatpush1.bf16.msra.mxu0 0
      %675 = vmatprep.subr.bf16.mxu0 0
      %676 = vmatpush1.bf16.msra.mxu0 0
      %677 = vmatprep.subr.bf16.mxu0 0
      %678 = vmatpush1.bf16.msra.mxu0 0
      %679 = vmatprep.subr.bf16.mxu0 0
      %680 = vmatpush1.bf16.msra.mxu0 %v663
      %681 = vmatprep.subr.bf16.mxu0 0
      %682 = vmatpush2.bf16.msra.mxu0 0
      %683 = vmatprep.subr.bf16.mxu0 0
      %684 = vmatpush2.bf16.msra.mxu0 0
      %685 = vmatprep.subr.bf16.mxu0 0
      %686 = vmatpush2.bf16.msra.mxu0 0
      %687 = vmatprep.subr.bf16.mxu0 0
      %688 = vmatpush2.bf16.msra.mxu0 0
      %689 = vmatprep.subr.bf16.mxu0 0
      %690 = vmatpush2.bf16.msra.mxu0 0
      %691 = vmatprep.subr.bf16.mxu0 0
      %692 = vmatpush2.bf16.msra.mxu0 0
      %693 = vmatprep.subr.bf16.mxu0 0
      %694 = vmatpush2.bf16.msra.mxu0 0
      %695 = vmatprep.subr.bf16.mxu0 0
      %696 = vmatpush2.bf16.msra.mxu0 0
      %697 = vmatprep.mubr.bf16.mxu0 0
      %698 = vmatmul.mubr.bf16.gmra.mxu0 %v660
      %v699 = vpop.f32.mrf.mxu0
      %v700 = vadd.f32 0.0, %v699
      %v701 = vpop.f32.mrf.mxu0
      %v702 = vpop.f32.mrf.mxu0
      %v703 = vpop.f32.mrf.mxu0
      %704 = vdwg.mxu0
      %v706 = vsel %vm427, %v543, 0
      %v709 = vsel %vm499, %v544, 0
      %711 = vmatprep.subr.bf16.mxu0 0
      %712 = vmatpush1.bf16.msra.mxu0 0
      %713 = vmatprep.subr.bf16.mxu0 0
      %714 = vmatpush1.bf16.msra.mxu0 0
      %715 = vmatprep.subr.bf16.mxu0 0
      %716 = vmatpush1.bf16.msra.mxu0 0
      %717 = vmatprep.subr.bf16.mxu0 0
      %718 = vmatpush1.bf16.msra.mxu0 0
      %719 = vmatprep.subr.bf16.mxu0 0
      %720 = vmatpush1.bf16.msra.mxu0 0
      %721 = vmatprep.subr.bf16.mxu0 0
      %722 = vmatpush1.bf16.msra.mxu0 0
      %723 = vmatprep.subr.bf16.mxu0 0
      %724 = vmatpush1.bf16.msra.mxu0 0
      %725 = vmatprep.subr.bf16.mxu0 0
      %726 = vmatpush1.bf16.msra.mxu0 %v709
      %727 = vmatprep.subr.bf16.mxu0 0
      %728 = vmatpush2.bf16.msra.mxu0 0
      %729 = vmatprep.subr.bf16.mxu0 0
      %730 = vmatpush2.bf16.msra.mxu0 0
      %731 = vmatprep.subr.bf16.mxu0 0
      %732 = vmatpush2.bf16.msra.mxu0 0
      %733 = vmatprep.subr.bf16.mxu0 0
      %734 = vmatpush2.bf16.msra.mxu0 0
      %735 = vmatprep.subr.bf16.mxu0 0
      %736 = vmatpush2.bf16.msra.mxu0 0
      %737 = vmatprep.subr.bf16.mxu0 0
      %738 = vmatpush2.bf16.msra.mxu0 0
      %739 = vmatprep.subr.bf16.mxu0 0
      %740 = vmatpush2.bf16.msra.mxu0 0
      %741 = vmatprep.subr.bf16.mxu0 0
      %742 = vmatpush2.bf16.msra.mxu0 0
      %743 = vmatprep.mubr.bf16.mxu0 0
      %744 = vmatmul.mubr.bf16.gmra.mxu0 %v706
      %v745 = vpop.f32.mrf.mxu0
      %v746 = vadd.f32 %v700, %v745
      %v747 = vpop.f32.mrf.mxu0
      %v748 = vpop.f32.mrf.mxu0
      %v749 = vpop.f32.mrf.mxu0
      %750 = vdwg.mxu0
      %751 = vrot.lane.b32.xlu0 %v424, 112
      %v752 = vpop.permute.xlu0 %751
      %753 = vrot.lane.b32.xlu0 %v424, 80
      %v754 = vpop.permute.xlu0 %753
      %v756 = vsel %vm427, %v752, 0
      %v759 = vsel %vm427, %v754, 0
      %761 = vmatprep.subr.bf16.mxu0 0
      %762 = vmatpush1.bf16.xpose.msra.mxu0 0
      %763 = vmatprep.subr.bf16.mxu0 0
      %764 = vmatpush1.bf16.xpose.msra.mxu0 0
      %765 = vmatprep.subr.bf16.mxu0 0
      %766 = vmatpush1.bf16.xpose.msra.mxu0 0
      %767 = vmatprep.subr.bf16.mxu0 0
      %768 = vmatpush1.bf16.xpose.msra.mxu0 0
      %769 = vmatprep.subr.bf16.mxu0 0
      %770 = vmatpush1.bf16.xpose.msra.mxu0 0
      %771 = vmatprep.subr.bf16.mxu0 0
      %772 = vmatpush1.bf16.xpose.msra.mxu0 0
      %773 = vmatprep.subr.bf16.mxu0 0
      %774 = vmatpush1.bf16.xpose.msra.mxu0 0
      %775 = vmatprep.subr.bf16.mxu0 0
      %776 = vmatpush1.bf16.xpose.msra.mxu0 %v759
      %777 = vmatprep.subr.bf16.mxu0 0
      %778 = vmatpush2.bf16.xpose.msra.mxu0 0
      %779 = vmatprep.subr.bf16.mxu0 0
      %780 = vmatpush2.bf16.xpose.msra.mxu0 0
      %781 = vmatprep.subr.bf16.mxu0 0
      %782 = vmatpush2.bf16.xpose.msra.mxu0 0
      %783 = vmatprep.subr.bf16.mxu0 0
      %784 = vmatpush2.bf16.xpose.msra.mxu0 0
      %785 = vmatprep.subr.bf16.mxu0 0
      %786 = vmatpush2.bf16.xpose.msra.mxu0 0
      %787 = vmatprep.subr.bf16.mxu0 0
      %788 = vmatpush2.bf16.xpose.msra.mxu0 0
      %789 = vmatprep.subr.bf16.mxu0 0
      %790 = vmatpush2.bf16.xpose.msra.mxu0 0
      %791 = vmatprep.subr.bf16.mxu0 0
      %792 = vmatpush2.bf16.xpose.msra.mxu0 0
      %793 = vmatprep.mubr.bf16.mxu0 0
      %794 = vmatmul.mubr.bf16.gmra.mxu0 %v756
      %v795 = vpop.f32.mrf.mxu0
      %v796 = vadd.f32 0.0, %v795
      %v797 = vpop.f32.mrf.mxu0
      %v798 = vpop.f32.mrf.mxu0
      %v799 = vpop.f32.mrf.mxu0
      %800 = vdwg.mxu0
      %v801 = vmul.f32 %v796, 0.35355338
      %v802 = vadd.f32 %v801, %v479
      %v803 = vsel %vm427, %v802, -inf
      %804 = vmax.xlane.f32.xlu0 %v803
      %v805 = vpop.xlane.xlu0 %804
      %v806 = vsub.f32 %v802, %v805
      %v807 = vmul.f32 %v806, 1.442695
      %v808 = vpow.pop %v807
      %v809 = vsel %vm427, %v808, 0.0
      %810 = vadd.xlane.f32.xlu0 %v809
      %v811 = vpop.xlane.xlu0 %810
      %v812 = vrcp.pop %v811
      %v813 = vmul.f32 %v808, %v812
      %v814 = vpack.c.bf16 %v813, %v813
      %815 = vrot.lane.b32.xlu0 %v424, 48
      %v816 = vpop.permute.xlu0 %815
      %v818 = vsel %vm427, %v814, 0
      %v821 = vsel %vm499, %v816, 0
      %823 = vmatprep.subr.bf16.mxu0 0
      %824 = vmatpush1.bf16.msra.mxu0 0
      %825 = vmatprep.subr.bf16.mxu0 0
      %826 = vmatpush1.bf16.msra.mxu0 0
      %827 = vmatprep.subr.bf16.mxu0 0
      %828 = vmatpush1.bf16.msra.mxu0 0
      %829 = vmatprep.subr.bf16.mxu0 0
      %830 = vmatpush1.bf16.msra.mxu0 0
      %831 = vmatprep.subr.bf16.mxu0 0
      %832 = vmatpush1.bf16.msra.mxu0 0
      %833 = vmatprep.subr.bf16.mxu0 0
      %834 = vmatpush1.bf16.msra.mxu0 0
      %835 = vmatprep.subr.bf16.mxu0 0
      %836 = vmatpush1.bf16.msra.mxu0 0
      %837 = vmatprep.subr.bf16.mxu0 0
      %838 = vmatpush1.bf16.msra.mxu0 %v821
      %839 = vmatprep.subr.bf16.mxu0 0
      %840 = vmatpush2.bf16.msra.mxu0 0
      %841 = vmatprep.subr.bf16.mxu0 0
      %842 = vmatpush2.bf16.msra.mxu0 0
      %843 = vmatprep.subr.bf16.mxu0 0
      %844 = vmatpush2.bf16.msra.mxu0 0
      %845 = vmatprep.subr.bf16.mxu0 0
      %846 = vmatpush2.bf16.msra.mxu0 0
      %847 = vmatprep.subr.bf16.mxu0 0
      %848 = vmatpush2.bf16.msra.mxu0 0
      %849 = vmatprep.subr.bf16.mxu0 0
      %850 = vmatpush2.bf16.msra.mxu0 0
      %851 = vmatprep.subr.bf16.mxu0 0
      %852 = vmatpush2.bf16.msra.mxu0 0
      %853 = vmatprep.subr.bf16.mxu0 0
      %854 = vmatpush2.bf16.msra.mxu0 0
      %855 = vmatprep.mubr.bf16.mxu0 0
      %856 = vmatmul.mubr.bf16.gmra.mxu0 %v818
      %v857 = vpop.f32.mrf.mxu0
      %v858 = vadd.f32 0.0, %v857
      %v859 = vpop.f32.mrf.mxu0
      %v860 = vpop.f32.mrf.mxu0
      %v861 = vpop.f32.mrf.mxu0
      %862 = vdwg.mxu0
      %v863 = vpack.c.bf16 %v858, %v858
      %v864 = vld [vmem:[%s6 + $0x8] sm:$0xf]
      %v866 = vsel %vm427, %v863, 0
      %v869 = vsel %vm499, %v864, 0
      %871 = vmatprep.subr.bf16.mxu0 0
      %872 = vmatpush1.bf16.msra.mxu0 0
      %873 = vmatprep.subr.bf16.mxu0 0
      %874 = vmatpush1.bf16.msra.mxu0 0
      %875 = vmatprep.subr.bf16.mxu0 0
      %876 = vmatpush1.bf16.msra.mxu0 0
      %877 = vmatprep.subr.bf16.mxu0 0
      %878 = vmatpush1.bf16.msra.mxu0 0
      %879 = vmatprep.subr.bf16.mxu0 0
      %880 = vmatpush1.bf16.msra.mxu0 0
      %881 = vmatprep.subr.bf16.mxu0 0
      %882 = vmatpush1.bf16.msra.mxu0 0
      %883 = vmatprep.subr.bf16.mxu0 0
      %884 = vmatpush1.bf16.msra.mxu0 0
      %885 = vmatprep.subr.bf16.mxu0 0
      %886 = vmatpush1.bf16.msra.mxu0 %v869
      %887 = vmatprep.subr.bf16.mxu0 0
      %888 = vmatpush2.bf16.msra.mxu0 0
      %889 = vmatprep.subr.bf16.mxu0 0
      %890 = vmatpush2.bf16.msra.mxu0 0
      %891 = vmatprep.subr.bf16.mxu0 0
      %892 = vmatpush2.bf16.msra.mxu0 0
      %893 = vmatprep.subr.bf16.mxu0 0
      %894 = vmatpush2.bf16.msra.mxu0 0
      %895 = vmatprep.subr.bf16.mxu0 0
      %896 = vmatpush2.bf16.msra.mxu0 0
      %897 = vmatprep.subr.bf16.mxu0 0
      %898 = vmatpush2.bf16.msra.mxu0 0
      %899 = vmatprep.subr.bf16.mxu0 0
      %900 = vmatpush2.bf16.msra.mxu0 0
      %901 = vmatprep.subr.bf16.mxu0 0
      %902 = vmatpush2.bf16.msra.mxu0 0
      %903 = vmatprep.mubr.bf16.mxu0 0
      %904 = vmatmul.mubr.bf16.gmra.mxu0 %v866
      %v905 = vpop.f32.mrf.mxu0
      %v906 = vadd.f32 0.0, %v905
      %v907 = vpop.f32.mrf.mxu0
      %v908 = vpop.f32.mrf.mxu0
      %v909 = vpop.f32.mrf.mxu0
      %910 = vdwg.mxu0
      %v911 = vadd.f32 %v746, %v906
      %912 = vrot.lane.b32.xlu0 %v424, 104
      %v913 = vpop.permute.xlu0 %912
      %914 = vrot.lane.b32.xlu0 %v424, 72
      %v915 = vpop.permute.xlu0 %914
      %v917 = vsel %vm427, %v913, 0
      %v920 = vsel %vm427, %v915, 0
      %922 = vmatprep.subr.bf16.mxu0 0
      %923 = vmatpush1.bf16.xpose.msra.mxu0 0
      %924 = vmatprep.subr.bf16.mxu0 0
      %925 = vmatpush1.bf16.xpose.msra.mxu0 0
      %926 = vmatprep.subr.bf16.mxu0 0
      %927 = vmatpush1.bf16.xpose.msra.mxu0 0
      %928 = vmatprep.subr.bf16.mxu0 0
      %929 = vmatpush1.bf16.xpose.msra.mxu0 0
      %930 = vmatprep.subr.bf16.mxu0 0
      %931 = vmatpush1.bf16.xpose.msra.mxu0 0
      %932 = vmatprep.subr.bf16.mxu0 0
      %933 = vmatpush1.bf16.xpose.msra.mxu0 0
      %934 = vmatprep.subr.bf16.mxu0 0
      %935 = vmatpush1.bf16.xpose.msra.mxu0 0
      %936 = vmatprep.subr.bf16.mxu0 0
      %937 = vmatpush1.bf16.xpose.msra.mxu0 %v920
      %938 = vmatprep.subr.bf16.mxu0 0
      %939 = vmatpush2.bf16.xpose.msra.mxu0 0
      %940 = vmatprep.subr.bf16.mxu0 0
      %941 = vmatpush2.bf16.xpose.msra.mxu0 0
      %942 = vmatprep.subr.bf16.mxu0 0
      %943 = vmatpush2.bf16.xpose.msra.mxu0 0
      %944 = vmatprep.subr.bf16.mxu0 0
      %945 = vmatpush2.bf16.xpose.msra.mxu0 0
      %946 = vmatprep.subr.bf16.mxu0 0
      %947 = vmatpush2.bf16.xpose.msra.mxu0 0
      %948 = vmatprep.subr.bf16.mxu0 0
      %949 = vmatpush2.bf16.xpose.msra.mxu0 0
      %950 = vmatprep.subr.bf16.mxu0 0
      %951 = vmatpush2.bf16.xpose.msra.mxu0 0
      %952 = vmatprep.subr.bf16.mxu0 0
      %953 = vmatpush2.bf16.xpose.msra.mxu0 0
      %954 = vmatprep.mubr.bf16.mxu0 0
      %955 = vmatmul.mubr.bf16.gmra.mxu0 %v917
      %v956 = vpop.f32.mrf.mxu0
      %v957 = vadd.f32 0.0, %v956
      %v958 = vpop.f32.mrf.mxu0
      %v959 = vpop.f32.mrf.mxu0
      %v960 = vpop.f32.mrf.mxu0
      %961 = vdwg.mxu0
      %v962 = vmul.f32 %v957, 0.35355338
      %v963 = vadd.f32 %v962, %v479
      %v964 = vsel %vm427, %v963, -inf
      %965 = vmax.xlane.f32.xlu0 %v964
      %v966 = vpop.xlane.xlu0 %965
      %v967 = vsub.f32 %v963, %v966
      %v968 = vmul.f32 %v967, 1.442695
      %v969 = vpow.pop %v968
      %v970 = vsel %vm427, %v969, 0.0
      %971 = vadd.xlane.f32.xlu0 %v970
      %v972 = vpop.xlane.xlu0 %971
      %v973 = vrcp.pop %v972
      %v974 = vmul.f32 %v969, %v973
      %v975 = vpack.c.bf16 %v974, %v974
      %976 = vrot.lane.b32.xlu0 %v424, 40
      %v977 = vpop.permute.xlu0 %976
      %v979 = vsel %vm427, %v975, 0
      %v982 = vsel %vm499, %v977, 0
      %984 = vmatprep.subr.bf16.mxu0 0
      %985 = vmatpush1.bf16.msra.mxu0 0
      %986 = vmatprep.subr.bf16.mxu0 0
      %987 = vmatpush1.bf16.msra.mxu0 0
      %988 = vmatprep.subr.bf16.mxu0 0
      %989 = vmatpush1.bf16.msra.mxu0 0
      %990 = vmatprep.subr.bf16.mxu0 0
      %991 = vmatpush1.bf16.msra.mxu0 0
      %992 = vmatprep.subr.bf16.mxu0 0
      %993 = vmatpush1.bf16.msra.mxu0 0
      %994 = vmatprep.subr.bf16.mxu0 0
      %995 = vmatpush1.bf16.msra.mxu0 0
      %996 = vmatprep.subr.bf16.mxu0 0
      %997 = vmatpush1.bf16.msra.mxu0 0
      %998 = vmatprep.subr.bf16.mxu0 0
      %999 = vmatpush1.bf16.msra.mxu0 %v982
      %1000 = vmatprep.subr.bf16.mxu0 0
      %1001 = vmatpush2.bf16.msra.mxu0 0
      %1002 = vmatprep.subr.bf16.mxu0 0
      %1003 = vmatpush2.bf16.msra.mxu0 0
      %1004 = vmatprep.subr.bf16.mxu0 0
      %1005 = vmatpush2.bf16.msra.mxu0 0
      %1006 = vmatprep.subr.bf16.mxu0 0
      %1007 = vmatpush2.bf16.msra.mxu0 0
      %1008 = vmatprep.subr.bf16.mxu0 0
      %1009 = vmatpush2.bf16.msra.mxu0 0
      %1010 = vmatprep.subr.bf16.mxu0 0
      %1011 = vmatpush2.bf16.msra.mxu0 0
      %1012 = vmatprep.subr.bf16.mxu0 0
      %1013 = vmatpush2.bf16.msra.mxu0 0
      %1014 = vmatprep.subr.bf16.mxu0 0
      %1015 = vmatpush2.bf16.msra.mxu0 0
      %1016 = vmatprep.mubr.bf16.mxu0 0
      %1017 = vmatmul.mubr.bf16.gmra.mxu0 %v979
      %v1018 = vpop.f32.mrf.mxu0
      %v1019 = vadd.f32 0.0, %v1018
      %v1020 = vpop.f32.mrf.mxu0
      %v1021 = vpop.f32.mrf.mxu0
      %v1022 = vpop.f32.mrf.mxu0
      %1023 = vdwg.mxu0
      %v1024 = vpack.c.bf16 %v1019, %v1019
      %v1025 = vld [vmem:[%s6 + $0xc] sm:$0xf]
      %v1027 = vsel %vm427, %v1024, 0
      %v1030 = vsel %vm499, %v1025, 0
      %1032 = vmatprep.subr.bf16.mxu0 0
      %1033 = vmatpush1.bf16.msra.mxu0 0
      %1034 = vmatprep.subr.bf16.mxu0 0
      %1035 = vmatpush1.bf16.msra.mxu0 0
      %1036 = vmatprep.subr.bf16.mxu0 0
      %1037 = vmatpush1.bf16.msra.mxu0 0
      %1038 = vmatprep.subr.bf16.mxu0 0
      %1039 = vmatpush1.bf16.msra.mxu0 0
      %1040 = vmatprep.subr.bf16.mxu0 0
      %1041 = vmatpush1.bf16.msra.mxu0 0
      %1042 = vmatprep.subr.bf16.mxu0 0
      %1043 = vmatpush1.bf16.msra.mxu0 0
      %1044 = vmatprep.subr.bf16.mxu0 0
      %1045 = vmatpush1.bf16.msra.mxu0 0
      %1046 = vmatprep.subr.bf16.mxu0 0
      %1047 = vmatpush1.bf16.msra.mxu0 %v1030
      %1048 = vmatprep.subr.bf16.mxu0 0
      %1049 = vmatpush2.bf16.msra.mxu0 0
      %1050 = vmatprep.subr.bf16.mxu0 0
      %1051 = vmatpush2.bf16.msra.mxu0 0
      %1052 = vmatprep.subr.bf16.mxu0 0
      %1053 = vmatpush2.bf16.msra.mxu0 0
      %1054 = vmatprep.subr.bf16.mxu0 0
      %1055 = vmatpush2.bf16.msra.mxu0 0
      %1056 = vmatprep.subr.bf16.mxu0 0
      %1057 = vmatpush2.bf16.msra.mxu0 0
      %1058 = vmatprep.subr.bf16.mxu0 0
      %1059 = vmatpush2.bf16.msra.mxu0 0
      %1060 = vmatprep.subr.bf16.mxu0 0
      %1061 = vmatpush2.bf16.msra.mxu0 0
      %1062 = vmatprep.subr.bf16.mxu0 0
      %1063 = vmatpush2.bf16.msra.mxu0 0
      %1064 = vmatprep.mubr.bf16.mxu0 0
      %1065 = vmatmul.mubr.bf16.gmra.mxu0 %v1027
      %v1066 = vpop.f32.mrf.mxu0
      %v1067 = vadd.f32 0.0, %v1066
      %v1068 = vpop.f32.mrf.mxu0
      %v1069 = vpop.f32.mrf.mxu0
      %v1070 = vpop.f32.mrf.mxu0
      %1071 = vdwg.mxu0
      %v1072 = vadd.f32 %v911, %v1067
      %v1073 = vadd.f32 %v316, %v1072
      %v1074 = vld [vmem:[%s7] sm:$0x1]
      %v1076 = vlaneseq
      %v1077 = vshrl.u32 %v1076, 7
      %v1078 = vsub.s32 0, %v1077
      %v1079 = vrot.slane %v1074, %v1078
      %v1081 = vadd.f32 %v1073, %v1079
      %1082 = vst.msk [vmem:[%s314] sm:$0xff] %vm319, %v1081
      %p1083 = scmp.lt.s32.totalorder %s19, 1
      %s1084 = scalar_select %p1083, %s19, 1
      %s1085 = smul.addr %s1084, 8
      %s1086 = scalar_lea.vmem %s8, %s1085
      // Predicated region
      $region53: #{_lambda_.7} parent=51 // pred_check
        %p1087 = pneg %p215
      $region54: #{_lambda_.7} parent=51 // pred_check_branch
        %1089 = sbr.rel (%p1087) target = $region56
      $region55: #{_lambda_.7} parent=51 // pred_region
        _
      $region56: #{_lambda_.7} parent=51 // pred_fallthru
        _
    $region52: #{_lambda_.7} parent=5 // pred_fallthru
      _
    %p1090 = scmp.le.s32.totalorder 2, %s14
    // Predicated region
    $region57: #{_lambda_.7} parent=5 // pred_check
      %p1091 = pneg %p1090
    $region58: #{_lambda_.7} parent=5 // pred_check_branch
      %1093 = sbr.rel (%p1091) target = $region60
    $region59: #{_lambda_.7} parent=5 // pred_region
      %s1094 = ssub.s32 %s14, 2
      // Predicated region
      $region61: #{_lambda_.7} parent=59 // pred_check
        %p1095 = pneg %p221
      $region62: #{_lambda_.7} parent=59 // pred_check_branch
        %1097 = sbr.rel (%p1095) target = $region64
      $region63: #{_lambda_.7} parent=59 // pred_region
        %p1098 = scmp.lt.s32.totalorder %s20, 1
        %s1099 = scalar_select %p1098, %s20, 1
        %s1100 = smul.addr %s1099, 8
        %s1101 = scalar_lea.vmem %s8, %s1100
      $region64: #{_lambda_.7} parent=59 // pred_fallthru
        _
    $region60: #{_lambda_.7} parent=5 // pred_fallthru
      _
  $region6: #{_lambda_.7} parent=0 // loop_footer
    %s18 = sadd.s32 1, %s14
  $region7: #{_lambda_.7} parent=0 // loop_footer_branch
    %13 = sbr.rel target = $region3
  $region8: #{_lambda_.7} parent=0 // loop_exit
    _

// kernel: _lambda_.5
$region0: #{_lambda_.5}
  #allocation0 [shape = 'u32[]', space=smem, size = 0x4, offset = 0x4, fixed_abs, tag = 'smem constant byte address 0x4 - core index']
  #allocation1 [shape = 'u32[144,128]{1,0:T(1,128)}', space=vmem, size = 0x12000, scoped, tag = 'internal scratch']
  #allocation2 [shape = 'bf16[8,96]{1,0:T(8,128)(2,1)}', space=vmem, size = 0x800, scoped, tag = 'scratch operand']
  %s0 = inlined_call_operand.vmem [shape: f32[2,8,32], index: 0, kind: input, shape index: {}]
  %s1 = inlined_call_operand.vmem [shape: f32[2,1,8], index: 1, kind: input, shape index: {}]
  %s2 = inlined_call_operand.vmem [shape: f32[1,32], index: 2, kind: input, shape index: {}]
  %s3 = inlined_call_operand.hbm [shape: f32[1,32], index: 3, kind: input, shape index: {}]
  %s4 = inlined_call_operand.vmem [shape: bf16[32,96], index: 4, kind: input, shape index: {}]
  %s5 = inlined_call_operand.hbm [shape: f32[1,96], index: 5, kind: input, shape index: {}]
  %s6 = inlined_call_operand.vmem [shape: bf16[32,32], index: 6, kind: input, shape index: {}]
  %s7 = inlined_call_operand.hbm [shape: f32[1,32], index: 7, kind: input, shape index: {}]
  %s8 = inlined_call_operand.vmem [shape: f32[2,8,32], index: 8, kind: output, shape index: {}]
  %s9 = sld [smem:[#allocation0]]
  $region77: #{_lambda_.5} parent=0
    _
  %s11 = ssub.s32 1, %s9
  %s12 = scalar_select 0, %s11, %s9
  $region1: #{_lambda_.5} parent=0
    #allocation3 [shape = 'u8[512]{0}', space=vmem, size = 0x400, scoped, tag = 'input window, operand 3, single buffered']
    #allocation4 [shape = 's32[2]{0}', space=sflag, size = 0x8, scoped, tag = 'scoped memory for _lambda_.5']
    #allocation5 [shape = 'u8[512]{0}', space=vmem, size = 0x400, scoped, tag = 'input window, operand 5, single buffered']
    #allocation6 [shape = 's32[1]{0}', space=sflag, size = 0x4, scoped, tag = 'scoped memory for _lambda_.5']
    #allocation7 [shape = 'u8[512]{0}', space=vmem, size = 0x400, scoped, tag = 'input window, operand 7, single buffered']
    %13 = vsyncpa [#allocation4], 0
    %14 = vsyncpa [#allocation6], 0
    loop: start=0, step=1, limit=4
    $region2: #{_lambda_.5} parent=1 // loop_pre_header
      _
    $region3: #{_lambda_.5} parent=1 // loop_header
      %s16 = sphi 0, %s20
      %p17 = scmp.ge.s32.totalorder %s16, 4
      %s26 = sphi 0, %s28
      %s29 = sphi 0, %s26
      %s30 = sphi 0, %s29
      %s46 = sphi 0, %s30
      %s52 = sphi 0, %s54
      %s55 = sphi 0, %s52
      %s56 = sphi 0, %s55
      %s72 = sphi 0, %s56
      %s76 = sphi 0, %s76
      %s78 = sphi 0, %s76
      %s79 = sphi 0, %s78
      %s93 = sphi 0, %s79
      %s97 = sphi 0, %s97
      %s99 = sphi 0, %s97
      %s100 = sphi 0, %s99
      %s114 = sphi 0, %s100
      %s118 = sphi 0, %s118
      %s120 = sphi 0, %s118
      %s121 = sphi 0, %s120
      %s135 = sphi 0, %s121
      %s139 = sphi 0, %s139
      %s141 = sphi 0, %s139
      %s142 = sphi 0, %s141
      %s156 = sphi 0, %s142
      %s160 = sphi 0, %s160
      %s162 = sphi 0, %s160
      %s163 = sphi 0, %s162
      %s177 = sphi 0, %s163
      %s181 = sphi 0, %s181
      %s183 = sphi 0, %s181
      %s184 = sphi 0, %s183
      %s198 = sphi 0, %s184
      %s204 = sphi 0, %s206
      %s207 = sphi 0, %s204
      %s208 = sphi 0, %s207
      %s224 = sphi 0, %s208
    $region4: #{_lambda_.5} parent=1 // loop_header_branch
      %19 = sbr.rel (%p17) target = $region8
    $region5: #{_lambda_.5} parent=1 // loop_body
      %s21 = ssub.s32 %s16, 1
      %s22 = ssub.s32 %s16, 2
      %s23 = sadd.s32 %s16, 1
      %s24 = ssub.s32 %s16, %s23
      %p25 = scmp.eq.s32.totalorder %s24, 0
      %s27 = sadd.s32 %s26, 1
      %s28 = scalar_select %p25, %s26, %s27
      %p31 = pneg %p25
      %p32 = scmp.eq.s32.totalorder %s16, 1
      %p33 = por %p31, %p32
      %p34 = scmp.ne.s32.totalorder %s26, %s29
      %p35 = scmp.eq.s32.totalorder %s16, 0
      %p36 = por %p34, %p35
      %p37 = scmp.ne.s32.totalorder %s26, %s29
      %p38 = scmp.eq.s32.totalorder %s21, 1
      %p39 = por %p37, %p38
      %p40 = scmp.ne.s32.totalorder %s29, %s30
      %p41 = scmp.eq.s32.totalorder %s21, 0
      %p42 = por %p40, %p41
      %p43 = scmp.ne.s32.totalorder %s29, %s30
      %p44 = scmp.eq.s32.totalorder %s22, 1
      %p45 = por %p43, %p44
      %p47 = scmp.ne.s32.totalorder %s30, %s46
      %p48 = scmp.eq.s32.totalorder %s22, 0
      %p49 = por %p47, %p48
      %s50 = ssub.s32 %s16, %s23
      %p51 = scmp.eq.s32.totalorder %s50, 0
      %s53 = sadd.s32 %s52, 1
      %s54 = scalar_select %p51, %s52, %s53
      %p57 = pneg %p51
      %p58 = scmp.eq.s32.totalorder %s16, 1
      %p59 = por %p57, %p58
      %p60 = scmp.ne.s32.totalorder %s52, %s55
      %p61 = scmp.eq.s32.totalorder %s16, 0
      %p62 = por %p60, %p61
      %p63 = scmp.ne.s32.totalorder %s52, %s55
      %p64 = scmp.eq.s32.totalorder %s21, 1
      %p65 = por %p63, %p64
      %p66 = scmp.ne.s32.totalorder %s55, %s56
      %p67 = scmp.eq.s32.totalorder %s21, 0
      %p68 = por %p66, %p67
      %p69 = scmp.ne.s32.totalorder %s55, %s56
      %p70 = scmp.eq.s32.totalorder %s22, 1
      %p71 = por %p69, %p70
      %p73 = scmp.ne.s32.totalorder %s56, %s72
      %p74 = scmp.eq.s32.totalorder %s22, 0
      %p75 = por %p73, %p74
      %s77 = sadd.s32 %s76, 1
      %p80 = scmp.eq.s32.totalorder %s16, 1
      %p81 = scmp.ne.s32.totalorder %s76, %s78
      %p82 = scmp.eq.s32.totalorder %s16, 0
      %p83 = por %p81, %p82
      %p84 = scmp.ne.s32.totalorder %s76, %s78
      %p85 = scmp.eq.s32.totalorder %s21, 1
      %p86 = por %p84, %p85
      %p87 = scmp.ne.s32.totalorder %s78, %s79
      %p88 = scmp.eq.s32.totalorder %s21, 0
      %p89 = por %p87, %p88
      %p90 = scmp.ne.s32.totalorder %s78, %s79
      %p91 = scmp.eq.s32.totalorder %s22, 1
      %p92 = por %p90, %p91
      %p94 = scmp.ne.s32.totalorder %s79, %s93
      %p95 = scmp.eq.s32.totalorder %s22, 0
      %p96 = por %p94, %p95
      %s98 = sadd.s32 %s97, 1
      %p101 = scmp.eq.s32.totalorder %s16, 1
      %p102 = scmp.ne.s32.totalorder %s97, %s99
      %p103 = scmp.eq.s32.totalorder %s16, 0
      %p104 = por %p102, %p103
      %p105 = scmp.ne.s32.totalorder %s97, %s99
      %p106 = scmp.eq.s32.totalorder %s21, 1
      %p107 = por %p105, %p106
      %p108 = scmp.ne.s32.totalorder %s99, %s100
      %p109 = scmp.eq.s32.totalorder %s21, 0
      %p110 = por %p108, %p109
      %p111 = scmp.ne.s32.totalorder %s99, %s100
      %p112 = scmp.eq.s32.totalorder %s22, 1
      %p113 = por %p111, %p112
      %p115 = scmp.ne.s32.totalorder %s100, %s114
      %p116 = scmp.eq.s32.totalorder %s22, 0
      %p117 = por %p115, %p116
      %s119 = sadd.s32 %s118, 1
      %p122 = scmp.eq.s32.totalorder %s16, 1
      %p123 = scmp.ne.s32.totalorder %s118, %s120
      %p124 = scmp.eq.s32.totalorder %s16, 0
      %p125 = por %p123, %p124
      %p126 = scmp.ne.s32.totalorder %s118, %s120
      %p127 = scmp.eq.s32.totalorder %s21, 1
      %p128 = por %p126, %p127
      %p129 = scmp.ne.s32.totalorder %s120, %s121
      %p130 = scmp.eq.s32.totalorder %s21, 0
      %p131 = por %p129, %p130
      %p132 = scmp.ne.s32.totalorder %s120, %s121
      %p133 = scmp.eq.s32.totalorder %s22, 1
      %p134 = por %p132, %p133
      %p136 = scmp.ne.s32.totalorder %s121, %s135
      %p137 = scmp.eq.s32.totalorder %s22, 0
      %p138 = por %p136, %p137
      %s140 = sadd.s32 %s139, 1
      %p143 = scmp.eq.s32.totalorder %s16, 1
      %p144 = scmp.ne.s32.totalorder %s139, %s141
      %p145 = scmp.eq.s32.totalorder %s16, 0
      %p146 = por %p144, %p145
      %p147 = scmp.ne.s32.totalorder %s139, %s141
      %p148 = scmp.eq.s32.totalorder %s21, 1
      %p149 = por %p147, %p148
      %p150 = scmp.ne.s32.totalorder %s141, %s142
      %p151 = scmp.eq.s32.totalorder %s21, 0
      %p152 = por %p150, %p151
      %p153 = scmp.ne.s32.totalorder %s141, %s142
      %p154 = scmp.eq.s32.totalorder %s22, 1
      %p155 = por %p153, %p154
      %p157 = scmp.ne.s32.totalorder %s142, %s156
      %p158 = scmp.eq.s32.totalorder %s22, 0
      %p159 = por %p157, %p158
      %s161 = sadd.s32 %s160, 1
      %p164 = scmp.eq.s32.totalorder %s16, 1
      %p165 = scmp.ne.s32.totalorder %s160, %s162
      %p166 = scmp.eq.s32.totalorder %s16, 0
      %p167 = por %p165, %p166
      %p168 = scmp.ne.s32.totalorder %s160, %s162
      %p169 = scmp.eq.s32.totalorder %s21, 1
      %p170 = por %p168, %p169
      %p171 = scmp.ne.s32.totalorder %s162, %s163
      %p172 = scmp.eq.s32.totalorder %s21, 0
      %p173 = por %p171, %p172
      %p174 = scmp.ne.s32.totalorder %s162, %s163
      %p175 = scmp.eq.s32.totalorder %s22, 1
      %p176 = por %p174, %p175
      %p178 = scmp.ne.s32.totalorder %s163, %s177
      %p179 = scmp.eq.s32.totalorder %s22, 0
      %p180 = por %p178, %p179
      %s182 = sadd.s32 %s181, 1
      %p185 = scmp.eq.s32.totalorder %s16, 1
      %p186 = scmp.ne.s32.totalorder %s181, %s183
      %p187 = scmp.eq.s32.totalorder %s16, 0
      %p188 = por %p186, %p187
      %p189 = scmp.ne.s32.totalorder %s181, %s183
      %p190 = scmp.eq.s32.totalorder %s21, 1
      %p191 = por %p189, %p190
      %p192 = scmp.ne.s32.totalorder %s183, %s184
      %p193 = scmp.eq.s32.totalorder %s21, 0
      %p194 = por %p192, %p193
      %p195 = scmp.ne.s32.totalorder %s183, %s184
      %p196 = scmp.eq.s32.totalorder %s22, 1
      %p197 = por %p195, %p196
      %p199 = scmp.ne.s32.totalorder %s184, %s198
      %p200 = scmp.eq.s32.totalorder %s22, 0
      %p201 = por %p199, %p200
      %s202 = ssub.s32 %s16, %s23
      %p203 = scmp.eq.s32.totalorder %s202, 0
      %s205 = sadd.s32 %s204, 1
      %s206 = scalar_select %p203, %s204, %s205
      %p209 = pneg %p203
      %p210 = scmp.eq.s32.totalorder %s16, 1
      %p211 = por %p209, %p210
      %p212 = scmp.ne.s32.totalorder %s204, %s207
      %p213 = scmp.eq.s32.totalorder %s16, 0
      %p214 = por %p212, %p213
      %p215 = scmp.ne.s32.totalorder %s204, %s207
      %p216 = scmp.eq.s32.totalorder %s21, 1
      %p217 = por %p215, %p216
      %p218 = scmp.ne.s32.totalorder %s207, %s208
      %p219 = scmp.eq.s32.totalorder %s21, 0
      %p220 = por %p218, %p219
      %p221 = scmp.ne.s32.totalorder %s207, %s208
      %p222 = scmp.eq.s32.totalorder %s22, 1
      %p223 = por %p221, %p222
      %p225 = scmp.ne.s32.totalorder %s208, %s224
      %p226 = scmp.eq.s32.totalorder %s22, 0
      %p227 = por %p225, %p226
      %p228 = scmp.le.s32.totalorder 1, %s16
      %p229 = scmp.lt.s32.totalorder %s16, 3
      %p230 = pnand %p228, %p229
      %p231 = pneg %p230
      // Predicated region
      $region9: #{_lambda_.5} parent=5 // pred_check
        _
      $region10: #{_lambda_.5} parent=5 // pred_check_branch
        %233 = sbr.rel (%p230) target = $region12
      $region11: #{_lambda_.5} parent=5 // pred_region
        %s234 = ssub.s32 %s16, 1
        // Predicated region
        $region13: #{_lambda_.5} parent=11 // pred_check
          %p235 = pneg %p89
        $region14: #{_lambda_.5} parent=11 // pred_check_branch
          %237 = sbr.rel (%p235) target = $region16
        $region15: #{_lambda_.5} parent=11 // pred_region
          _
        $region16: #{_lambda_.5} parent=11 // pred_fallthru
          _
        // Predicated region
        $region17: #{_lambda_.5} parent=11 // pred_check
          %p238 = pneg %p110
        $region18: #{_lambda_.5} parent=11 // pred_check_branch
          %240 = sbr.rel (%p238) target = $region20
        $region19: #{_lambda_.5} parent=11 // pred_region
          %s242 = ssub.s32 16, 16
          %243 = vsyncadd [#allocation4], %s242
          %s245 = sshll.u32 [#allocation3], 4
          %s246 = int_to_ptr.vmem [resolvable:$true] %s245
          %248 = dma.hbm_to_vmem [thread:$0]  %s3, 16, %s246, [#allocation4]
        $region20: #{_lambda_.5} parent=11 // pred_fallthru
          _
        // Predicated region
        $region21: #{_lambda_.5} parent=11 // pred_check
          %p249 = pneg %p131
        $region22: #{_lambda_.5} parent=11 // pred_check_branch
          %251 = sbr.rel (%p249) target = $region24
        $region23: #{_lambda_.5} parent=11 // pred_region
          _
        $region24: #{_lambda_.5} parent=11 // pred_fallthru
          _
        // Predicated region
        $region25: #{_lambda_.5} parent=11 // pred_check
          %p252 = pneg %p152
        $region26: #{_lambda_.5} parent=11 // pred_check_branch
          %254 = sbr.rel (%p252) target = $region28
        $region27: #{_lambda_.5} parent=11 // pred_region
          %s256 = ssub.s32 16, 16
          %257 = vsyncadd [#allocation6], %s256
          %s259 = sshll.u32 [#allocation5], 4
          %s260 = int_to_ptr.vmem [resolvable:$true] %s259
          %262 = dma.hbm_to_vmem [thread:$0]  %s5, 16, %s260, [#allocation6]
        $region28: #{_lambda_.5} parent=11 // pred_fallthru
          _
        // Predicated region
        $region29: #{_lambda_.5} parent=11 // pred_check
          %p263 = pneg %p173
        $region30: #{_lambda_.5} parent=11 // pred_check_branch
          %265 = sbr.rel (%p263) target = $region32
        $region31: #{_lambda_.5} parent=11 // pred_region
          _
        $region32: #{_lambda_.5} parent=11 // pred_fallthru
          _
        // Predicated region
        $region33: #{_lambda_.5} parent=11 // pred_check
          %p266 = pneg %p194
        $region34: #{_lambda_.5} parent=11 // pred_check_branch
          %268 = sbr.rel (%p266) target = $region36
        $region35: #{_lambda_.5} parent=11 // pred_region
          %s270 = ssub.s32 16, 16
          %271 = vsyncadd [#allocation6], %s270
          %s273 = sshll.u32 [#allocation7], 4
          %s274 = int_to_ptr.vmem [resolvable:$true] %s273
          %276 = dma.hbm_to_vmem [thread:$0]  %s7, 16, %s274, [#allocation6]
        $region36: #{_lambda_.5} parent=11 // pred_fallthru
          _
      $region12: #{_lambda_.5} parent=5 // pred_fallthru
        _
      %p277 = scmp.lt.s32.totalorder %s16, 2
      // Predicated region
      $region37: #{_lambda_.5} parent=5 // pred_check
        %p278 = pneg %p277
      $region38: #{_lambda_.5} parent=5 // pred_check_branch
        %280 = sbr.rel (%p278) target = $region40
      $region39: #{_lambda_.5} parent=5 // pred_region
        // Predicated region
        $region41: #{_lambda_.5} parent=39 // pred_check
          %p281 = pneg %p36
        $region42: #{_lambda_.5} parent=39 // pred_check_branch
          %283 = sbr.rel (%p281) target = $region44
        $region43: #{_lambda_.5} parent=39 // pred_region
          %p284 = scmp.lt.s32.totalorder %s16, 1
          %s285 = scalar_select %p284, %s16, 1
          %s286 = smul.addr %s285, 8
          %s287 = scalar_lea.vmem %s0, %s286
        $region44: #{_lambda_.5} parent=39 // pred_fallthru
          _
        // Predicated region
        $region45: #{_lambda_.5} parent=39 // pred_check
          %p288 = pneg %p62
        $region46: #{_lambda_.5} parent=39 // pred_check_branch
          %290 = sbr.rel (%p288) target = $region48
        $region47: #{_lambda_.5} parent=39 // pred_region
          %p291 = scmp.lt.s32.totalorder %s16, 1
          %s292 = scalar_select %p291, %s16, 1
          %s293 = scalar_lea.vmem %s1, %s292
        $region48: #{_lambda_.5} parent=39 // pred_fallthru
          _
      $region40: #{_lambda_.5} parent=5 // pred_fallthru
        _
      %p294 = scmp.le.s32.totalorder 1, %s16
      %p295 = scmp.lt.s32.totalorder %s16, 3
      %p296 = pnand %p294, %p295
      %p297 = pneg %p296
      // Predicated region
      $region49: #{_lambda_.5} parent=5 // pred_check
        _
      $region50: #{_lambda_.5} parent=5 // pred_check_branch
        %299 = sbr.rel (%p296) target = $region52
      $region51: #{_lambda_.5} parent=5 // pred_region
        %s300 = ssub.s32 %s16, 1
        // Predicated region
        $region53: #{_lambda_.5} parent=51 // pred_check
          %p301 = pneg %p110
        $region54: #{_lambda_.5} parent=51 // pred_check_branch
          %303 = sbr.rel (%p301) target = $region56
        $region55: #{_lambda_.5} parent=51 // pred_region
          %304 = dma.done [#allocation4], 16
        $region56: #{_lambda_.5} parent=51 // pred_fallthru
          _
        // Predicated region
        $region57: #{_lambda_.5} parent=51 // pred_check
          %p305 = pneg %p152
        $region58: #{_lambda_.5} parent=51 // pred_check_branch
          %307 = sbr.rel (%p305) target = $region60
        $region59: #{_lambda_.5} parent=51 // pred_region
          %308 = dma.done [#allocation6], 16
        $region60: #{_lambda_.5} parent=51 // pred_fallthru
          _
        // Predicated region
        $region61: #{_lambda_.5} parent=51 // pred_check
          %p309 = pneg %p194
        $region62: #{_lambda_.5} parent=51 // pred_check_branch
          %311 = sbr.rel (%p309) target = $region64
        $region63: #{_lambda_.5} parent=51 // pred_region
          %312 = dma.done [#allocation6], 16
        $region64: #{_lambda_.5} parent=51 // pred_fallthru
          _
        %p313 = scmp.lt.s32.totalorder %s21, 1
        %s314 = scalar_select %p313, %s21, 1
        %s315 = smul.addr %s314, 8
        %s316 = scalar_lea.vmem %s0, %s315
        %p317 = pneg %p42
        %p318 = pneg %p39
        %p319 = scmp.lt.s32.totalorder %s21, 1
        %s320 = scalar_select %p319, %s21, 1
        %s321 = scalar_lea.vmem %s1, %s320
        %p322 = pneg %p68
        %p323 = pneg %p65
        %p324 = pneg %p89
        %p325 = pneg %p86
        %p326 = pneg %p110
        %p327 = pneg %p107
        %p328 = pneg %p131
        %p329 = pneg %p128
        %p330 = pneg %p152
        %p331 = pneg %p149
        %p332 = pneg %p173
        %p333 = pneg %p170
        %p334 = pneg %p194
        %p335 = pneg %p191
        %p336 = pneg %p220
        %p337 = pneg %p217
        %p338 = scmp.lt.s32.totalorder %s21, 1
        %s339 = scalar_select %p338, %s21, 1
        %s340 = smul.addr %s339, 8
        %s341 = scalar_lea.vmem %s8, %s340
        %p342 = scmp.lt.s32.totalorder %s21, 1
        %s343 = scalar_select %p342, %s21, 1
        %s344 = smul.addr %s343, 8
        %s345 = scalar_lea.vmem %s0, %s344
        %p346 = scmp.lt.s32.totalorder %s21, 1
        %s347 = scalar_select %p346, %s21, 1
        %s348 = scalar_lea.vmem %s1, %s347
        %p349 = scmp.lt.s32.totalorder %s21, 1
        %s350 = scalar_select %p349, %s21, 1
        %s351 = smul.addr %s350, 8
        %s352 = scalar_lea.vmem %s8, %s351
        %v354 = vld [vmem:[%s345] sm:$0xff]
        %v355 = vld [vmem:[%s2] sm:$0x1]
        %v356 = vld [vmem:[#allocation3] sm:$0x1]
        %vm357 = vcmask 261120
        %v358 = vsel %vm357, %v354, 0.0
        %359 = vadd.xlane.f32.xlu0 %v358
        %v360 = vpop.xlane.xlu0 %359
        %v361 = vrcp.pop 32.0
        %v362 = vmul.f32 %v360, %v361
        %v363 = vsub.f32 %v354, %v362
        %v364 = vmul.f32 %v363, %v363
        %v365 = vsel %vm357, %v364, 0.0
        %366 = vadd.xlane.f32.xlu0 %v365
        %v367 = vpop.xlane.xlu0 %366
        %v368 = vmul.f32 %v367, 0.032258064
        %v369 = vadd.f32 %v368, 1e-06
        %v370 = vrsqrt.pop %v369
        %v371 = vmul.f32 %v363, %v370
        %v373 = vlaneseq
        %v374 = vshrl.u32 %v373, 7
        %v375 = vsub.s32 0, %v374
        %v376 = vrot.slane %v355, %v375
        %v378 = vmul.f32 %v376, %v371
        %v380 = vlaneseq
        %v381 = vshrl.u32 %v380, 7
        %v382 = vsub.s32 0, %v381
        %v383 = vrot.slane %v356, %v382
        %v385 = vadd.f32 %v378, %v383
        %v386 = vpack.c.bf16 %v385, %v385
        %v387 = vld [vmem:[%s4] sm:$0xf]
        %v388 = vld [vmem:[%s4 + $0x4] sm:$0xf]
        %v389 = vld [vmem:[%s4 + $0x8] sm:$0xf]
        %v390 = vld [vmem:[%s4 + $0xc] sm:$0xf]
        %v391 = vld [vmem:[#allocation5] sm:$0x1]
        %v393 = vlaneseq
        %v394 = vshrl.u32 %v393, 7
        %v395 = vsub.s32 0, %v394
        %v396 = vrot.slane %v391, %v395
        %v402 = vunpack.c.l.b16 %v387
        %v403 = vunpack.c.l.b16 %v388
        %v404 = vunpack.c.l.b16 %v389
        %v405 = vunpack.c.l.b16 %v390
        %v406 = vpack.c.b16 %v403, %v402
        %v407 = vpack.c.b16 %v405, %v404
        %v411 = vsel %vm357, %v386, 0
        %413 = vmatprep.subr.bf16.mxu0 0
        %414 = vmatpush1.bf16.msra.mxu0 0
        %415 = vmatprep.subr.bf16.mxu0 0
        %416 = vmatpush1.bf16.msra.mxu0 0
        %417 = vmatprep.subr.bf16.mxu0 0
        %418 = vmatpush1.bf16.msra.mxu0 0
        %419 = vmatprep.subr.bf16.mxu0 0
        %420 = vmatpush1.bf16.msra.mxu0 0
        %421 = vmatprep.subr.bf16.mxu0 0
        %422 = vmatpush1.bf16.msra.mxu0 0
        %423 = vmatprep.subr.bf16.mxu0 0
        %424 = vmatpush1.bf16.msra.mxu0 0
        %425 = vmatprep.subr.bf16.mxu0 0
        %426 = vmatpush1.bf16.msra.mxu0 %v407
        %427 = vmatprep.subr.bf16.mxu0 0
        %428 = vmatpush1.bf16.msra.mxu0 %v406
        %429 = vmatprep.subr.bf16.mxu0 0
        %430 = vmatpush2.bf16.msra.mxu0 0
        %431 = vmatprep.subr.bf16.mxu0 0
        %432 = vmatpush2.bf16.msra.mxu0 0
        %433 = vmatprep.subr.bf16.mxu0 0
        %434 = vmatpush2.bf16.msra.mxu0 0
        %435 = vmatprep.subr.bf16.mxu0 0
        %436 = vmatpush2.bf16.msra.mxu0 0
        %437 = vmatprep.subr.bf16.mxu0 0
        %438 = vmatpush2.bf16.msra.mxu0 0
        %439 = vmatprep.subr.bf16.mxu0 0
        %440 = vmatpush2.bf16.msra.mxu0 0
        %441 = vmatprep.subr.bf16.mxu0 0
        %442 = vmatpush2.bf16.msra.mxu0 0
        %443 = vmatprep.subr.bf16.mxu0 0
        %444 = vmatpush2.bf16.msra.mxu0 0
        %445 = vmatprep.mubr.bf16.mxu0 0
        %446 = vmatmul.mubr.bf16.gmra.mxu0 %v411
        %v447 = vpop.f32.mrf.mxu0
        %v448 = vadd.f32 %v396, %v447
        %v449 = vpop.f32.mrf.mxu0
        %v450 = vpop.f32.mrf.mxu0
        %v451 = vpop.f32.mrf.mxu0
        %452 = vdwg.mxu0
        %v453 = vpack.c.bf16 %v448, %v448
        %vm454 = vcmask 781312
        %455 = vst.msk [vmem:[#allocation2] sm:$0xf] %vm454, %v453
        %v456 = vld [vmem:[%s348] sm:$0x1]
        %vm457 = vcmp.eq.f32.partialorder %v456, 0.0
        %v458 = vsel %vm457, -1e+09, 0.0
        %v459 = vld [vmem:[#allocation2] sm:$0xf]
        %v461 = vunpack.c.l.b16 %v459
        %v462 = vpack.c.b16 %v461, %v461
        %463 = vrot.lane.b32.xlu0 %v462, 96
        %v464 = vpop.permute.xlu0 %463
        %vm465 = vcmask 64512
        %v467 = vsel %vm465, %v459, 0
        %v470 = vsel %vm465, %v464, 0
        %472 = vmatprep.subr.bf16.mxu0 0
        %473 = vmatpush1.bf16.xpose.msra.mxu0 0
        %474 = vmatprep.subr.bf16.mxu0 0
        %475 = vmatpush1.bf16.xpose.msra.mxu0 0
        %476 = vmatprep.subr.bf16.mxu0 0
        %477 = vmatpush1.bf16.xpose.msra.mxu0 0
        %478 = vmatprep.subr.bf16.mxu0 0
        %479 = vmatpush1.bf16.xpose.msra.mxu0 0
        %480 = vmatprep.subr.bf16.mxu0 0
        %481 = vmatpush1.bf16.xpose.msra.mxu0 0
        %482 = vmatprep.subr.bf16.mxu0 0
        %483 = vmatpush1.bf16.xpose.msra.mxu0 0
        %484 = vmatprep.subr.bf16.mxu0 0
        %485 = vmatpush1.bf16.xpose.msra.mxu0 0
        %486 = vmatprep.subr.bf16.mxu0 0
        %487 = vmatpush1.bf16.xpose.msra.mxu0 %v470
        %488 = vmatprep.subr.bf16.mxu0 0
        %489 = vmatpush2.bf16.xpose.msra.mxu0 0
        %490 = vmatprep.subr.bf16.mxu0 0
        %491 = vmatpush2.bf16.xpose.msra.mxu0 0
        %492 = vmatprep.subr.bf16.mxu0 0
        %493 = vmatpush2.bf16.xpose.msra.mxu0 0
        %494 = vmatprep.subr.bf16.mxu0 0
        %495 = vmatpush2.bf16.xpose.msra.mxu0 0
        %496 = vmatprep.subr.bf16.mxu0 0
        %497 = vmatpush2.bf16.xpose.msra.mxu0 0
        %498 = vmatprep.subr.bf16.mxu0 0
        %499 = vmatpush2.bf16.xpose.msra.mxu0 0
        %500 = vmatprep.subr.bf16.mxu0 0
        %501 = vmatpush2.bf16.xpose.msra.mxu0 0
        %502 = vmatprep.subr.bf16.mxu0 0
        %503 = vmatpush2.bf16.xpose.msra.mxu0 0
        %504 = vmatprep.mubr.bf16.mxu0 0
        %505 = vmatmul.mubr.bf16.gmra.mxu0 %v467
        %v506 = vpop.f32.mrf.mxu0
        %v507 = vadd.f32 0.0, %v506
        %v508 = vpop.f32.mrf.mxu0
        %v509 = vpop.f32.mrf.mxu0
        %v510 = vpop.f32.mrf.mxu0
        %511 = vdwg.mxu0
        %v512 = vmul.f32 %v507, 0.35355338
        %v514 = vlaneseq
        %v515 = vshrl.u32 %v514, 7
        %v516 = vsub.s32 0, %v515
        %v517 = vrot.slane %v458, %v516
        %v519 = vadd.f32 %v512, %v517
        %v520 = vsel %vm465, %v519, -inf
        %521 = vmax.xlane.f32.xlu0 %v520
        %v522 = vpop.xlane.xlu0 %521
        %v523 = vsub.f32 %v519, %v522
        %v524 = vmul.f32 %v523, 1.442695
        %v525 = vpow.pop %v524
        %v526 = vsel %vm465, %v525, 0.0
        %527 = vadd.xlane.f32.xlu0 %v526
        %v528 = vpop.xlane.xlu0 %527
        %v529 = vrcp.pop %v528
        %v530 = vmul.f32 %v525, %v529
        %v531 = vpack.c.bf16 %v530, %v530
        %532 = vrot.lane.b32.xlu0 %v462, 64
        %v533 = vpop.permute.xlu0 %532
        %v535 = vsel %vm465, %v531, 0
        %vm537 = vcmask 1043456
        %v539 = vsel %vm537, %v533, 0
        %541 = vmatprep.subr.bf16.mxu0 0
        %542 = vmatpush1.bf16.msra.mxu0 0
        %543 = vmatprep.subr.bf16.mxu0 0
        %544 = vmatpush1.bf16.msra.mxu0 0
        %545 = vmatprep.subr.bf16.mxu0 0
        %546 = vmatpush1.bf16.msra.mxu0 0
        %547 = vmatprep.subr.bf16.mxu0 0
        %548 = vmatpush1.bf16.msra.mxu0 0
        %549 = vmatprep.subr.bf16.mxu0 0
        %550 = vmatpush1.bf16.msra.mxu0 0
        %551 = vmatprep.subr.bf16.mxu0 0
        %552 = vmatpush1.bf16.msra.mxu0 0
        %553 = vmatprep.subr.bf16.mxu0 0
        %554 = vmatpush1.bf16.msra.mxu0 0
        %555 = vmatprep.subr.bf16.mxu0 0
        %556 = vmatpush1.bf16.msra.mxu0 %v539
        %557 = vmatprep.subr.bf16.mxu0 0
        %558 = vmatpush2.bf16.msra.mxu0 0
        %559 = vmatprep.subr.bf16.mxu0 0
        %560 = vmatpush2.bf16.msra.mxu0 0
        %561 = vmatprep.subr.bf16.mxu0 0
        %562 = vmatpush2.bf16.msra.mxu0 0
        %563 = vmatprep.subr.bf16.mxu0 0
        %564 = vmatpush2.bf16.msra.mxu0 0
        %565 = vmatprep.subr.bf16.mxu0 0
        %566 = vmatpush2.bf16.msra.mxu0 0
        %567 = vmatprep.subr.bf16.mxu0 0
        %568 = vmatpush2.bf16.msra.mxu0 0
        %569 = vmatprep.subr.bf16.mxu0 0
        %570 = vmatpush2.bf16.msra.mxu0 0
        %571 = vmatprep.subr.bf16.mxu0 0
        %572 = vmatpush2.bf16.msra.mxu0 0
        %573 = vmatprep.mubr.bf16.mxu0 0
        %574 = vmatmul.mubr.bf16.gmra.mxu0 %v535
        %v575 = vpop.f32.mrf.mxu0
        %v576 = vadd.f32 0.0, %v575
        %v577 = vpop.f32.mrf.mxu0
        %v578 = vpop.f32.mrf.mxu0
        %v579 = vpop.f32.mrf.mxu0
        %580 = vdwg.mxu0
        %v581 = vpack.c.bf16 %v576, %v576
        %v582 = vld [vmem:[%s6] sm:$0xf]
        %583 = vrot.lane.b32.xlu0 %v462, 120
        %v584 = vpop.permute.xlu0 %583
        %585 = vrot.lane.b32.xlu0 %v462, 88
        %v586 = vpop.permute.xlu0 %585
        %v588 = vsel %vm465, %v584, 0
        %v591 = vsel %vm465, %v586, 0
        %593 = vmatprep.subr.bf16.mxu0 0
        %594 = vmatpush1.bf16.xpose.msra.mxu0 0
        %595 = vmatprep.subr.bf16.mxu0 0
        %596 = vmatpush1.bf16.xpose.msra.mxu0 0
        %597 = vmatprep.subr.bf16.mxu0 0
        %598 = vmatpush1.bf16.xpose.msra.mxu0 0
        %599 = vmatprep.subr.bf16.mxu0 0
        %600 = vmatpush1.bf16.xpose.msra.mxu0 0
        %601 = vmatprep.subr.bf16.mxu0 0
        %602 = vmatpush1.bf16.xpose.msra.mxu0 0
        %603 = vmatprep.subr.bf16.mxu0 0
        %604 = vmatpush1.bf16.xpose.msra.mxu0 0
        %605 = vmatprep.subr.bf16.mxu0 0
        %606 = vmatpush1.bf16.xpose.msra.mxu0 0
        %607 = vmatprep.subr.bf16.mxu0 0
        %608 = vmatpush1.bf16.xpose.msra.mxu0 %v591
        %609 = vmatprep.subr.bf16.mxu0 0
        %610 = vmatpush2.bf16.xpose.msra.mxu0 0
        %611 = vmatprep.subr.bf16.mxu0 0
        %612 = vmatpush2.bf16.xpose.msra.mxu0 0
        %613 = vmatprep.subr.bf16.mxu0 0
        %614 = vmatpush2.bf16.xpose.msra.mxu0 0
        %615 = vmatprep.subr.bf16.mxu0 0
        %616 = vmatpush2.bf16.xpose.msra.mxu0 0
        %617 = vmatprep.subr.bf16.mxu0 0
        %618 = vmatpush2.bf16.xpose.msra.mxu0 0
        %619 = vmatprep.subr.bf16.mxu0 0
        %620 = vmatpush2.bf16.xpose.msra.mxu0 0
        %621 = vmatprep.subr.bf16.mxu0 0
        %622 = vmatpush2.bf16.xpose.msra.mxu0 0
        %623 = vmatprep.subr.bf16.mxu0 0
        %624 = vmatpush2.bf16.xpose.msra.mxu0 0
        %625 = vmatprep.mubr.bf16.mxu0 0
        %626 = vmatmul.mubr.bf16.gmra.mxu0 %v588
        %v627 = vpop.f32.mrf.mxu0
        %v628 = vadd.f32 0.0, %v627
        %v629 = vpop.f32.mrf.mxu0
        %v630 = vpop.f32.mrf.mxu0
        %v631 = vpop.f32.mrf.mxu0
        %632 = vdwg.mxu0
        %v633 = vmul.f32 %v628, 0.35355338
        %v634 = vadd.f32 %v633, %v517
        %v635 = vsel %vm465, %v634, -inf
        %636 = vmax.xlane.f32.xlu0 %v635
        %v637 = vpop.xlane.xlu0 %636
        %v638 = vsub.f32 %v634, %v637
        %v639 = vmul.f32 %v638, 1.442695
        %v640 = vpow.pop %v639
        %v641 = vsel %vm465, %v640, 0.0
        %642 = vadd.xlane.f32.xlu0 %v641
        %v643 = vpop.xlane.xlu0 %642
        %v644 = vrcp.pop %v643
        %v645 = vmul.f32 %v640, %v644
        %v646 = vpack.c.bf16 %v645, %v645
        %647 = vrot.lane.b32.xlu0 %v462, 56
        %v648 = vpop.permute.xlu0 %647
        %v650 = vsel %vm465, %v646, 0
        %v653 = vsel %vm537, %v648, 0
        %655 = vmatprep.subr.bf16.mxu0 0
        %656 = vmatpush1.bf16.msra.mxu0 0
        %657 = vmatprep.subr.bf16.mxu0 0
        %658 = vmatpush1.bf16.msra.mxu0 0
        %659 = vmatprep.subr.bf16.mxu0 0
        %660 = vmatpush1.bf16.msra.mxu0 0
        %661 = vmatprep.subr.bf16.mxu0 0
        %662 = vmatpush1.bf16.msra.mxu0 0
        %663 = vmatprep.subr.bf16.mxu0 0
        %664 = vmatpush1.bf16.msra.mxu0 0
        %665 = vmatprep.subr.bf16.mxu0 0
        %666 = vmatpush1.bf16.msra.mxu0 0
        %667 = vmatprep.subr.bf16.mxu0 0
        %668 = vmatpush1.bf16.msra.mxu0 0
        %669 = vmatprep.subr.bf16.mxu0 0
        %670 = vmatpush1.bf16.msra.mxu0 %v653
        %671 = vmatprep.subr.bf16.mxu0 0
        %672 = vmatpush2.bf16.msra.mxu0 0
        %673 = vmatprep.subr.bf16.mxu0 0
        %674 = vmatpush2.bf16.msra.mxu0 0
        %675 = vmatprep.subr.bf16.mxu0 0
        %676 = vmatpush2.bf16.msra.mxu0 0
        %677 = vmatprep.subr.bf16.mxu0 0
        %678 = vmatpush2.bf16.msra.mxu0 0
        %679 = vmatprep.subr.bf16.mxu0 0
        %680 = vmatpush2.bf16.msra.mxu0 0
        %681 = vmatprep.subr.bf16.mxu0 0
        %682 = vmatpush2.bf16.msra.mxu0 0
        %683 = vmatprep.subr.bf16.mxu0 0
        %684 = vmatpush2.bf16.msra.mxu0 0
        %685 = vmatprep.subr.bf16.mxu0 0
        %686 = vmatpush2.bf16.msra.mxu0 0
        %687 = vmatprep.mubr.bf16.mxu0 0
        %688 = vmatmul.mubr.bf16.gmra.mxu0 %v650
        %v689 = vpop.f32.mrf.mxu0
        %v690 = vadd.f32 0.0, %v689
        %v691 = vpop.f32.mrf.mxu0
        %v692 = vpop.f32.mrf.mxu0
        %v693 = vpop.f32.mrf.mxu0
        %694 = vdwg.mxu0
        %v695 = vpack.c.bf16 %v690, %v690
        %v696 = vld [vmem:[%s6 + $0x4] sm:$0xf]
        %v698 = vsel %vm465, %v695, 0
        %v701 = vsel %vm537, %v696, 0
        %703 = vmatprep.subr.bf16.mxu0 0
        %704 = vmatpush1.bf16.msra.mxu0 0
        %705 = vmatprep.subr.bf16.mxu0 0
        %706 = vmatpush1.bf16.msra.mxu0 0
        %707 = vmatprep.subr.bf16.mxu0 0
        %708 = vmatpush1.bf16.msra.mxu0 0
        %709 = vmatprep.subr.bf16.mxu0 0
        %710 = vmatpush1.bf16.msra.mxu0 0
        %711 = vmatprep.subr.bf16.mxu0 0
        %712 = vmatpush1.bf16.msra.mxu0 0
        %713 = vmatprep.subr.bf16.mxu0 0
        %714 = vmatpush1.bf16.msra.mxu0 0
        %715 = vmatprep.subr.bf16.mxu0 0
        %716 = vmatpush1.bf16.msra.mxu0 0
        %717 = vmatprep.subr.bf16.mxu0 0
        %718 = vmatpush1.bf16.msra.mxu0 %v701
        %719 = vmatprep.subr.bf16.mxu0 0
        %720 = vmatpush2.bf16.msra.mxu0 0
        %721 = vmatprep.subr.bf16.mxu0 0
        %722 = vmatpush2.bf16.msra.mxu0 0
        %723 = vmatprep.subr.bf16.mxu0 0
        %724 = vmatpush2.bf16.msra.mxu0 0
        %725 = vmatprep.subr.bf16.mxu0 0
        %726 = vmatpush2.bf16.msra.mxu0 0
        %727 = vmatprep.subr.bf16.mxu0 0
        %728 = vmatpush2.bf16.msra.mxu0 0
        %729 = vmatprep.subr.bf16.mxu0 0
        %730 = vmatpush2.bf16.msra.mxu0 0
        %731 = vmatprep.subr.bf16.mxu0 0
        %732 = vmatpush2.bf16.msra.mxu0 0
        %733 = vmatprep.subr.bf16.mxu0 0
        %734 = vmatpush2.bf16.msra.mxu0 0
        %735 = vmatprep.mubr.bf16.mxu0 0
        %736 = vmatmul.mubr.bf16.gmra.mxu0 %v698
        %v737 = vpop.f32.mrf.mxu0
        %v738 = vadd.f32 0.0, %v737
        %v739 = vpop.f32.mrf.mxu0
        %v740 = vpop.f32.mrf.mxu0
        %v741 = vpop.f32.mrf.mxu0
        %742 = vdwg.mxu0
        %v744 = vsel %vm465, %v581, 0
        %v747 = vsel %vm537, %v582, 0
        %749 = vmatprep.subr.bf16.mxu0 0
        %750 = vmatpush1.bf16.msra.mxu0 0
        %751 = vmatprep.subr.bf16.mxu0 0
        %752 = vmatpush1.bf16.msra.mxu0 0
        %753 = vmatprep.subr.bf16.mxu0 0
        %754 = vmatpush1.bf16.msra.mxu0 0
        %755 = vmatprep.subr.bf16.mxu0 0
        %756 = vmatpush1.bf16.msra.mxu0 0
        %757 = vmatprep.subr.bf16.mxu0 0
        %758 = vmatpush1.bf16.msra.mxu0 0
        %759 = vmatprep.subr.bf16.mxu0 0
        %760 = vmatpush1.bf16.msra.mxu0 0
        %761 = vmatprep.subr.bf16.mxu0 0
        %762 = vmatpush1.bf16.msra.mxu0 0
        %763 = vmatprep.subr.bf16.mxu0 0
        %764 = vmatpush1.bf16.msra.mxu0 %v747
        %765 = vmatprep.subr.bf16.mxu0 0
        %766 = vmatpush2.bf16.msra.mxu0 0
        %767 = vmatprep.subr.bf16.mxu0 0
        %768 = vmatpush2.bf16.msra.mxu0 0
        %769 = vmatprep.subr.bf16.mxu0 0
        %770 = vmatpush2.bf16.msra.mxu0 0
        %771 = vmatprep.subr.bf16.mxu0 0
        %772 = vmatpush2.bf16.msra.mxu0 0
        %773 = vmatprep.subr.bf16.mxu0 0
        %774 = vmatpush2.bf16.msra.mxu0 0
        %775 = vmatprep.subr.bf16.mxu0 0
        %776 = vmatpush2.bf16.msra.mxu0 0
        %777 = vmatprep.subr.bf16.mxu0 0
        %778 = vmatpush2.bf16.msra.mxu0 0
        %779 = vmatprep.subr.bf16.mxu0 0
        %780 = vmatpush2.bf16.msra.mxu0 0
        %781 = vmatprep.mubr.bf16.mxu0 0
        %782 = vmatmul.mubr.bf16.gmra.mxu0 %v744
        %v783 = vpop.f32.mrf.mxu0
        %v784 = vadd.f32 %v738, %v783
        %v785 = vpop.f32.mrf.mxu0
        %v786 = vpop.f32.mrf.mxu0
        %v787 = vpop.f32.mrf.mxu0
        %788 = vdwg.mxu0
        %789 = vrot.lane.b32.xlu0 %v462, 112
        %v790 = vpop.permute.xlu0 %789
        %791 = vrot.lane.b32.xlu0 %v462, 80
        %v792 = vpop.permute.xlu0 %791
        %v794 = vsel %vm465, %v790, 0
        %v797 = vsel %vm465, %v792, 0
        %799 = vmatprep.subr.bf16.mxu0 0
        %800 = vmatpush1.bf16.xpose.msra.mxu0 0
        %801 = vmatprep.subr.bf16.mxu0 0
        %802 = vmatpush1.bf16.xpose.msra.mxu0 0
        %803 = vmatprep.subr.bf16.mxu0 0
        %804 = vmatpush1.bf16.xpose.msra.mxu0 0
        %805 = vmatprep.subr.bf16.mxu0 0
        %806 = vmatpush1.bf16.xpose.msra.mxu0 0
        %807 = vmatprep.subr.bf16.mxu0 0
        %808 = vmatpush1.bf16.xpose.msra.mxu0 0
        %809 = vmatprep.subr.bf16.mxu0 0
        %810 = vmatpush1.bf16.xpose.msra.mxu0 0
        %811 = vmatprep.subr.bf16.mxu0 0
        %812 = vmatpush1.bf16.xpose.msra.mxu0 0
        %813 = vmatprep.subr.bf16.mxu0 0
        %814 = vmatpush1.bf16.xpose.msra.mxu0 %v797
        %815 = vmatprep.subr.bf16.mxu0 0
        %816 = vmatpush2.bf16.xpose.msra.mxu0 0
        %817 = vmatprep.subr.bf16.mxu0 0
        %818 = vmatpush2.bf16.xpose.msra.mxu0 0
        %819 = vmatprep.subr.bf16.mxu0 0
        %820 = vmatpush2.bf16.xpose.msra.mxu0 0
        %821 = vmatprep.subr.bf16.mxu0 0
        %822 = vmatpush2.bf16.xpose.msra.mxu0 0
        %823 = vmatprep.subr.bf16.mxu0 0
        %824 = vmatpush2.bf16.xpose.msra.mxu0 0
        %825 = vmatprep.subr.bf16.mxu0 0
        %826 = vmatpush2.bf16.xpose.msra.mxu0 0
        %827 = vmatprep.subr.bf16.mxu0 0
        %828 = vmatpush2.bf16.xpose.msra.mxu0 0
        %829 = vmatprep.subr.bf16.mxu0 0
        %830 = vmatpush2.bf16.xpose.msra.mxu0 0
        %831 = vmatprep.mubr.bf16.mxu0 0
        %832 = vmatmul.mubr.bf16.gmra.mxu0 %v794
        %v833 = vpop.f32.mrf.mxu0
        %v834 = vadd.f32 0.0, %v833
        %v835 = vpop.f32.mrf.mxu0
        %v836 = vpop.f32.mrf.mxu0
        %v837 = vpop.f32.mrf.mxu0
        %838 = vdwg.mxu0
        %v839 = vmul.f32 %v834, 0.35355338
        %v840 = vadd.f32 %v839, %v517
        %v841 = vsel %vm465, %v840, -inf
        %842 = vmax.xlane.f32.xlu0 %v841
        %v843 = vpop.xlane.xlu0 %842
        %v844 = vsub.f32 %v840, %v843
        %v845 = vmul.f32 %v844, 1.442695
        %v846 = vpow.pop %v845
        %v847 = vsel %vm465, %v846, 0.0
        %848 = vadd.xlane.f32.xlu0 %v847
        %v849 = vpop.xlane.xlu0 %848
        %v850 = vrcp.pop %v849
        %v851 = vmul.f32 %v846, %v850
        %v852 = vpack.c.bf16 %v851, %v851
        %853 = vrot.lane.b32.xlu0 %v462, 48
        %v854 = vpop.permute.xlu0 %853
        %v856 = vsel %vm465, %v852, 0
        %v859 = vsel %vm537, %v854, 0
        %861 = vmatprep.subr.bf16.mxu0 0
        %862 = vmatpush1.bf16.msra.mxu0 0
        %863 = vmatprep.subr.bf16.mxu0 0
        %864 = vmatpush1.bf16.msra.mxu0 0
        %865 = vmatprep.subr.bf16.mxu0 0
        %866 = vmatpush1.bf16.msra.mxu0 0
        %867 = vmatprep.subr.bf16.mxu0 0
        %868 = vmatpush1.bf16.msra.mxu0 0
        %869 = vmatprep.subr.bf16.mxu0 0
        %870 = vmatpush1.bf16.msra.mxu0 0
        %871 = vmatprep.subr.bf16.mxu0 0
        %872 = vmatpush1.bf16.msra.mxu0 0
        %873 = vmatprep.subr.bf16.mxu0 0
        %874 = vmatpush1.bf16.msra.mxu0 0
        %875 = vmatprep.subr.bf16.mxu0 0
        %876 = vmatpush1.bf16.msra.mxu0 %v859
        %877 = vmatprep.subr.bf16.mxu0 0
        %878 = vmatpush2.bf16.msra.mxu0 0
        %879 = vmatprep.subr.bf16.mxu0 0
        %880 = vmatpush2.bf16.msra.mxu0 0
        %881 = vmatprep.subr.bf16.mxu0 0
        %882 = vmatpush2.bf16.msra.mxu0 0
        %883 = vmatprep.subr.bf16.mxu0 0
        %884 = vmatpush2.bf16.msra.mxu0 0
        %885 = vmatprep.subr.bf16.mxu0 0
        %886 = vmatpush2.bf16.msra.mxu0 0
        %887 = vmatprep.subr.bf16.mxu0 0
        %888 = vmatpush2.bf16.msra.mxu0 0
        %889 = vmatprep.subr.bf16.mxu0 0
        %890 = vmatpush2.bf16.msra.mxu0 0
        %891 = vmatprep.subr.bf16.mxu0 0
        %892 = vmatpush2.bf16.msra.mxu0 0
        %893 = vmatprep.mubr.bf16.mxu0 0
        %894 = vmatmul.mubr.bf16.gmra.mxu0 %v856
        %v895 = vpop.f32.mrf.mxu0
        %v896 = vadd.f32 0.0, %v895
        %v897 = vpop.f32.mrf.mxu0
        %v898 = vpop.f32.mrf.mxu0
        %v899 = vpop.f32.mrf.mxu0
        %900 = vdwg.mxu0
        %v901 = vpack.c.bf16 %v896, %v896
        %v902 = vld [vmem:[%s6 + $0x8] sm:$0xf]
        %v904 = vsel %vm465, %v901, 0
        %v907 = vsel %vm537, %v902, 0
        %909 = vmatprep.subr.bf16.mxu0 0
        %910 = vmatpush1.bf16.msra.mxu0 0
        %911 = vmatprep.subr.bf16.mxu0 0
        %912 = vmatpush1.bf16.msra.mxu0 0
        %913 = vmatprep.subr.bf16.mxu0 0
        %914 = vmatpush1.bf16.msra.mxu0 0
        %915 = vmatprep.subr.bf16.mxu0 0
        %916 = vmatpush1.bf16.msra.mxu0 0
        %917 = vmatprep.subr.bf16.mxu0 0
        %918 = vmatpush1.bf16.msra.mxu0 0
        %919 = vmatprep.subr.bf16.mxu0 0
        %920 = vmatpush1.bf16.msra.mxu0 0
        %921 = vmatprep.subr.bf16.mxu0 0
        %922 = vmatpush1.bf16.msra.mxu0 0
        %923 = vmatprep.subr.bf16.mxu0 0
        %924 = vmatpush1.bf16.msra.mxu0 %v907
        %925 = vmatprep.subr.bf16.mxu0 0
        %926 = vmatpush2.bf16.msra.mxu0 0
        %927 = vmatprep.subr.bf16.mxu0 0
        %928 = vmatpush2.bf16.msra.mxu0 0
        %929 = vmatprep.subr.bf16.mxu0 0
        %930 = vmatpush2.bf16.msra.mxu0 0
        %931 = vmatprep.subr.bf16.mxu0 0
        %932 = vmatpush2.bf16.msra.mxu0 0
        %933 = vmatprep.subr.bf16.mxu0 0
        %934 = vmatpush2.bf16.msra.mxu0 0
        %935 = vmatprep.subr.bf16.mxu0 0
        %936 = vmatpush2.bf16.msra.mxu0 0
        %937 = vmatprep.subr.bf16.mxu0 0
        %938 = vmatpush2.bf16.msra.mxu0 0
        %939 = vmatprep.subr.bf16.mxu0 0
        %940 = vmatpush2.bf16.msra.mxu0 0
        %941 = vmatprep.mubr.bf16.mxu0 0
        %942 = vmatmul.mubr.bf16.gmra.mxu0 %v904
        %v943 = vpop.f32.mrf.mxu0
        %v944 = vadd.f32 0.0, %v943
        %v945 = vpop.f32.mrf.mxu0
        %v946 = vpop.f32.mrf.mxu0
        %v947 = vpop.f32.mrf.mxu0
        %948 = vdwg.mxu0
        %v949 = vadd.f32 %v784, %v944
        %950 = vrot.lane.b32.xlu0 %v462, 104
        %v951 = vpop.permute.xlu0 %950
        %952 = vrot.lane.b32.xlu0 %v462, 72
        %v953 = vpop.permute.xlu0 %952
        %v955 = vsel %vm465, %v951, 0
        %v958 = vsel %vm465, %v953, 0
        %960 = vmatprep.subr.bf16.mxu0 0
        %961 = vmatpush1.bf16.xpose.msra.mxu0 0
        %962 = vmatprep.subr.bf16.mxu0 0
        %963 = vmatpush1.bf16.xpose.msra.mxu0 0
        %964 = vmatprep.subr.bf16.mxu0 0
        %965 = vmatpush1.bf16.xpose.msra.mxu0 0
        %966 = vmatprep.subr.bf16.mxu0 0
        %967 = vmatpush1.bf16.xpose.msra.mxu0 0
        %968 = vmatprep.subr.bf16.mxu0 0
        %969 = vmatpush1.bf16.xpose.msra.mxu0 0
        %970 = vmatprep.subr.bf16.mxu0 0
        %971 = vmatpush1.bf16.xpose.msra.mxu0 0
        %972 = vmatprep.subr.bf16.mxu0 0
        %973 = vmatpush1.bf16.xpose.msra.mxu0 0
        %974 = vmatprep.subr.bf16.mxu0 0
        %975 = vmatpush1.bf16.xpose.msra.mxu0 %v958
        %976 = vmatprep.subr.bf16.mxu0 0
        %977 = vmatpush2.bf16.xpose.msra.mxu0 0
        %978 = vmatprep.subr.bf16.mxu0 0
        %979 = vmatpush2.bf16.xpose.msra.mxu0 0
        %980 = vmatprep.subr.bf16.mxu0 0
        %981 = vmatpush2.bf16.xpose.msra.mxu0 0
        %982 = vmatprep.subr.bf16.mxu0 0
        %983 = vmatpush2.bf16.xpose.msra.mxu0 0
        %984 = vmatprep.subr.bf16.mxu0 0
        %985 = vmatpush2.bf16.xpose.msra.mxu0 0
        %986 = vmatprep.subr.bf16.mxu0 0
        %987 = vmatpush2.bf16.xpose.msra.mxu0 0
        %988 = vmatprep.subr.bf16.mxu0 0
        %989 = vmatpush2.bf16.xpose.msra.mxu0 0
        %990 = vmatprep.subr.bf16.mxu0 0
        %991 = vmatpush2.bf16.xpose.msra.mxu0 0
        %992 = vmatprep.mubr.bf16.mxu0 0
        %993 = vmatmul.mubr.bf16.gmra.mxu0 %v955
        %v994 = vpop.f32.mrf.mxu0
        %v995 = vadd.f32 0.0, %v994
        %v996 = vpop.f32.mrf.mxu0
        %v997 = vpop.f32.mrf.mxu0
        %v998 = vpop.f32.mrf.mxu0
        %999 = vdwg.mxu0
        %v1000 = vmul.f32 %v995, 0.35355338
        %v1001 = vadd.f32 %v1000, %v517
        %v1002 = vsel %vm465, %v1001, -inf
        %1003 = vmax.xlane.f32.xlu0 %v1002
        %v1004 = vpop.xlane.xlu0 %1003
        %v1005 = vsub.f32 %v1001, %v1004
        %v1006 = vmul.f32 %v1005, 1.442695
        %v1007 = vpow.pop %v1006
        %v1008 = vsel %vm465, %v1007, 0.0
        %1009 = vadd.xlane.f32.xlu0 %v1008
        %v1010 = vpop.xlane.xlu0 %1009
        %v1011 = vrcp.pop %v1010
        %v1012 = vmul.f32 %v1007, %v1011
        %v1013 = vpack.c.bf16 %v1012, %v1012
        %1014 = vrot.lane.b32.xlu0 %v462, 40
        %v1015 = vpop.permute.xlu0 %1014
        %v1017 = vsel %vm465, %v1013, 0
        %v1020 = vsel %vm537, %v1015, 0
        %1022 = vmatprep.subr.bf16.mxu0 0
        %1023 = vmatpush1.bf16.msra.mxu0 0
        %1024 = vmatprep.subr.bf16.mxu0 0
        %1025 = vmatpush1.bf16.msra.mxu0 0
        %1026 = vmatprep.subr.bf16.mxu0 0
        %1027 = vmatpush1.bf16.msra.mxu0 0
        %1028 = vmatprep.subr.bf16.mxu0 0
        %1029 = vmatpush1.bf16.msra.mxu0 0
        %1030 = vmatprep.subr.bf16.mxu0 0
        %1031 = vmatpush1.bf16.msra.mxu0 0
        %1032 = vmatprep.subr.bf16.mxu0 0
        %1033 = vmatpush1.bf16.msra.mxu0 0
        %1034 = vmatprep.subr.bf16.mxu0 0
        %1035 = vmatpush1.bf16.msra.mxu0 0
        %1036 = vmatprep.subr.bf16.mxu0 0
        %1037 = vmatpush1.bf16.msra.mxu0 %v1020
        %1038 = vmatprep.subr.bf16.mxu0 0
        %1039 = vmatpush2.bf16.msra.mxu0 0
        %1040 = vmatprep.subr.bf16.mxu0 0
        %1041 = vmatpush2.bf16.msra.mxu0 0
        %1042 = vmatprep.subr.bf16.mxu0 0
        %1043 = vmatpush2.bf16.msra.mxu0 0
        %1044 = vmatprep.subr.bf16.mxu0 0
        %1045 = vmatpush2.bf16.msra.mxu0 0
        %1046 = vmatprep.subr.bf16.mxu0 0
        %1047 = vmatpush2.bf16.msra.mxu0 0
        %1048 = vmatprep.subr.bf16.mxu0 0
        %1049 = vmatpush2.bf16.msra.mxu0 0
        %1050 = vmatprep.subr.bf16.mxu0 0
        %1051 = vmatpush2.bf16.msra.mxu0 0
        %1052 = vmatprep.subr.bf16.mxu0 0
        %1053 = vmatpush2.bf16.msra.mxu0 0
        %1054 = vmatprep.mubr.bf16.mxu0 0
        %1055 = vmatmul.mubr.bf16.gmra.mxu0 %v1017
        %v1056 = vpop.f32.mrf.mxu0
        %v1057 = vadd.f32 0.0, %v1056
        %v1058 = vpop.f32.mrf.mxu0
        %v1059 = vpop.f32.mrf.mxu0
        %v1060 = vpop.f32.mrf.mxu0
        %1061 = vdwg.mxu0
        %v1062 = vpack.c.bf16 %v1057, %v1057
        %v1063 = vld [vmem:[%s6 + $0xc] sm:$0xf]
        %v1065 = vsel %vm465, %v1062, 0
        %v1068 = vsel %vm537, %v1063, 0
        %1070 = vmatprep.subr.bf16.mxu0 0
        %1071 = vmatpush1.bf16.msra.mxu0 0
        %1072 = vmatprep.subr.bf16.mxu0 0
        %1073 = vmatpush1.bf16.msra.mxu0 0
        %1074 = vmatprep.subr.bf16.mxu0 0
        %1075 = vmatpush1.bf16.msra.mxu0 0
        %1076 = vmatprep.subr.bf16.mxu0 0
        %1077 = vmatpush1.bf16.msra.mxu0 0
        %1078 = vmatprep.subr.bf16.mxu0 0
        %1079 = vmatpush1.bf16.msra.mxu0 0
        %1080 = vmatprep.subr.bf16.mxu0 0
        %1081 = vmatpush1.bf16.msra.mxu0 0
        %1082 = vmatprep.subr.bf16.mxu0 0
        %1083 = vmatpush1.bf16.msra.mxu0 0
        %1084 = vmatprep.subr.bf16.mxu0 0
        %1085 = vmatpush1.bf16.msra.mxu0 %v1068
        %1086 = vmatprep.subr.bf16.mxu0 0
        %1087 = vmatpush2.bf16.msra.mxu0 0
        %1088 = vmatprep.subr.bf16.mxu0 0
        %1089 = vmatpush2.bf16.msra.mxu0 0
        %1090 = vmatprep.subr.bf16.mxu0 0
        %1091 = vmatpush2.bf16.msra.mxu0 0
        %1092 = vmatprep.subr.bf16.mxu0 0
        %1093 = vmatpush2.bf16.msra.mxu0 0
        %1094 = vmatprep.subr.bf16.mxu0 0
        %1095 = vmatpush2.bf16.msra.mxu0 0
        %1096 = vmatprep.subr.bf16.mxu0 0
        %1097 = vmatpush2.bf16.msra.mxu0 0
        %1098 = vmatprep.subr.bf16.mxu0 0
        %1099 = vmatpush2.bf16.msra.mxu0 0
        %1100 = vmatprep.subr.bf16.mxu0 0
        %1101 = vmatpush2.bf16.msra.mxu0 0
        %1102 = vmatprep.mubr.bf16.mxu0 0
        %1103 = vmatmul.mubr.bf16.gmra.mxu0 %v1065
        %v1104 = vpop.f32.mrf.mxu0
        %v1105 = vadd.f32 0.0, %v1104
        %v1106 = vpop.f32.mrf.mxu0
        %v1107 = vpop.f32.mrf.mxu0
        %v1108 = vpop.f32.mrf.mxu0
        %1109 = vdwg.mxu0
        %v1110 = vadd.f32 %v949, %v1105
        %v1111 = vadd.f32 %v354, %v1110
        %v1112 = vld [vmem:[#allocation7] sm:$0x1]
        %v1114 = vlaneseq
        %v1115 = vshrl.u32 %v1114, 7
        %v1116 = vsub.s32 0, %v1115
        %v1117 = vrot.slane %v1112, %v1116
        %v1119 = vadd.f32 %v1111, %v1117
        %1120 = vst.msk [vmem:[%s352] sm:$0xff] %vm357, %v1119
        %p1121 = scmp.lt.s32.totalorder %s21, 1
        %s1122 = scalar_select %p1121, %s21, 1
        %s1123 = smul.addr %s1122, 8
        %s1124 = scalar_lea.vmem %s8, %s1123
        // Predicated region
        $region65: #{_lambda_.5} parent=51 // pred_check
          %p1125 = pneg %p217
        $region66: #{_lambda_.5} parent=51 // pred_check_branch
          %1127 = sbr.rel (%p1125) target = $region68
        $region67: #{_lambda_.5} parent=51 // pred_region
          _
        $region68: #{_lambda_.5} parent=51 // pred_fallthru
          _
      $region52: #{_lambda_.5} parent=5 // pred_fallthru
        _
      %p1128 = scmp.le.s32.totalorder 2, %s16
      // Predicated region
      $region69: #{_lambda_.5} parent=5 // pred_check
        %p1129 = pneg %p1128
      $region70: #{_lambda_.5} parent=5 // pred_check_branch
        %1131 = sbr.rel (%p1129) target = $region72
      $region71: #{_lambda_.5} parent=5 // pred_region
        %s1132 = ssub.s32 %s16, 2
        // Predicated region
        $region73: #{_lambda_.5} parent=71 // pred_check
          %p1133 = pneg %p223
        $region74: #{_lambda_.5} parent=71 // pred_check_branch
          %1135 = sbr.rel (%p1133) target = $region76
        $region75: #{_lambda_.5} parent=71 // pred_region
          %p1136 = scmp.lt.s32.totalorder %s22, 1
          %s1137 = scalar_select %p1136, %s22, 1
          %s1138 = smul.addr %s1137, 8
          %s1139 = scalar_lea.vmem %s8, %s1138
        $region76: #{_lambda_.5} parent=71 // pred_fallthru
          _
      $region72: #{_lambda_.5} parent=5 // pred_fallthru
        _
    $region6: #{_lambda_.5} parent=1 // loop_footer
      %s20 = sadd.s32 1, %s16
    $region7: #{_lambda_.5} parent=1 // loop_footer_branch
      %15 = sbr.rel target = $region3
    $region8: #{_lambda_.5} parent=1 // loop_exit
      _
    %1140 = vsyncpa [#allocation4], 1
    %s1141 = scalar_lea.sflag [#allocation4], 1
    %1142 = vsyncpa %s1141, 1
    %1143 = vsyncpa [#allocation6], 1

</llo_original>
